<compile_context>
chip_gen: v7x
topology: tpu7x:2x2x1
jax: 0.10.0
libtpu: 0.0.40
codegen_flags: <defaults>
</compile_context>

<pallas_src>
import numpy as np
import jax
import jax.numpy as jnp
from jax import lax
from jax.experimental import pallas as pl
from jax.experimental.pallas import tpu as pltpu

# ----------------------- small "whisper-small-like" debug config -----------------------
BATCH = 2
SAMPLE_RATE = 16000
N_FFT = 64                      # (real whisper: 400)
HOP_LENGTH = 32                 # (real whisper: 160)
N_MELS = 16                     # (real whisper: 80)
N_SAMPLES = 1024                # pad_or_trim target (real whisper: 30s * 16k)
N_FREQ = N_FFT // 2 + 1         # 33
FREQ_PAD = 128                  # STFT bins zero-padded to a full 128-lane axis
N_FRAMES = N_SAMPLES // HOP_LENGTH   # 32 (last STFT frame dropped, as in whisper)
D_MODEL = 64                    # (real whisper-small: 768)
NUM_HEADS = 4
HEAD_DIM = D_MODEL // NUM_HEADS
FFN_DIM = 128
NUM_LAYERS = 2                  # (real whisper-small: 12)
T_OUT = N_FRAMES // 2           # 16 after the stride-2 conv
LN_EPS = 1e-5
ATTN_SCALE = HEAD_DIM ** -0.5
INV_LN10 = float(1.0 / np.log(10.0))


# ------------------------------- in-kernel helpers -------------------------------
def _gelu(x):
    # TODO(synk): PyTorch/HF Whisper uses exact erf-GELU; tanh approximation kept for
    # Mosaic-safe lowering (flagged, small systematic activation difference).
    return jax.nn.gelu(x, approximate=True)


def _layer_norm(x, w, b):
    mu = jnp.mean(x, axis=-1, keepdims=True)
    xc = x - mu
    var = jnp.mean(xc * xc, axis=-1, keepdims=True)
    return xc * lax.rsqrt(var + LN_EPS) * w + b


def _full_spec(a):
    zeros = (0,) * a.ndim
    return pl.BlockSpec(a.shape, lambda b, z=zeros: z)


def _shift_pm1(x):
    """Return (x[t-1], x[t+1]) along axis 0 with zero boundaries (conv taps, pad=1).
    Uses XLU rolls instead of identity-shift matmuls on the MXU."""
    t = x.shape[0]
    row = lax.broadcasted_iota(jnp.int32, (t, 1), 0)
    x_prev = jnp.where(row == 0, 0.0, pltpu.roll(x, shift=1, axis=0))
    x_next = jnp.where(row == t - 1, 0.0, pltpu.roll(x, shift=t - 1, axis=0))
    return x_prev, x_next


# --------------------------------- Pallas kernel 1: stem ---------------------------------
def pallas_stem(mag, gmax, p):
    """mag: (B, N_FRAMES, FREQ_PAD) zero-padded |STFT|^2, time-major.
    gmax: (1, 1) f32 batch-global max of log10(mel) (hoisted XLA reduce).
    Returns feats_tm (B, N_FRAMES, N_MELS) and x0 (B, T_OUT, D_MODEL)."""
    B = mag.shape[0]
    ins = [mag, gmax, p["mel_filters_t"], p["conv1_wu"], p["conv1_b"],
           p["conv2_wu"], p["conv2_b"], p["sel2"], p["pos_emb"]]

    def kernel(mag_ref, gmax_ref, filt_ref, w1_ref, b1_ref, w2_ref, b2_ref,
               sel2_ref, pos_ref, feats_ref, x0_ref):
        # ---- log-mel for this batch item (clip uses the batch-global max scalar) ----
        mel = jnp.dot(mag_ref[0], filt_ref[...], preferred_element_type=jnp.float32)
        logm = jnp.log(jnp.maximum(mel, 1e-10)) * INV_LN10
        logm = jnp.maximum(logm, gmax_ref[...] - 8.0)
        logm = (logm + 4.0) * 0.25                               # (T, M) f32
        feats_ref[0] = logm

        # ---- conv1: k=3, s=1, pad=1 — roll-unfold + ONE (T,3M)x(3M,D) MXU matmul ----
        xp, xn = _shift_pm1(logm)
        u1 = jnp.concatenate([xp, logm, xn], axis=-1).astype(jnp.bfloat16)   # (T, 3M)
        h1 = jnp.dot(u1, w1_ref[...], preferred_element_type=jnp.float32) + b1_ref[...]
        h1 = _gelu(h1)                                           # (T, D) f32

        # ---- conv2: k=3, s=2, pad=1 — roll-unfold, exact 0/1 row-select for stride 2,
        #      then ONE (T_OUT,3D)x(3D,D) MXU matmul ----
        hp, hn = _shift_pm1(h1)
        u2 = jnp.concatenate([hp, h1, hn], axis=-1).astype(jnp.bfloat16)     # (T, 3D)
        u2d = jnp.dot(sel2_ref[...], u2, preferred_element_type=jnp.float32)  # (T_OUT, 3D)
        h2 = jnp.dot(u2d.astype(jnp.bfloat16), w2_ref[...],
                     preferred_element_type=jnp.float32) + b2_ref[...]
        x0_ref[0] = _gelu(h2) + pos_ref[...]                     # (T_OUT, D)

    in_specs = [pl.BlockSpec((1, N_FRAMES, FREQ_PAD), lambda b: (b, 0, 0))]
    in_specs += [_full_spec(a) for a in ins[1:]]
    return pl.pallas_call(
        kernel,
        out_shape=(jax.ShapeDtypeStruct((B, N_FRAMES, N_MELS), jnp.float32),
                   jax.ShapeDtypeStruct((B, T_OUT, D_MODEL), jnp.float32)),
        grid=(B,),
        in_specs=in_specs,
        out_specs=(pl.BlockSpec((1, N_FRAMES, N_MELS), lambda b: (b, 0, 0)),
                   pl.BlockSpec((1, T_OUT, D_MODEL), lambda b: (b, 0, 0))),
        compiler_params=pltpu.CompilerParams(dimension_semantics=("parallel",)),
    )(*ins)


# ---------------------------- Pallas kernel 2: fused encoder stack ----------------------------
def pallas_encoder(x0, p):
    """All NUM_LAYERS pre-norm encoder layers + final LayerNorm in one pallas_call.
    grid=(B,) parallel (v7x: one batch item per TensorCore); all layer weights VMEM-resident,
    layer loop unrolled, residual kept as a local value."""
    B = x0.shape[0]
    st = p["stacked"]
    names = ["ln1_w", "ln1_b", "wqkv", "bqkv", "wo", "bo",
             "ln2_w", "ln2_b", "w1", "b1", "w2", "b2"]
    weights = [st[n] for n in names]
    ins = [x0] + weights + [p["lnf_w"], p["lnf_b"]]

    def kernel(x_ref, ln1w, ln1b, wqkv, bqkv, wo, bo,
               ln2w, ln2b, w1, b1, w2, b2, lnfw, lnfb, o_ref):
        x = x_ref[0]                                             # (T, D) f32 residual stream
        for l in range(NUM_LAYERS):                              # unrolled; weights resident in VMEM
            # ---------------- self-attention (pre-norm), fused QKV projection ----------------
            hn = _layer_norm(x, ln1w[l], ln1b[l]).astype(jnp.bfloat16)
            qkv = jnp.dot(hn, wqkv[l], preferred_element_type=jnp.float32) + bqkv[l]  # (T, 3D)
            q = qkv[:, 0:D_MODEL] * ATTN_SCALE
            k = qkv[:, D_MODEL:2 * D_MODEL]
            v = qkv[:, 2 * D_MODEL:3 * D_MODEL]

            ctx_heads = []
            for h in range(NUM_HEADS):                           # static lane slices per head
                sl = slice(h * HEAD_DIM, (h + 1) * HEAD_DIM)
                qh = q[:, sl].astype(jnp.bfloat16)
                kh = k[:, sl].astype(jnp.bfloat16)
                vh = v[:, sl].astype(jnp.bfloat16)
                s = lax.dot_general(qh, kh, (((1,), (1,)), ((), ())),
                                    preferred_element_type=jnp.float32)      # (T, T)
                s = s - jnp.max(s, axis=-1, keepdims=True)
                e = jnp.exp(s)
                prob = e / jnp.sum(e, axis=-1, keepdims=True)
                ctx_heads.append(jnp.dot(prob.astype(jnp.bfloat16), vh,
                                         preferred_element_type=jnp.float32))
            ctx = jnp.concatenate(ctx_heads, axis=-1).astype(jnp.bfloat16)   # (T, D)
            attn = jnp.dot(ctx, wo[l], preferred_element_type=jnp.float32) + bo[l]
            x = x + attn

            # ---------------- feed-forward ----------------
            hn2 = _layer_norm(x, ln2w[l], ln2b[l]).astype(jnp.bfloat16)
            f = jnp.dot(hn2, w1[l], preferred_element_type=jnp.float32) + b1[l]
            f = _gelu(f).astype(jnp.bfloat16)
            x = x + jnp.dot(f, w2[l], preferred_element_type=jnp.float32) + b2[l]

        o_ref[0] = _layer_norm(x, lnfw[...], lnfb[...])          # fused final LayerNorm

    in_specs = [pl.BlockSpec((1, T_OUT, D_MODEL), lambda b: (b, 0, 0))]
    in_specs += [_full_spec(a) for a in ins[1:]]
    # TODO(synk): at real whisper-small sizes, switch back to a per-layer weight-streaming grid
    # axis (Buffered(2)) and set vmem_limit_bytes explicitly (v7x has only 64 MiB VMEM).
    return pl.pallas_call(
        kernel,
        out_shape=jax.ShapeDtypeStruct((B, T_OUT, D_MODEL), jnp.float32),
        grid=(B,),
        in_specs=in_specs,
        out_specs=pl.BlockSpec((1, T_OUT, D_MODEL), lambda b: (b, 0, 0)),
        compiler_params=pltpu.CompilerParams(dimension_semantics=("parallel",)),
    )(*ins)


# ------------------------------ JAX glue (no hot-path compute) ------------------------------
def pad_or_trim_jax(x, length, axis=-1):
    n = x.shape[axis]
    if n > length:
        x = lax.slice_in_dim(x, 0, length, axis=axis)
    elif n < length:
        pads = [(0, 0)] * x.ndim
        pads[axis] = (0, length - n)
        x = jnp.pad(x, pads)
    return x


def stft_magnitudes_tm(audio):
    # TODO(synk): FFT has no Pallas primitive; torch.stft reproduced with jnp.fft glue.
    pad = N_FFT // 2
    ap = jnp.pad(audio, ((0, 0), (pad, pad)), mode="reflect")      # center=True, reflect pad
    n_frames_total = 1 + N_SAMPLES // HOP_LENGTH
    idx = (np.arange(n_frames_total)[:, None] * HOP_LENGTH + np.arange(N_FFT)[None, :])
    frames = ap[:, idx]                                            # (B, frames, n_fft)
    window = 0.5 * (1.0 - np.cos(2.0 * np.pi * np.arange(N_FFT) / N_FFT))  # periodic hann
    spec = jnp.fft.rfft(frames * window.astype(np.float32), axis=-1)
    mag = jnp.abs(spec) ** 2                                       # (B, frames, n_freq)
    return mag[:, :-1, :]                                          # drop last frame, like whisper


def make_mel_filterbank(sr, n_fft, n_mels):
    # TODO(synk): librosa mel_filters.npz not loadable here; deterministic HTK triangular bank.
    def hz_to_mel(f): return 2595.0 * np.log10(1.0 + f / 700.0)
    def mel_to_hz(m): return 700.0 * (10.0 ** (m / 2595.0) - 1.0)
    mels = np.linspace(hz_to_mel(0.0), hz_to_mel(sr / 2.0), n_mels + 2)
    hz = mel_to_hz(mels)
    fft_freqs = np.linspace(0.0, sr / 2.0, n_fft // 2 + 1)
    fb = np.zeros((n_mels, n_fft // 2 + 1), dtype=np.float32)
    for i in range(n_mels):
        l, c, r = hz[i], hz[i + 1], hz[i + 2]
        up = (fft_freqs - l) / max(c - l, 1e-6)
        down = (r - fft_freqs) / max(r - c, 1e-6)
        fb[i] = np.maximum(0.0, np.minimum(up, down)).astype(np.float32)
    return fb


def sinusoids(length, channels, max_timescale=10000.0):
    log_inc = np.log(max_timescale) / (channels // 2 - 1)
    inv = np.exp(-log_inc * np.arange(channels // 2))
    t = np.arange(length)[:, None] * inv[None, :]
    return np.concatenate([np.sin(t), np.cos(t)], axis=1).astype(np.float32)


def init_params(key):
    # TODO(synk): pretrained openai/whisper-small weights replaced by deterministic synthetic init.
    ks = iter(jax.random.split(key, 64))

    def nrm(shape, std=0.02):
        return (std * jax.random.normal(next(ks), shape)).astype(jnp.float32)

    p = {}
    filt = make_mel_filterbank(SAMPLE_RATE, N_FFT, N_MELS)          # (M, N_FREQ)
    filt_t = np.zeros((FREQ_PAD, N_MELS), np.float32)               # lane-dense, zero-padded bins
    filt_t[:N_FREQ, :] = filt.T
    p["mel_filters_t"] = jnp.asarray(filt_t)

    # conv weights: PyTorch (out=D, in, k) layout -> unfolded (3*in, D) bf16 for one wide matmul
    w1_pt = nrm((D_MODEL, N_MELS, 3))
    p["conv1_wu"] = jnp.transpose(w1_pt, (2, 1, 0)).reshape(3 * N_MELS, D_MODEL).astype(jnp.bfloat16)
    p["conv1_b"] = nrm((1, D_MODEL))
    w2_pt = nrm((D_MODEL, D_MODEL, 3))
    p["conv2_wu"] = jnp.transpose(w2_pt, (2, 1, 0)).reshape(3 * D_MODEL, D_MODEL).astype(jnp.bfloat16)
    p["conv2_b"] = nrm((1, D_MODEL))
    p["pos_emb"] = jnp.asarray(sinusoids(T_OUT, D_MODEL))

    # exact 0/1 stride-2 row-selection matrix (replaces the per-tap shift matmuls)
    sel2 = (np.arange(N_FRAMES)[None, :] == 2 * np.arange(T_OUT)[:, None]).astype(np.float32)
    p["sel2"] = jnp.asarray(sel2).astype(jnp.bfloat16)

    names = ["ln1_w", "ln1_b", "wqkv", "bqkv", "wo", "bo",
             "ln2_w", "ln2_b", "w1", "b1", "w2", "b2"]
    acc = {n: [] for n in names}
    for _ in range(NUM_LAYERS):
        wq = nrm((D_MODEL, D_MODEL)); bq = nrm((1, D_MODEL))
        wk = nrm((D_MODEL, D_MODEL))                               # k_proj: no bias (Whisper)
        wv = nrm((D_MODEL, D_MODEL)); bv = nrm((1, D_MODEL))
        acc["wqkv"].append(jnp.concatenate([wq, wk, wv], axis=1).astype(jnp.bfloat16))  # (D, 3D)
        acc["bqkv"].append(jnp.concatenate([bq, jnp.zeros_like(bq), bv], axis=1))       # (1, 3D)
        acc["wo"].append(nrm((D_MODEL, D_MODEL)).astype(jnp.bfloat16))
        acc["bo"].append(nrm((1, D_MODEL)))
        acc["ln1_w"].append(jnp.ones((1, D_MODEL), jnp.float32))
        acc["ln1_b"].append(jnp.zeros((1, D_MODEL), jnp.float32))
        acc["ln2_w"].append(jnp.ones((1, D_MODEL), jnp.float32))
        acc["ln2_b"].append(jnp.zeros((1, D_MODEL), jnp.float32))
        acc["w1"].append(nrm((D_MODEL, FFN_DIM)).astype(jnp.bfloat16))
        acc["b1"].append(nrm((1, FFN_DIM)))
        acc["w2"].append(nrm((FFN_DIM, D_MODEL)).astype(jnp.bfloat16))
        acc["b2"].append(nrm((1, D_MODEL)))
    p["stacked"] = {n: jnp.stack(v) for n, v in acc.items()}        # leading layer axis
    p["lnf_w"] = jnp.ones((1, D_MODEL), jnp.float32)
    p["lnf_b"] = jnp.zeros((1, D_MODEL), jnp.float32)
    return p


def whisper_encoder_debug_forward(audio, params):
    """Returns (encoder_last_hidden_state (B,T_OUT,D), log_mel_features (B,N_MELS,N_FRAMES))."""
    audio = pad_or_trim_jax(audio, N_SAMPLES)
    mag = stft_magnitudes_tm(audio)                                 # (B, N_FRAMES, N_FREQ)
    mag = jnp.pad(mag, ((0, 0), (0, 0), (0, FREQ_PAD - N_FREQ)))    # lane-dense freq axis

    # batch-global clip value for the log-mel, hoisted out of the kernel (cheap XLA reduce);
    # matches log_mel_spectrogram(...).max() on the batched tensor.
    mel_max = jnp.max(jnp.einsum("btf,fm->btm", mag, params["mel_filters_t"]))
    gmax = (jnp.log(jnp.maximum(mel_max, 1e-10)) * INV_LN10).reshape(1, 1)

    feats_tm, x0 = pallas_stem(mag, gmax, params)                   # fused logmel + conv stem
    hidden = pallas_encoder(x0, params)                             # fused transformer stack + LN
    feats = jnp.transpose(feats_tm, (0, 2, 1))                      # (B, N_MELS, N_FRAMES)
    return hidden, feats


if __name__ == "__main__":
    key = jax.random.PRNGKey(0)
    k_data, k_params = jax.random.split(key)
    # raw waveform input, shorter than N_SAMPLES so pad_or_trim pads it
    audio = jax.random.normal(k_data, (BATCH, 1000), jnp.float32)
    params = init_params(k_params)

    fwd = jax.jit(whisper_encoder_debug_forward)
    hidden, feats = fwd(audio, params)
    jax.block_until_ready((hidden, feats))
    assert hidden.shape == (BATCH, T_OUT, D_MODEL)
    assert feats.shape == (BATCH, N_MELS, N_FRAMES)
    print("KERNEL_OK")
</pallas_src>

<mosaic_0001>
module attributes {stable_mosaic.version = 11 : i64} {
  func.func private @main(%arg0: i32) attributes {dimension_semantics = [#tpu.dimension_semantics<core_parallel>], iteration_bounds = array<i64: 2>, tpu.core_type = #tpu.core_type<sc_scalar_subcore>, window_params = []} {
    return
  }
}

module attributes {stable_mosaic.version = 11 : i64} {
  func.func private @main(%arg0: i32) attributes {dimension_semantics = [#tpu.dimension_semantics<core_parallel>], iteration_bounds = array<i64: 2>, tpu.core_type = #tpu.core_type<sc_scalar_subcore>, window_params = []} {
    return
  }
}

module attributes {stable_mosaic.version = 11 : i64} {
  func.func @kernel(%arg0: i32, %arg1: memref<1x32x128xf32, #tpu.memory_space<vmem>>, %arg2: memref<1x1xf32, #tpu.memory_space<vmem>>, %arg3: memref<128x16xf32, #tpu.memory_space<vmem>>, %arg4: memref<48x64xbf16, #tpu.memory_space<vmem>>, %arg5: memref<1x64xf32, #tpu.memory_space<vmem>>, %arg6: memref<192x64xbf16, #tpu.memory_space<vmem>>, %arg7: memref<1x64xf32, #tpu.memory_space<vmem>>, %arg8: memref<16x32xbf16, #tpu.memory_space<vmem>>, %arg9: memref<16x64xf32, #tpu.memory_space<vmem>>, %arg10: memref<1x32x16xf32, #tpu.memory_space<vmem>>, %arg11: memref<1x16x64xf32, #tpu.memory_space<vmem>>) attributes {dimension_semantics = [#tpu.dimension_semantics<parallel>], iteration_bounds = array<i64: 2>, scalar_prefetch = 0 : i64, scratch_operands = 0 : i64, tpu.core_type = #tpu.core_type<tc>, window_params = [{transform_indices = @transform_0, window_bounds = array<i64: 1, 32, 128>}, {pipeline_mode = #tpu.pipeline_mode<synchronous>, transform_indices = @transform_1, window_bounds = array<i64: 1, 1>}, {pipeline_mode = #tpu.pipeline_mode<synchronous>, transform_indices = @transform_2, window_bounds = array<i64: 128, 16>}, {pipeline_mode = #tpu.pipeline_mode<synchronous>, transform_indices = @transform_3, window_bounds = array<i64: 48, 64>}, {pipeline_mode = #tpu.pipeline_mode<synchronous>, transform_indices = @transform_4, window_bounds = array<i64: 1, 64>}, {pipeline_mode = #tpu.pipeline_mode<synchronous>, transform_indices = @transform_5, window_bounds = array<i64: 192, 64>}, {pipeline_mode = #tpu.pipeline_mode<synchronous>, transform_indices = @transform_6, window_bounds = array<i64: 1, 64>}, {pipeline_mode = #tpu.pipeline_mode<synchronous>, transform_indices = @transform_7, window_bounds = array<i64: 16, 32>}, {pipeline_mode = #tpu.pipeline_mode<synchronous>, transform_indices = @transform_8, window_bounds = array<i64: 16, 64>}, {transform_indices = @transform_9, window_bounds = array<i64: 1, 32, 16>}, {transform_indices = @transform_10, window_bounds = array<i64: 1, 16, 64>}]} {
    %c0 = arith.constant 0 : index
    %c0_0 = arith.constant 0 : index
    %c0_1 = arith.constant 0 : index
    %0 = vector.load %arg1[%c0, %c0_0, %c0_1] : memref<1x32x128xf32, #tpu.memory_space<vmem>>, vector<1x32x128xf32>
    %1 = vector.shape_cast %0 : vector<1x32x128xf32> to vector<32x128xf32>
    %c0_2 = arith.constant 0 : index
    %c0_3 = arith.constant 0 : index
    %2 = vector.load %arg3[%c0_2, %c0_3] : memref<128x16xf32, #tpu.memory_space<vmem>>, vector<128x16xf32>
    %cst = arith.constant dense<0.000000e+00> : vector<32x16xf32>
    %3 = tpu.matmul %1, %2, %cst {dimension_numbers = #tpu.dot_dimension_numbers<[1], [0], [0], [1], [0, 0, 1, 1], [], []>} : vector<32x128xf32>, vector<128x16xf32>, vector<32x16xf32> -> vector<32x16xf32>
    %cst_4 = arith.constant 1.000000e-10 : f32
    %4 = vector.broadcast %cst_4 : f32 to vector<32x16xf32>
    %5 = arith.maximumf %3, %4 : vector<32x16xf32>
    %6 = math.log %5 : vector<32x16xf32>
    %cst_5 = arith.constant 0.434294492 : f32
    %7 = vector.broadcast %cst_5 : f32 to vector<32x16xf32>
    %8 = arith.mulf %6, %7 : vector<32x16xf32>
    %c0_6 = arith.constant 0 : index
    %c0_7 = arith.constant 0 : index
    %9 = vector.load %arg2[%c0_6, %c0_7] : memref<1x1xf32, #tpu.memory_space<vmem>>, vector<1x1xf32>
    %cst_8 = arith.constant 8.000000e+00 : f32
    %10 = vector.broadcast %cst_8 : f32 to vector<1x1xf32>
    %11 = arith.subf %9, %10 : vector<1x1xf32>
    %12 = vector.broadcast %11 : vector<1x1xf32> to vector<32x16xf32>
    %13 = arith.maximumf %8, %12 : vector<32x16xf32>
    %cst_9 = arith.constant 4.000000e+00 : f32
    %14 = vector.broadcast %cst_9 : f32 to vector<32x16xf32>
    %15 = arith.addf %13, %14 : vector<32x16xf32>
    %cst_10 = arith.constant 2.500000e-01 : f32
    %16 = vector.broadcast %cst_10 : f32 to vector<32x16xf32>
    %17 = arith.mulf %15, %16 : vector<32x16xf32>
    %c0_11 = arith.constant 0 : index
    %c0_12 = arith.constant 0 : index
    %c0_13 = arith.constant 0 : index
    %18 = vector.load %arg10[%c0_11, %c0_12, %c0_13] : memref<1x32x16xf32, #tpu.memory_space<vmem>>, vector<1x32x16xf32>
    %19 = vector.shape_cast %18 : vector<1x32x16xf32> to vector<32x16xf32>
    %20 = vector.shape_cast %17 : vector<32x16xf32> to vector<1x32x16xf32>
    tpu.vector_store %arg10[%c0_11, %c0_12, %c0_13], %20 {strides = array<i32>} : memref<1x32x16xf32, #tpu.memory_space<vmem>>, vector<1x32x16xf32>,
    %21 = tpu.iota {dimensions = array<i32: 0>} : vector<32x1xi32>
    %c0_i32 = arith.constant 0 : i32
    %22 = vector.broadcast %c0_i32 : i32 to vector<32x1xi32>
    %23 = arith.cmpi eq, %21, %22 : vector<32x1xi32>
    %c1_i32 = arith.constant 1 : i32
    %24 = tpu.dynamic_rotate %17 by %c1_i32 dim 0 : vector<32x16xf32>, i32 -> vector<32x16xf32>
    %cst_14 = arith.constant 0.000000e+00 : f32
    %25 = vector.shape_cast %23 : vector<32x1xi1> to vector<32x1xi1>
    %26 = vector.broadcast %25 : vector<32x1xi1> to vector<32x16xi1>
    %27 = vector.broadcast %cst_14 : f32 to vector<32x16xf32>
    %28 = arith.select %26, %27, %24 : vector<32x16xi1>, vector<32x16xf32>
    %c31_i32 = arith.constant 31 : i32
    %29 = vector.broadcast %c31_i32 : i32 to vector<32x1xi32>
    %30 = arith.cmpi eq, %21, %29 : vector<32x1xi32>
    %c31_i32_15 = arith.constant 31 : i32
    %31 = tpu.dynamic_rotate %17 by %c31_i32_15 dim 0 : vector<32x16xf32>, i32 -> vector<32x16xf32>
    %cst_16 = arith.constant 0.000000e+00 : f32
    %32 = vector.shape_cast %30 : vector<32x1xi1> to vector<32x1xi1>
    %33 = vector.broadcast %32 : vector<32x1xi1> to vector<32x16xi1>
    %34 = vector.broadcast %cst_16 : f32 to vector<32x16xf32>
    %35 = arith.select %33, %34, %31 : vector<32x16xi1>, vector<32x16xf32>
    %36 = tpu.concatenate %28, %17, %35 in 1 : vector<32x16xf32>, vector<32x16xf32>, vector<32x16xf32> -> vector<32x48xf32>
    %37 = arith.truncf %36 : vector<32x48xf32> to vector<32x48xbf16>
    %c0_17 = arith.constant 0 : index
    %c0_18 = arith.constant 0 : index
    %38 = vector.load %arg4[%c0_17, %c0_18] : memref<48x64xbf16, #tpu.memory_space<vmem>>, vector<48x64xbf16>
    %cst_19 = arith.constant dense<0.000000e+00> : vector<32x64xf32>
    %39 = tpu.matmul %37, %38, %cst_19 {dimension_numbers = #tpu.dot_dimension_numbers<[1], [0], [0], [1], [0, 0, 1, 1], [], []>} : vector<32x48xbf16>, vector<48x64xbf16>, vector<32x64xf32> -> vector<32x64xf32>
    %c0_20 = arith.constant 0 : index
    %c0_21 = arith.constant 0 : index
    %40 = vector.load %arg5[%c0_20, %c0_21] : memref<1x64xf32, #tpu.memory_space<vmem>>, vector<1x64xf32>
    %41 = vector.broadcast %40 : vector<1x64xf32> to vector<32x64xf32>
    %42 = arith.addf %39, %41 : vector<32x64xf32>
    %43 = arith.mulf %42, %42 : vector<32x64xf32>
    %44 = arith.mulf %42, %43 : vector<32x64xf32>
    %cst_22 = arith.constant 4.471500e-02 : f32
    %45 = vector.broadcast %cst_22 : f32 to vector<32x64xf32>
    %46 = arith.mulf %45, %44 : vector<32x64xf32>
    %47 = arith.addf %42, %46 : vector<32x64xf32>
    %cst_23 = arith.constant 0.797884583 : f32
    %48 = vector.broadcast %cst_23 : f32 to vector<32x64xf32>
    %49 = arith.mulf %48, %47 : vector<32x64xf32>
    %50 = math.tanh %49 : vector<32x64xf32>
    %cst_24 = arith.constant 1.000000e+00 : f32
    %51 = vector.broadcast %cst_24 : f32 to vector<32x64xf32>
    %52 = arith.addf %51, %50 : vector<32x64xf32>
    %cst_25 = arith.constant 5.000000e-01 : f32
    %53 = vector.broadcast %cst_25 : f32 to vector<32x64xf32>
    %54 = arith.mulf %53, %52 : vector<32x64xf32>
    %55 = arith.mulf %42, %54 : vector<32x64xf32>
    %56 = tpu.iota {dimensions = array<i32: 0>} : vector<32x1xi32>
    %c0_i32_26 = arith.constant 0 : i32
    %57 = vector.broadcast %c0_i32_26 : i32 to vector<32x1xi32>
    %58 = arith.cmpi eq, %56, %57 : vector<32x1xi32>
    %c1_i32_27 = arith.constant 1 : i32
    %59 = tpu.dynamic_rotate %55 by %c1_i32_27 dim 0 : vector<32x64xf32>, i32 -> vector<32x64xf32>
    %cst_28 = arith.constant 0.000000e+00 : f32
    %60 = vector.shape_cast %58 : vector<32x1xi1> to vector<32x1xi1>
    %61 = vector.broadcast %60 : vector<32x1xi1> to vector<32x64xi1>
    %62 = vector.broadcast %cst_28 : f32 to vector<32x64xf32>
    %63 = arith.select %61, %62, %59 : vector<32x64xi1>, vector<32x64xf32>
    %c31_i32_29 = arith.constant 31 : i32
    %64 = vector.broadcast %c31_i32_29 : i32 to vector<32x1xi32>
    %65 = arith.cmpi eq, %56, %64 : vector<32x1xi32>
    %c31_i32_30 = arith.constant 31 : i32
    %66 = tpu.dynamic_rotate %55 by %c31_i32_30 dim 0 : vector<32x64xf32>, i32 -> vector<32x64xf32>
    %cst_31 = arith.constant 0.000000e+00 : f32
    %67 = vector.shape_cast %65 : vector<32x1xi1> to vector<32x1xi1>
    %68 = vector.broadcast %67 : vector<32x1xi1> to vector<32x64xi1>
    %69 = vector.broadcast %cst_31 : f32 to vector<32x64xf32>
    %70 = arith.select %68, %69, %66 : vector<32x64xi1>, vector<32x64xf32>
    %71 = tpu.concatenate %63, %55, %70 in 1 : vector<32x64xf32>, vector<32x64xf32>, vector<32x64xf32> -> vector<32x192xf32>
    %72 = arith.truncf %71 : vector<32x192xf32> to vector<32x192xbf16>
    %c0_32 = arith.constant 0 : index
    %c0_33 = arith.constant 0 : index
    %73 = vector.load %arg8[%c0_32, %c0_33] : memref<16x32xbf16, #tpu.memory_space<vmem>>, vector<16x32xbf16>
    %cst_34 = arith.constant dense<0.000000e+00> : vector<16x192xf32>
    %74 = tpu.matmul %73, %72, %cst_34 {dimension_numbers = #tpu.dot_dimension_numbers<[1], [0], [0], [1], [0, 0, 1, 1], [], []>} : vector<16x32xbf16>, vector<32x192xbf16>, vector<16x192xf32> -> vector<16x192xf32>
    %75 = arith.truncf %74 : vector<16x192xf32> to vector<16x192xbf16>
    %c0_35 = arith.constant 0 : index
    %c0_36 = arith.constant 0 : index
    %76 = vector.load %arg6[%c0_35, %c0_36] : memref<192x64xbf16, #tpu.memory_space<vmem>>, vector<192x64xbf16>
    %cst_37 = arith.constant dense<0.000000e+00> : vector<16x64xf32>
    %77 = tpu.matmul %75, %76, %cst_37 {dimension_numbers = #tpu.dot_dimension_numbers<[1], [0], [0], [1], [0, 0, 1, 1], [], []>} : vector<16x192xbf16>, vector<192x64xbf16>, vector<16x64xf32> -> vector<16x64xf32>
    %c0_38 = arith.constant 0 : index
    %c0_39 = arith.constant 0 : index
    %78 = vector.load %arg7[%c0_38, %c0_39] : memref<1x64xf32, #tpu.memory_space<vmem>>, vector<1x64xf32>
    %79 = vector.broadcast %78 : vector<1x64xf32> to vector<16x64xf32>
    %80 = arith.addf %77, %79 : vector<16x64xf32>
    %81 = arith.mulf %80, %80 : vector<16x64xf32>
    %82 = arith.mulf %80, %81 : vector<16x64xf32>
    %cst_40 = arith.constant 4.471500e-02 : f32
    %83 = vector.broadcast %cst_40 : f32 to vector<16x64xf32>
    %84 = arith.mulf %83, %82 : vector<16x64xf32>
    %85 = arith.addf %80, %84 : vector<16x64xf32>
    %cst_41 = arith.constant 0.797884583 : f32
    %86 = vector.broadcast %cst_41 : f32 to vector<16x64xf32>
    %87 = arith.mulf %86, %85 : vector<16x64xf32>
    %88 = math.tanh %87 : vector<16x64xf32>
    %cst_42 = arith.constant 1.000000e+00 : f32
    %89 = vector.broadcast %cst_42 : f32 to vector<16x64xf32>
    %90 = arith.addf %89, %88 : vector<16x64xf32>
    %cst_43 = arith.constant 5.000000e-01 : f32
    %91 = vector.broadcast %cst_43 : f32 to vector<16x64xf32>
    %92 = arith.mulf %91, %90 : vector<16x64xf32>
    %93 = arith.mulf %80, %92 : vector<16x64xf32>
    %c0_44 = arith.constant 0 : index
    %c0_45 = arith.constant 0 : index
    %94 = vector.load %arg9[%c0_44, %c0_45] : memref<16x64xf32, #tpu.memory_space<vmem>>, vector<16x64xf32>
    %95 = arith.addf %93, %94 : vector<16x64xf32>
    %c0_46 = arith.constant 0 : index
    %c0_47 = arith.constant 0 : index
    %c0_48 = arith.constant 0 : index
    %96 = vector.load %arg11[%c0_46, %c0_47, %c0_48] : memref<1x16x64xf32, #tpu.memory_space<vmem>>, vector<1x16x64xf32>
    %97 = vector.shape_cast %96 : vector<1x16x64xf32> to vector<16x64xf32>
    %98 = vector.shape_cast %95 : vector<16x64xf32> to vector<1x16x64xf32>
    tpu.vector_store %arg11[%c0_46, %c0_47, %c0_48], %98 {strides = array<i32>} : memref<1x16x64xf32, #tpu.memory_space<vmem>>, vector<1x16x64xf32>,
    return
  }
  func.func @transform_0(%arg0: i32) -> (i32, i32, i32) {
    %c0_i32 = arith.constant 0 : i32
    %c0_i32_0 = arith.constant 0 : i32
    %c0_i32_1 = arith.constant 0 : i32
    return %arg0, %c0_i32, %c0_i32_0 : i32, i32, i32
  }
  func.func @transform_1(%arg0: i32) -> (i32, i32) {
    %c0_i32 = arith.constant 0 : i32
    %c0_i32_0 = arith.constant 0 : i32
    %c0_i32_1 = arith.constant 0 : i32
    return %c0_i32, %c0_i32_0 : i32, i32
  }
  func.func @transform_2(%arg0: i32) -> (i32, i32) {
    %c0_i32 = arith.constant 0 : i32
    %c0_i32_0 = arith.constant 0 : i32
    %c0_i32_1 = arith.constant 0 : i32
    return %c0_i32, %c0_i32_0 : i32, i32
  }
  func.func @transform_3(%arg0: i32) -> (i32, i32) {
    %c0_i32 = arith.constant 0 : i32
    %c0_i32_0 = arith.constant 0 : i32
    %c0_i32_1 = arith.constant 0 : i32
    return %c0_i32, %c0_i32_0 : i32, i32
  }
  func.func @transform_4(%arg0: i32) -> (i32, i32) {
    %c0_i32 = arith.constant 0 : i32
    %c0_i32_0 = arith.constant 0 : i32
    %c0_i32_1 = arith.constant 0 : i32
    return %c0_i32, %c0_i32_0 : i32, i32
  }
  func.func @transform_5(%arg0: i32) -> (i32, i32) {
    %c0_i32 = arith.constant 0 : i32
    %c0_i32_0 = arith.constant 0 : i32
    %c0_i32_1 = arith.constant 0 : i32
    return %c0_i32, %c0_i32_0 : i32, i32
  }
  func.func @transform_6(%arg0: i32) -> (i32, i32) {
    %c0_i32 = arith.constant 0 : i32
    %c0_i32_0 = arith.constant 0 : i32
    %c0_i32_1 = arith.constant 0 : i32
    return %c0_i32, %c0_i32_0 : i32, i32
  }
  func.func @transform_7(%arg0: i32) -> (i32, i32) {
    %c0_i32 = arith.constant 0 : i32
    %c0_i32_0 = arith.constant 0 : i32
    %c0_i32_1 = arith.constant 0 : i32
    return %c0_i32, %c0_i32_0 : i32, i32
  }
  func.func @transform_8(%arg0: i32) -> (i32, i32) {
    %c0_i32 = arith.constant 0 : i32
    %c0_i32_0 = arith.constant 0 : i32
    %c0_i32_1 = arith.constant 0 : i32
    return %c0_i32, %c0_i32_0 : i32, i32
  }
  func.func @transform_9(%arg0: i32) -> (i32, i32, i32) {
    %c0_i32 = arith.constant 0 : i32
    %c0_i32_0 = arith.constant 0 : i32
    %c0_i32_1 = arith.constant 0 : i32
    return %arg0, %c0_i32, %c0_i32_0 : i32, i32, i32
  }
  func.func @transform_10(%arg0: i32) -> (i32, i32, i32) {
    %c0_i32 = arith.constant 0 : i32
    %c0_i32_0 = arith.constant 0 : i32
    %c0_i32_1 = arith.constant 0 : i32
    return %arg0, %c0_i32, %c0_i32_0 : i32, i32, i32
  }
}

module attributes {stable_mosaic.version = 11 : i64} {
  func.func @kernel(%arg0: i32, %arg1: memref<1x16x64xf32, #tpu.memory_space<vmem>>, %arg2: memref<2x1x64xf32, #tpu.memory_space<vmem>>, %arg3: memref<2x1x64xf32, #tpu.memory_space<vmem>>, %arg4: memref<2x64x192xbf16, #tpu.memory_space<vmem>>, %arg5: memref<2x1x192xf32, #tpu.memory_space<vmem>>, %arg6: memref<2x64x64xbf16, #tpu.memory_space<vmem>>, %arg7: memref<2x1x64xf32, #tpu.memory_space<vmem>>, %arg8: memref<2x1x64xf32, #tpu.memory_space<vmem>>, %arg9: memref<2x1x64xf32, #tpu.memory_space<vmem>>, %arg10: memref<2x64x128xbf16, #tpu.memory_space<vmem>>, %arg11: memref<2x1x128xf32, #tpu.memory_space<vmem>>, %arg12: memref<2x128x64xbf16, #tpu.memory_space<vmem>>, %arg13: memref<2x1x64xf32, #tpu.memory_space<vmem>>, %arg14: memref<1x64xf32, #tpu.memory_space<vmem>>, %arg15: memref<1x64xf32, #tpu.memory_space<vmem>>, %arg16: memref<1x16x64xf32, #tpu.memory_space<vmem>>) attributes {dimension_semantics = [#tpu.dimension_semantics<parallel>], iteration_bounds = array<i64: 2>, scalar_prefetch = 0 : i64, scratch_operands = 0 : i64, tpu.core_type = #tpu.core_type<tc>, window_params = [{transform_indices = @transform_0, window_bounds = array<i64: 1, 16, 64>}, {pipeline_mode = #tpu.pipeline_mode<synchronous>, transform_indices = @transform_1, window_bounds = array<i64: 2, 1, 64>}, {pipeline_mode = #tpu.pipeline_mode<synchronous>, transform_indices = @transform_2, window_bounds = array<i64: 2, 1, 64>}, {pipeline_mode = #tpu.pipeline_mode<synchronous>, transform_indices = @transform_3, window_bounds = array<i64: 2, 64, 192>}, {pipeline_mode = #tpu.pipeline_mode<synchronous>, transform_indices = @transform_4, window_bounds = array<i64: 2, 1, 192>}, {pipeline_mode = #tpu.pipeline_mode<synchronous>, transform_indices = @transform_5, window_bounds = array<i64: 2, 64, 64>}, {pipeline_mode = #tpu.pipeline_mode<synchronous>, transform_indices = @transform_6, window_bounds = array<i64: 2, 1, 64>}, {pipeline_mode = #tpu.pipeline_mode<synchronous>, transform_indices = @transform_7, window_bounds = array<i64: 2, 1, 64>}, {pipeline_mode = #tpu.pipeline_mode<synchronous>, transform_indices = @transform_8, window_bounds = array<i64: 2, 1, 64>}, {pipeline_mode = #tpu.pipeline_mode<synchronous>, transform_indices = @transform_9, window_bounds = array<i64: 2, 64, 128>}, {pipeline_mode = #tpu.pipeline_mode<synchronous>, transform_indices = @transform_10, window_bounds = array<i64: 2, 1, 128>}, {pipeline_mode = #tpu.pipeline_mode<synchronous>, transform_indices = @transform_11, window_bounds = array<i64: 2, 128, 64>}, {pipeline_mode = #tpu.pipeline_mode<synchronous>, transform_indices = @transform_12, window_bounds = array<i64: 2, 1, 64>}, {pipeline_mode = #tpu.pipeline_mode<synchronous>, transform_indices = @transform_13, window_bounds = array<i64: 1, 64>}, {pipeline_mode = #tpu.pipeline_mode<synchronous>, transform_indices = @transform_14, window_bounds = array<i64: 1, 64>}, {transform_indices = @transform_15, window_bounds = array<i64: 1, 16, 64>}]} {
    %c0 = arith.constant 0 : index
    %c0_0 = arith.constant 0 : index
    %c0_1 = arith.constant 0 : index
    %0 = vector.load %arg1[%c0, %c0_0, %c0_1] : memref<1x16x64xf32, #tpu.memory_space<vmem>>, vector<1x16x64xf32>
    %1 = vector.shape_cast %0 : vector<1x16x64xf32> to vector<16x64xf32>
    %c0_2 = arith.constant 0 : index
    %c0_3 = arith.constant 0 : index
    %c0_4 = arith.constant 0 : index
    %2 = vector.load %arg2[%c0_2, %c0_3, %c0_4] : memref<2x1x64xf32, #tpu.memory_space<vmem>>, vector<1x1x64xf32>
    %3 = vector.shape_cast %2 : vector<1x1x64xf32> to vector<1x64xf32>
    %c0_5 = arith.constant 0 : index
    %c0_6 = arith.constant 0 : index
    %c0_7 = arith.constant 0 : index
    %4 = vector.load %arg3[%c0_5, %c0_6, %c0_7] : memref<2x1x64xf32, #tpu.memory_space<vmem>>, vector<1x1x64xf32>
    %5 = vector.shape_cast %4 : vector<1x1x64xf32> to vector<1x64xf32>
    %cst = arith.constant dense<0.000000e+00> : vector<16xf32>
    %6 = vector.multi_reduction <add>, %1, %cst [1] : vector<16x64xf32> to vector<16xf32>
    %7 = vector.shape_cast %6 : vector<16xf32> to vector<16x1xf32>
    %cst_8 = arith.constant 6.400000e+01 : f32
    %8 = vector.broadcast %cst_8 : f32 to vector<16x1xf32>
    %9 = arith.divf %7, %8 : vector<16x1xf32>
    %10 = vector.broadcast %9 : vector<16x1xf32> to vector<16x64xf32>
    %11 = arith.subf %1, %10 : vector<16x64xf32>
    %12 = arith.mulf %11, %11 : vector<16x64xf32>
    %cst_9 = arith.constant dense<0.000000e+00> : vector<16xf32>
    %13 = vector.multi_reduction <add>, %12, %cst_9 [1] : vector<16x64xf32> to vector<16xf32>
    %14 = vector.shape_cast %13 : vector<16xf32> to vector<16x1xf32>
    %cst_10 = arith.constant 6.400000e+01 : f32
    %15 = vector.broadcast %cst_10 : f32 to vector<16x1xf32>
    %16 = arith.divf %14, %15 : vector<16x1xf32>
    %cst_11 = arith.constant 9.99999974E-6 : f32
    %17 = vector.broadcast %cst_11 : f32 to vector<16x1xf32>
    %18 = arith.addf %16, %17 : vector<16x1xf32>
    %19 = math.rsqrt %18 : vector<16x1xf32>
    %20 = vector.broadcast %19 : vector<16x1xf32> to vector<16x64xf32>
    %21 = arith.mulf %11, %20 : vector<16x64xf32>
    %22 = vector.broadcast %3 : vector<1x64xf32> to vector<16x64xf32>
    %23 = arith.mulf %21, %22 : vector<16x64xf32>
    %24 = vector.broadcast %5 : vector<1x64xf32> to vector<16x64xf32>
    %25 = arith.addf %23, %24 : vector<16x64xf32>
    %26 = arith.truncf %25 : vector<16x64xf32> to vector<16x64xbf16>
    %c0_12 = arith.constant 0 : index
    %c0_13 = arith.constant 0 : index
    %c0_14 = arith.constant 0 : index
    %27 = vector.load %arg4[%c0_12, %c0_13, %c0_14] : memref<2x64x192xbf16, #tpu.memory_space<vmem>>, vector<1x64x192xbf16>
    %28 = vector.shape_cast %27 : vector<1x64x192xbf16> to vector<64x192xbf16>
    %cst_15 = arith.constant dense<0.000000e+00> : vector<16x192xf32>
    %29 = tpu.matmul %26, %28, %cst_15 {dimension_numbers = #tpu.dot_dimension_numbers<[1], [0], [0], [1], [0, 0, 1, 1], [], []>} : vector<16x64xbf16>, vector<64x192xbf16>, vector<16x192xf32> -> vector<16x192xf32>
    %c0_16 = arith.constant 0 : index
    %c0_17 = arith.constant 0 : index
    %c0_18 = arith.constant 0 : index
    %30 = vector.load %arg5[%c0_16, %c0_17, %c0_18] : memref<2x1x192xf32, #tpu.memory_space<vmem>>, vector<1x1x192xf32>
    %31 = vector.shape_cast %30 : vector<1x1x192xf32> to vector<1x192xf32>
    %32 = vector.broadcast %31 : vector<1x192xf32> to vector<16x192xf32>
    %33 = arith.addf %29, %32 : vector<16x192xf32>
    %34 = vector.extract_strided_slice %33 {offsets = [0, 0], sizes = [16, 64], strides = [1, 1]} : vector<16x192xf32> to vector<16x64xf32>
    %cst_19 = arith.constant 2.500000e-01 : f32
    %35 = vector.broadcast %cst_19 : f32 to vector<16x64xf32>
    %36 = arith.mulf %34, %35 : vector<16x64xf32>
    %37 = vector.extract_strided_slice %33 {offsets = [0, 64], sizes = [16, 64], strides = [1, 1]} : vector<16x192xf32> to vector<16x64xf32>
    %38 = vector.extract_strided_slice %33 {offsets = [0, 128], sizes = [16, 64], strides = [1, 1]} : vector<16x192xf32> to vector<16x64xf32>
    %39 = vector.extract_strided_slice %36 {offsets = [0, 0], sizes = [16, 16], strides = [1, 1]} : vector<16x64xf32> to vector<16x16xf32>
    %40 = arith.truncf %39 : vector<16x16xf32> to vector<16x16xbf16>
    %41 = vector.extract_strided_slice %37 {offsets = [0, 0], sizes = [16, 16], strides = [1, 1]} : vector<16x64xf32> to vector<16x16xf32>
    %42 = arith.truncf %41 : vector<16x16xf32> to vector<16x16xbf16>
    %43 = vector.extract_strided_slice %38 {offsets = [0, 0], sizes = [16, 16], strides = [1, 1]} : vector<16x64xf32> to vector<16x16xf32>
    %44 = arith.truncf %43 : vector<16x16xf32> to vector<16x16xbf16>
    %cst_20 = arith.constant dense<0.000000e+00> : vector<16x16xf32>
    %45 = tpu.matmul %40, %42, %cst_20 {dimension_numbers = #tpu.dot_dimension_numbers<[1], [1], [0], [0], [0, 0, 1, 0], [], []>} : vector<16x16xbf16>, vector<16x16xbf16>, vector<16x16xf32> -> vector<16x16xf32>
    %cst_21 = arith.constant dense<0xFF800000> : vector<16xf32>
    %46 = vector.multi_reduction <maximumf>, %45, %cst_21 [1] : vector<16x16xf32> to vector<16xf32>
    %47 = vector.shape_cast %46 : vector<16xf32> to vector<16x1xf32>
    %48 = vector.broadcast %47 : vector<16x1xf32> to vector<16x16xf32>
    %49 = arith.subf %45, %48 : vector<16x16xf32>
    %50 = math.exp %49 : vector<16x16xf32>
    %cst_22 = arith.constant dense<0.000000e+00> : vector<16xf32>
    %51 = vector.multi_reduction <add>, %50, %cst_22 [1] : vector<16x16xf32> to vector<16xf32>
    %52 = vector.shape_cast %51 : vector<16xf32> to vector<16x1xf32>
    %53 = vector.broadcast %52 : vector<16x1xf32> to vector<16x16xf32>
    %54 = arith.divf %50, %53 : vector<16x16xf32>
    %55 = arith.truncf %54 : vector<16x16xf32> to vector<16x16xbf16>
    %cst_23 = arith.constant dense<0.000000e+00> : vector<16x16xf32>
    %56 = tpu.matmul %55, %44, %cst_23 {dimension_numbers = #tpu.dot_dimension_numbers<[1], [0], [0], [1], [0, 0, 1, 1], [], []>} : vector<16x16xbf16>, vector<16x16xbf16>, vector<16x16xf32> -> vector<16x16xf32>
    %57 = vector.extract_strided_slice %36 {offsets = [0, 16], sizes = [16, 16], strides = [1, 1]} : vector<16x64xf32> to vector<16x16xf32>
    %58 = arith.truncf %57 : vector<16x16xf32> to vector<16x16xbf16>
    %59 = vector.extract_strided_slice %37 {offsets = [0, 16], sizes = [16, 16], strides = [1, 1]} : vector<16x64xf32> to vector<16x16xf32>
    %60 = arith.truncf %59 : vector<16x16xf32> to vector<16x16xbf16>
    %61 = vector.extract_strided_slice %38 {offsets = [0, 16], sizes = [16, 16], strides = [1, 1]} : vector<16x64xf32> to vector<16x16xf32>
    %62 = arith.truncf %61 : vector<16x16xf32> to vector<16x16xbf16>
    %cst_24 = arith.constant dense<0.000000e+00> : vector<16x16xf32>
    %63 = tpu.matmul %58, %60, %cst_24 {dimension_numbers = #tpu.dot_dimension_numbers<[1], [1], [0], [0], [0, 0, 1, 0], [], []>} : vector<16x16xbf16>, vector<16x16xbf16>, vector<16x16xf32> -> vector<16x16xf32>
    %cst_25 = arith.constant dense<0xFF800000> : vector<16xf32>
    %64 = vector.multi_reduction <maximumf>, %63, %cst_25 [1] : vector<16x16xf32> to vector<16xf32>
    %65 = vector.shape_cast %64 : vector<16xf32> to vector<16x1xf32>
    %66 = vector.broadcast %65 : vector<16x1xf32> to vector<16x16xf32>
    %67 = arith.subf %63, %66 : vector<16x16xf32>
    %68 = math.exp %67 : vector<16x16xf32>
    %cst_26 = arith.constant dense<0.000000e+00> : vector<16xf32>
    %69 = vector.multi_reduction <add>, %68, %cst_26 [1] : vector<16x16xf32> to vector<16xf32>
    %70 = vector.shape_cast %69 : vector<16xf32> to vector<16x1xf32>
    %71 = vector.broadcast %70 : vector<16x1xf32> to vector<16x16xf32>
    %72 = arith.divf %68, %71 : vector<16x16xf32>
    %73 = arith.truncf %72 : vector<16x16xf32> to vector<16x16xbf16>
    %cst_27 = arith.constant dense<0.000000e+00> : vector<16x16xf32>
    %74 = tpu.matmul %73, %62, %cst_27 {dimension_numbers = #tpu.dot_dimension_numbers<[1], [0], [0], [1], [0, 0, 1, 1], [], []>} : vector<16x16xbf16>, vector<16x16xbf16>, vector<16x16xf32> -> vector<16x16xf32>
    %75 = vector.extract_strided_slice %36 {offsets = [0, 32], sizes = [16, 16], strides = [1, 1]} : vector<16x64xf32> to vector<16x16xf32>
    %76 = arith.truncf %75 : vector<16x16xf32> to vector<16x16xbf16>
    %77 = vector.extract_strided_slice %37 {offsets = [0, 32], sizes = [16, 16], strides = [1, 1]} : vector<16x64xf32> to vector<16x16xf32>
    %78 = arith.truncf %77 : vector<16x16xf32> to vector<16x16xbf16>
    %79 = vector.extract_strided_slice %38 {offsets = [0, 32], sizes = [16, 16], strides = [1, 1]} : vector<16x64xf32> to vector<16x16xf32>
    %80 = arith.truncf %79 : vector<16x16xf32> to vector<16x16xbf16>
    %cst_28 = arith.constant dense<0.000000e+00> : vector<16x16xf32>
    %81 = tpu.matmul %76, %78, %cst_28 {dimension_numbers = #tpu.dot_dimension_numbers<[1], [1], [0], [0], [0, 0, 1, 0], [], []>} : vector<16x16xbf16>, vector<16x16xbf16>, vector<16x16xf32> -> vector<16x16xf32>
    %cst_29 = arith.constant dense<0xFF800000> : vector<16xf32>
    %82 = vector.multi_reduction <maximumf>, %81, %cst_29 [1] : vector<16x16xf32> to vector<16xf32>
    %83 = vector.shape_cast %82 : vector<16xf32> to vector<16x1xf32>
    %84 = vector.broadcast %83 : vector<16x1xf32> to vector<16x16xf32>
    %85 = arith.subf %81, %84 : vector<16x16xf32>
    %86 = math.exp %85 : vector<16x16xf32>
    %cst_30 = arith.constant dense<0.000000e+00> : vector<16xf32>
    %87 = vector.multi_reduction <add>, %86, %cst_30 [1] : vector<16x16xf32> to vector<16xf32>
    %88 = vector.shape_cast %87 : vector<16xf32> to vector<16x1xf32>
    %89 = vector.broadcast %88 : vector<16x1xf32> to vector<16x16xf32>
    %90 = arith.divf %86, %89 : vector<16x16xf32>
    %91 = arith.truncf %90 : vector<16x16xf32> to vector<16x16xbf16>
    %cst_31 = arith.constant dense<0.000000e+00> : vector<16x16xf32>
    %92 = tpu.matmul %91, %80, %cst_31 {dimension_numbers = #tpu.dot_dimension_numbers<[1], [0], [0], [1], [0, 0, 1, 1], [], []>} : vector<16x16xbf16>, vector<16x16xbf16>, vector<16x16xf32> -> vector<16x16xf32>
    %93 = vector.extract_strided_slice %36 {offsets = [0, 48], sizes = [16, 16], strides = [1, 1]} : vector<16x64xf32> to vector<16x16xf32>
    %94 = arith.truncf %93 : vector<16x16xf32> to vector<16x16xbf16>
    %95 = vector.extract_strided_slice %37 {offsets = [0, 48], sizes = [16, 16], strides = [1, 1]} : vector<16x64xf32> to vector<16x16xf32>
    %96 = arith.truncf %95 : vector<16x16xf32> to vector<16x16xbf16>
    %97 = vector.extract_strided_slice %38 {offsets = [0, 48], sizes = [16, 16], strides = [1, 1]} : vector<16x64xf32> to vector<16x16xf32>
    %98 = arith.truncf %97 : vector<16x16xf32> to vector<16x16xbf16>
    %cst_32 = arith.constant dense<0.000000e+00> : vector<16x16xf32>
    %99 = tpu.matmul %94, %96, %cst_32 {dimension_numbers = #tpu.dot_dimension_numbers<[1], [1], [0], [0], [0, 0, 1, 0], [], []>} : vector<16x16xbf16>, vector<16x16xbf16>, vector<16x16xf32> -> vector<16x16xf32>
    %cst_33 = arith.constant dense<0xFF800000> : vector<16xf32>
    %100 = vector.multi_reduction <maximumf>, %99, %cst_33 [1] : vector<16x16xf32> to vector<16xf32>
    %101 = vector.shape_cast %100 : vector<16xf32> to vector<16x1xf32>
    %102 = vector.broadcast %101 : vector<16x1xf32> to vector<16x16xf32>
    %103 = arith.subf %99, %102 : vector<16x16xf32>
    %104 = math.exp %103 : vector<16x16xf32>
    %cst_34 = arith.constant dense<0.000000e+00> : vector<16xf32>
    %105 = vector.multi_reduction <add>, %104, %cst_34 [1] : vector<16x16xf32> to vector<16xf32>
    %106 = vector.shape_cast %105 : vector<16xf32> to vector<16x1xf32>
    %107 = vector.broadcast %106 : vector<16x1xf32> to vector<16x16xf32>
    %108 = arith.divf %104, %107 : vector<16x16xf32>
    %109 = arith.truncf %108 : vector<16x16xf32> to vector<16x16xbf16>
    %cst_35 = arith.constant dense<0.000000e+00> : vector<16x16xf32>
    %110 = tpu.matmul %109, %98, %cst_35 {dimension_numbers = #tpu.dot_dimension_numbers<[1], [0], [0], [1], [0, 0, 1, 1], [], []>} : vector<16x16xbf16>, vector<16x16xbf16>, vector<16x16xf32> -> vector<16x16xf32>
    %111 = tpu.concatenate %56, %74, %92, %110 in 1 : vector<16x16xf32>, vector<16x16xf32>, vector<16x16xf32>, vector<16x16xf32> -> vector<16x64xf32>
    %112 = arith.truncf %111 : vector<16x64xf32> to vector<16x64xbf16>
    %c0_36 = arith.constant 0 : index
    %c0_37 = arith.constant 0 : index
    %c0_38 = arith.constant 0 : index
    %113 = vector.load %arg6[%c0_36, %c0_37, %c0_38] : memref<2x64x64xbf16, #tpu.memory_space<vmem>>, vector<1x64x64xbf16>
    %114 = vector.shape_cast %113 : vector<1x64x64xbf16> to vector<64x64xbf16>
    %cst_39 = arith.constant dense<0.000000e+00> : vector<16x64xf32>
    %115 = tpu.matmul %112, %114, %cst_39 {dimension_numbers = #tpu.dot_dimension_numbers<[1], [0], [0], [1], [0, 0, 1, 1], [], []>} : vector<16x64xbf16>, vector<64x64xbf16>, vector<16x64xf32> -> vector<16x64xf32>
    %c0_40 = arith.constant 0 : index
    %c0_41 = arith.constant 0 : index
    %c0_42 = arith.constant 0 : index
    %116 = vector.load %arg7[%c0_40, %c0_41, %c0_42] : memref<2x1x64xf32, #tpu.memory_space<vmem>>, vector<1x1x64xf32>
    %117 = vector.shape_cast %116 : vector<1x1x64xf32> to vector<1x64xf32>
    %118 = vector.broadcast %117 : vector<1x64xf32> to vector<16x64xf32>
    %119 = arith.addf %115, %118 : vector<16x64xf32>
    %120 = arith.addf %1, %119 : vector<16x64xf32>
    %c0_43 = arith.constant 0 : index
    %c0_44 = arith.constant 0 : index
    %c0_45 = arith.constant 0 : index
    %121 = vector.load %arg8[%c0_43, %c0_44, %c0_45] : memref<2x1x64xf32, #tpu.memory_space<vmem>>, vector<1x1x64xf32>
    %122 = vector.shape_cast %121 : vector<1x1x64xf32> to vector<1x64xf32>
    %c0_46 = arith.constant 0 : index
    %c0_47 = arith.constant 0 : index
    %c0_48 = arith.constant 0 : index
    %123 = vector.load %arg9[%c0_46, %c0_47, %c0_48] : memref<2x1x64xf32, #tpu.memory_space<vmem>>, vector<1x1x64xf32>
    %124 = vector.shape_cast %123 : vector<1x1x64xf32> to vector<1x64xf32>
    %cst_49 = arith.constant dense<0.000000e+00> : vector<16xf32>
    %125 = vector.multi_reduction <add>, %120, %cst_49 [1] : vector<16x64xf32> to vector<16xf32>
    %126 = vector.shape_cast %125 : vector<16xf32> to vector<16x1xf32>
    %cst_50 = arith.constant 6.400000e+01 : f32
    %127 = vector.broadcast %cst_50 : f32 to vector<16x1xf32>
    %128 = arith.divf %126, %127 : vector<16x1xf32>
    %129 = vector.broadcast %128 : vector<16x1xf32> to vector<16x64xf32>
    %130 = arith.subf %120, %129 : vector<16x64xf32>
    %131 = arith.mulf %130, %130 : vector<16x64xf32>
    %cst_51 = arith.constant dense<0.000000e+00> : vector<16xf32>
    %132 = vector.multi_reduction <add>, %131, %cst_51 [1] : vector<16x64xf32> to vector<16xf32>
    %133 = vector.shape_cast %132 : vector<16xf32> to vector<16x1xf32>
    %cst_52 = arith.constant 6.400000e+01 : f32
    %134 = vector.broadcast %cst_52 : f32 to vector<16x1xf32>
    %135 = arith.divf %133, %134 : vector<16x1xf32>
    %cst_53 = arith.constant 9.99999974E-6 : f32
    %136 = vector.broadcast %cst_53 : f32 to vector<16x1xf32>
    %137 = arith.addf %135, %136 : vector<16x1xf32>
    %138 = math.rsqrt %137 : vector<16x1xf32>
    %139 = vector.broadcast %138 : vector<16x1xf32> to vector<16x64xf32>
    %140 = arith.mulf %130, %139 : vector<16x64xf32>
    %141 = vector.broadcast %122 : vector<1x64xf32> to vector<16x64xf32>
    %142 = arith.mulf %140, %141 : vector<16x64xf32>
    %143 = vector.broadcast %124 : vector<1x64xf32> to vector<16x64xf32>
    %144 = arith.addf %142, %143 : vector<16x64xf32>
    %145 = arith.truncf %144 : vector<16x64xf32> to vector<16x64xbf16>
    %c0_54 = arith.constant 0 : index
    %c0_55 = arith.constant 0 : index
    %c0_56 = arith.constant 0 : index
    %146 = vector.load %arg10[%c0_54, %c0_55, %c0_56] : memref<2x64x128xbf16, #tpu.memory_space<vmem>>, vector<1x64x128xbf16>
    %147 = vector.shape_cast %146 : vector<1x64x128xbf16> to vector<64x128xbf16>
    %cst_57 = arith.constant dense<0.000000e+00> : vector<16x128xf32>
    %148 = tpu.matmul %145, %147, %cst_57 {dimension_numbers = #tpu.dot_dimension_numbers<[1], [0], [0], [1], [0, 0, 1, 1], [], []>} : vector<16x64xbf16>, vector<64x128xbf16>, vector<16x128xf32> -> vector<16x128xf32>
    %c0_58 = arith.constant 0 : index
    %c0_59 = arith.constant 0 : index
    %c0_60 = arith.constant 0 : index
    %149 = vector.load %arg11[%c0_58, %c0_59, %c0_60] : memref<2x1x128xf32, #tpu.memory_space<vmem>>, vector<1x1x128xf32>
    %150 = vector.shape_cast %149 : vector<1x1x128xf32> to vector<1x128xf32>
    %151 = vector.broadcast %150 : vector<1x128xf32> to vector<16x128xf32>
    %152 = arith.addf %148, %151 : vector<16x128xf32>
    %153 = arith.mulf %152, %152 : vector<16x128xf32>
    %154 = arith.mulf %152, %153 : vector<16x128xf32>
    %cst_61 = arith.constant 4.471500e-02 : f32
    %155 = vector.broadcast %cst_61 : f32 to vector<16x128xf32>
    %156 = arith.mulf %155, %154 : vector<16x128xf32>
    %157 = arith.addf %152, %156 : vector<16x128xf32>
    %cst_62 = arith.constant 0.797884583 : f32
    %158 = vector.broadcast %cst_62 : f32 to vector<16x128xf32>
    %159 = arith.mulf %158, %157 : vector<16x128xf32>
    %160 = math.tanh %159 : vector<16x128xf32>
    %cst_63 = arith.constant 1.000000e+00 : f32
    %161 = vector.broadcast %cst_63 : f32 to vector<16x128xf32>
    %162 = arith.addf %161, %160 : vector<16x128xf32>
    %cst_64 = arith.constant 5.000000e-01 : f32
    %163 = vector.broadcast %cst_64 : f32 to vector<16x128xf32>
    %164 = arith.mulf %163, %162 : vector<16x128xf32>
    %165 = arith.mulf %152, %164 : vector<16x128xf32>
    %166 = arith.truncf %165 : vector<16x128xf32> to vector<16x128xbf16>
    %c0_65 = arith.constant 0 : index
    %c0_66 = arith.constant 0 : index
    %c0_67 = arith.constant 0 : index
    %167 = vector.load %arg12[%c0_65, %c0_66, %c0_67] : memref<2x128x64xbf16, #tpu.memory_space<vmem>>, vector<1x128x64xbf16>
    %168 = vector.shape_cast %167 : vector<1x128x64xbf16> to vector<128x64xbf16>
    %cst_68 = arith.constant dense<0.000000e+00> : vector<16x64xf32>
    %169 = tpu.matmul %166, %168, %cst_68 {dimension_numbers = #tpu.dot_dimension_numbers<[1], [0], [0], [1], [0, 0, 1, 1], [], []>} : vector<16x128xbf16>, vector<128x64xbf16>, vector<16x64xf32> -> vector<16x64xf32>
    %170 = arith.addf %120, %169 : vector<16x64xf32>
    %c0_69 = arith.constant 0 : index
    %c0_70 = arith.constant 0 : index
    %c0_71 = arith.constant 0 : index
    %171 = vector.load %arg13[%c0_69, %c0_70, %c0_71] : memref<2x1x64xf32, #tpu.memory_space<vmem>>, vector<1x1x64xf32>
    %172 = vector.shape_cast %171 : vector<1x1x64xf32> to vector<1x64xf32>
    %173 = vector.broadcast %172 : vector<1x64xf32> to vector<16x64xf32>
    %174 = arith.addf %170, %173 : vector<16x64xf32>
    %c1 = arith.constant 1 : index
    %c0_72 = arith.constant 0 : index
    %c0_73 = arith.constant 0 : index
    %175 = vector.load %arg2[%c1, %c0_72, %c0_73] : memref<2x1x64xf32, #tpu.memory_space<vmem>>, vector<1x1x64xf32>
    %176 = vector.shape_cast %175 : vector<1x1x64xf32> to vector<1x64xf32>
    %c1_74 = arith.constant 1 : index
    %c0_75 = arith.constant 0 : index
    %c0_76 = arith.constant 0 : index
    %177 = vector.load %arg3[%c1_74, %c0_75, %c0_76] : memref<2x1x64xf32, #tpu.memory_space<vmem>>, vector<1x1x64xf32>
    %178 = vector.shape_cast %177 : vector<1x1x64xf32> to vector<1x64xf32>
    %cst_77 = arith.constant dense<0.000000e+00> : vector<16xf32>
    %179 = vector.multi_reduction <add>, %174, %cst_77 [1] : vector<16x64xf32> to vector<16xf32>
    %180 = vector.shape_cast %179 : vector<16xf32> to vector<16x1xf32>
    %cst_78 = arith.constant 6.400000e+01 : f32
    %181 = vector.broadcast %cst_78 : f32 to vector<16x1xf32>
    %182 = arith.divf %180, %181 : vector<16x1xf32>
    %183 = vector.broadcast %182 : vector<16x1xf32> to vector<16x64xf32>
    %184 = arith.subf %174, %183 : vector<16x64xf32>
    %185 = arith.mulf %184, %184 : vector<16x64xf32>
    %cst_79 = arith.constant dense<0.000000e+00> : vector<16xf32>
    %186 = vector.multi_reduction <add>, %185, %cst_79 [1] : vector<16x64xf32> to vector<16xf32>
    %187 = vector.shape_cast %186 : vector<16xf32> to vector<16x1xf32>
    %cst_80 = arith.constant 6.400000e+01 : f32
    %188 = vector.broadcast %cst_80 : f32 to vector<16x1xf32>
    %189 = arith.divf %187, %188 : vector<16x1xf32>
    %cst_81 = arith.constant 9.99999974E-6 : f32
    %190 = vector.broadcast %cst_81 : f32 to vector<16x1xf32>
    %191 = arith.addf %189, %190 : vector<16x1xf32>
    %192 = math.rsqrt %191 : vector<16x1xf32>
    %193 = vector.broadcast %192 : vector<16x1xf32> to vector<16x64xf32>
    %194 = arith.mulf %184, %193 : vector<16x64xf32>
    %195 = vector.broadcast %176 : vector<1x64xf32> to vector<16x64xf32>
    %196 = arith.mulf %194, %195 : vector<16x64xf32>
    %197 = vector.broadcast %178 : vector<1x64xf32> to vector<16x64xf32>
    %198 = arith.addf %196, %197 : vector<16x64xf32>
    %199 = arith.truncf %198 : vector<16x64xf32> to vector<16x64xbf16>
    %c1_82 = arith.constant 1 : index
    %c0_83 = arith.constant 0 : index
    %c0_84 = arith.constant 0 : index
    %200 = vector.load %arg4[%c1_82, %c0_83, %c0_84] : memref<2x64x192xbf16, #tpu.memory_space<vmem>>, vector<1x64x192xbf16>
    %201 = vector.shape_cast %200 : vector<1x64x192xbf16> to vector<64x192xbf16>
    %cst_85 = arith.constant dense<0.000000e+00> : vector<16x192xf32>
    %202 = tpu.matmul %199, %201, %cst_85 {dimension_numbers = #tpu.dot_dimension_numbers<[1], [0], [0], [1], [0, 0, 1, 1], [], []>} : vector<16x64xbf16>, vector<64x192xbf16>, vector<16x192xf32> -> vector<16x192xf32>
    %c1_86 = arith.constant 1 : index
    %c0_87 = arith.constant 0 : index
    %c0_88 = arith.constant 0 : index
    %203 = vector.load %arg5[%c1_86, %c0_87, %c0_88] : memref<2x1x192xf32, #tpu.memory_space<vmem>>, vector<1x1x192xf32>
    %204 = vector.shape_cast %203 : vector<1x1x192xf32> to vector<1x192xf32>
    %205 = vector.broadcast %204 : vector<1x192xf32> to vector<16x192xf32>
    %206 = arith.addf %202, %205 : vector<16x192xf32>
    %207 = vector.extract_strided_slice %206 {offsets = [0, 0], sizes = [16, 64], strides = [1, 1]} : vector<16x192xf32> to vector<16x64xf32>
    %cst_89 = arith.constant 2.500000e-01 : f32
    %208 = vector.broadcast %cst_89 : f32 to vector<16x64xf32>
    %209 = arith.mulf %207, %208 : vector<16x64xf32>
    %210 = vector.extract_strided_slice %206 {offsets = [0, 64], sizes = [16, 64], strides = [1, 1]} : vector<16x192xf32> to vector<16x64xf32>
    %211 = vector.extract_strided_slice %206 {offsets = [0, 128], sizes = [16, 64], strides = [1, 1]} : vector<16x192xf32> to vector<16x64xf32>
    %212 = vector.extract_strided_slice %209 {offsets = [0, 0], sizes = [16, 16], strides = [1, 1]} : vector<16x64xf32> to vector<16x16xf32>
    %213 = arith.truncf %212 : vector<16x16xf32> to vector<16x16xbf16>
    %214 = vector.extract_strided_slice %210 {offsets = [0, 0], sizes = [16, 16], strides = [1, 1]} : vector<16x64xf32> to vector<16x16xf32>
    %215 = arith.truncf %214 : vector<16x16xf32> to vector<16x16xbf16>
    %216 = vector.extract_strided_slice %211 {offsets = [0, 0], sizes = [16, 16], strides = [1, 1]} : vector<16x64xf32> to vector<16x16xf32>
    %217 = arith.truncf %216 : vector<16x16xf32> to vector<16x16xbf16>
    %cst_90 = arith.constant dense<0.000000e+00> : vector<16x16xf32>
    %218 = tpu.matmul %213, %215, %cst_90 {dimension_numbers = #tpu.dot_dimension_numbers<[1], [1], [0], [0], [0, 0, 1, 0], [], []>} : vector<16x16xbf16>, vector<16x16xbf16>, vector<16x16xf32> -> vector<16x16xf32>
    %cst_91 = arith.constant dense<0xFF800000> : vector<16xf32>
    %219 = vector.multi_reduction <maximumf>, %218, %cst_91 [1] : vector<16x16xf32> to vector<16xf32>
    %220 = vector.shape_cast %219 : vector<16xf32> to vector<16x1xf32>
    %221 = vector.broadcast %220 : vector<16x1xf32> to vector<16x16xf32>
    %222 = arith.subf %218, %221 : vector<16x16xf32>
    %223 = math.exp %222 : vector<16x16xf32>
    %cst_92 = arith.constant dense<0.000000e+00> : vector<16xf32>
    %224 = vector.multi_reduction <add>, %223, %cst_92 [1] : vector<16x16xf32> to vector<16xf32>
    %225 = vector.shape_cast %224 : vector<16xf32> to vector<16x1xf32>
    %226 = vector.broadcast %225 : vector<16x1xf32> to vector<16x16xf32>
    %227 = arith.divf %223, %226 : vector<16x16xf32>
    %228 = arith.truncf %227 : vector<16x16xf32> to vector<16x16xbf16>
    %cst_93 = arith.constant dense<0.000000e+00> : vector<16x16xf32>
    %229 = tpu.matmul %228, %217, %cst_93 {dimension_numbers = #tpu.dot_dimension_numbers<[1], [0], [0], [1], [0, 0, 1, 1], [], []>} : vector<16x16xbf16>, vector<16x16xbf16>, vector<16x16xf32> -> vector<16x16xf32>
    %230 = vector.extract_strided_slice %209 {offsets = [0, 16], sizes = [16, 16], strides = [1, 1]} : vector<16x64xf32> to vector<16x16xf32>
    %231 = arith.truncf %230 : vector<16x16xf32> to vector<16x16xbf16>
    %232 = vector.extract_strided_slice %210 {offsets = [0, 16], sizes = [16, 16], strides = [1, 1]} : vector<16x64xf32> to vector<16x16xf32>
    %233 = arith.truncf %232 : vector<16x16xf32> to vector<16x16xbf16>
    %234 = vector.extract_strided_slice %211 {offsets = [0, 16], sizes = [16, 16], strides = [1, 1]} : vector<16x64xf32> to vector<16x16xf32>
    %235 = arith.truncf %234 : vector<16x16xf32> to vector<16x16xbf16>
    %cst_94 = arith.constant dense<0.000000e+00> : vector<16x16xf32>
    %236 = tpu.matmul %231, %233, %cst_94 {dimension_numbers = #tpu.dot_dimension_numbers<[1], [1], [0], [0], [0, 0, 1, 0], [], []>} : vector<16x16xbf16>, vector<16x16xbf16>, vector<16x16xf32> -> vector<16x16xf32>
    %cst_95 = arith.constant dense<0xFF800000> : vector<16xf32>
    %237 = vector.multi_reduction <maximumf>, %236, %cst_95 [1] : vector<16x16xf32> to vector<16xf32>
    %238 = vector.shape_cast %237 : vector<16xf32> to vector<16x1xf32>
    %239 = vector.broadcast %238 : vector<16x1xf32> to vector<16x16xf32>
    %240 = arith.subf %236, %239 : vector<16x16xf32>
    %241 = math.exp %240 : vector<16x16xf32>
    %cst_96 = arith.constant dense<0.000000e+00> : vector<16xf32>
    %242 = vector.multi_reduction <add>, %241, %cst_96 [1] : vector<16x16xf32> to vector<16xf32>
    %243 = vector.shape_cast %242 : vector<16xf32> to vector<16x1xf32>
    %244 = vector.broadcast %243 : vector<16x1xf32> to vector<16x16xf32>
    %245 = arith.divf %241, %244 : vector<16x16xf32>
    %246 = arith.truncf %245 : vector<16x16xf32> to vector<16x16xbf16>
    %cst_97 = arith.constant dense<0.000000e+00> : vector<16x16xf32>
    %247 = tpu.matmul %246, %235, %cst_97 {dimension_numbers = #tpu.dot_dimension_numbers<[1], [0], [0], [1], [0, 0, 1, 1], [], []>} : vector<16x16xbf16>, vector<16x16xbf16>, vector<16x16xf32> -> vector<16x16xf32>
    %248 = vector.extract_strided_slice %209 {offsets = [0, 32], sizes = [16, 16], strides = [1, 1]} : vector<16x64xf32> to vector<16x16xf32>
    %249 = arith.truncf %248 : vector<16x16xf32> to vector<16x16xbf16>
    %250 = vector.extract_strided_slice %210 {offsets = [0, 32], sizes = [16, 16], strides = [1, 1]} : vector<16x64xf32> to vector<16x16xf32>
    %251 = arith.truncf %250 : vector<16x16xf32> to vector<16x16xbf16>
    %252 = vector.extract_strided_slice %211 {offsets = [0, 32], sizes = [16, 16], strides = [1, 1]} : vector<16x64xf32> to vector<16x16xf32>
    %253 = arith.truncf %252 : vector<16x16xf32> to vector<16x16xbf16>
    %cst_98 = arith.constant dense<0.000000e+00> : vector<16x16xf32>
    %254 = tpu.matmul %249, %251, %cst_98 {dimension_numbers = #tpu.dot_dimension_numbers<[1], [1], [0], [0], [0, 0, 1, 0], [], []>} : vector<16x16xbf16>, vector<16x16xbf16>, vector<16x16xf32> -> vector<16x16xf32>
    %cst_99 = arith.constant dense<0xFF800000> : vector<16xf32>
    %255 = vector.multi_reduction <maximumf>, %254, %cst_99 [1] : vector<16x16xf32> to vector<16xf32>
    %256 = vector.shape_cast %255 : vector<16xf32> to vector<16x1xf32>
    %257 = vector.broadcast %256 : vector<16x1xf32> to vector<16x16xf32>
    %258 = arith.subf %254, %257 : vector<16x16xf32>
    %259 = math.exp %258 : vector<16x16xf32>
    %cst_100 = arith.constant dense<0.000000e+00> : vector<16xf32>
    %260 = vector.multi_reduction <add>, %259, %cst_100 [1] : vector<16x16xf32> to vector<16xf32>
    %261 = vector.shape_cast %260 : vector<16xf32> to vector<16x1xf32>
    %262 = vector.broadcast %261 : vector<16x1xf32> to vector<16x16xf32>
    %263 = arith.divf %259, %262 : vector<16x16xf32>
    %264 = arith.truncf %263 : vector<16x16xf32> to vector<16x16xbf16>
    %cst_101 = arith.constant dense<0.000000e+00> : vector<16x16xf32>
    %265 = tpu.matmul %264, %253, %cst_101 {dimension_numbers = #tpu.dot_dimension_numbers<[1], [0], [0], [1], [0, 0, 1, 1], [], []>} : vector<16x16xbf16>, vector<16x16xbf16>, vector<16x16xf32> -> vector<16x16xf32>
    %266 = vector.extract_strided_slice %209 {offsets = [0, 48], sizes = [16, 16], strides = [1, 1]} : vector<16x64xf32> to vector<16x16xf32>
    %267 = arith.truncf %266 : vector<16x16xf32> to vector<16x16xbf16>
    %268 = vector.extract_strided_slice %210 {offsets = [0, 48], sizes = [16, 16], strides = [1, 1]} : vector<16x64xf32> to vector<16x16xf32>
    %269 = arith.truncf %268 : vector<16x16xf32> to vector<16x16xbf16>
    %270 = vector.extract_strided_slice %211 {offsets = [0, 48], sizes = [16, 16], strides = [1, 1]} : vector<16x64xf32> to vector<16x16xf32>
    %271 = arith.truncf %270 : vector<16x16xf32> to vector<16x16xbf16>
    %cst_102 = arith.constant dense<0.000000e+00> : vector<16x16xf32>
    %272 = tpu.matmul %267, %269, %cst_102 {dimension_numbers = #tpu.dot_dimension_numbers<[1], [1], [0], [0], [0, 0, 1, 0], [], []>} : vector<16x16xbf16>, vector<16x16xbf16>, vector<16x16xf32> -> vector<16x16xf32>
    %cst_103 = arith.constant dense<0xFF800000> : vector<16xf32>
    %273 = vector.multi_reduction <maximumf>, %272, %cst_103 [1] : vector<16x16xf32> to vector<16xf32>
    %274 = vector.shape_cast %273 : vector<16xf32> to vector<16x1xf32>
    %275 = vector.broadcast %274 : vector<16x1xf32> to vector<16x16xf32>
    %276 = arith.subf %272, %275 : vector<16x16xf32>
    %277 = math.exp %276 : vector<16x16xf32>
    %cst_104 = arith.constant dense<0.000000e+00> : vector<16xf32>
    %278 = vector.multi_reduction <add>, %277, %cst_104 [1] : vector<16x16xf32> to vector<16xf32>
    %279 = vector.shape_cast %278 : vector<16xf32> to vector<16x1xf32>
    %280 = vector.broadcast %279 : vector<16x1xf32> to vector<16x16xf32>
    %281 = arith.divf %277, %280 : vector<16x16xf32>
    %282 = arith.truncf %281 : vector<16x16xf32> to vector<16x16xbf16>
    %cst_105 = arith.constant dense<0.000000e+00> : vector<16x16xf32>
    %283 = tpu.matmul %282, %271, %cst_105 {dimension_numbers = #tpu.dot_dimension_numbers<[1], [0], [0], [1], [0, 0, 1, 1], [], []>} : vector<16x16xbf16>, vector<16x16xbf16>, vector<16x16xf32> -> vector<16x16xf32>
    %284 = tpu.concatenate %229, %247, %265, %283 in 1 : vector<16x16xf32>, vector<16x16xf32>, vector<16x16xf32>, vector<16x16xf32> -> vector<16x64xf32>
    %285 = arith.truncf %284 : vector<16x64xf32> to vector<16x64xbf16>
    %c1_106 = arith.constant 1 : index
    %c0_107 = arith.constant 0 : index
    %c0_108 = arith.constant 0 : index
    %286 = vector.load %arg6[%c1_106, %c0_107, %c0_108] : memref<2x64x64xbf16, #tpu.memory_space<vmem>>, vector<1x64x64xbf16>
    %287 = vector.shape_cast %286 : vector<1x64x64xbf16> to vector<64x64xbf16>
    %cst_109 = arith.constant dense<0.000000e+00> : vector<16x64xf32>
    %288 = tpu.matmul %285, %287, %cst_109 {dimension_numbers = #tpu.dot_dimension_numbers<[1], [0], [0], [1], [0, 0, 1, 1], [], []>} : vector<16x64xbf16>, vector<64x64xbf16>, vector<16x64xf32> -> vector<16x64xf32>
    %c1_110 = arith.constant 1 : index
    %c0_111 = arith.constant 0 : index
    %c0_112 = arith.constant 0 : index
    %289 = vector.load %arg7[%c1_110, %c0_111, %c0_112] : memref<2x1x64xf32, #tpu.memory_space<vmem>>, vector<1x1x64xf32>
    %290 = vector.shape_cast %289 : vector<1x1x64xf32> to vector<1x64xf32>
    %291 = vector.broadcast %290 : vector<1x64xf32> to vector<16x64xf32>
    %292 = arith.addf %288, %291 : vector<16x64xf32>
    %293 = arith.addf %174, %292 : vector<16x64xf32>
    %c1_113 = arith.constant 1 : index
    %c0_114 = arith.constant 0 : index
    %c0_115 = arith.constant 0 : index
    %294 = vector.load %arg8[%c1_113, %c0_114, %c0_115] : memref<2x1x64xf32, #tpu.memory_space<vmem>>, vector<1x1x64xf32>
    %295 = vector.shape_cast %294 : vector<1x1x64xf32> to vector<1x64xf32>
    %c1_116 = arith.constant 1 : index
    %c0_117 = arith.constant 0 : index
    %c0_118 = arith.constant 0 : index
    %296 = vector.load %arg9[%c1_116, %c0_117, %c0_118] : memref<2x1x64xf32, #tpu.memory_space<vmem>>, vector<1x1x64xf32>
    %297 = vector.shape_cast %296 : vector<1x1x64xf32> to vector<1x64xf32>
    %cst_119 = arith.constant dense<0.000000e+00> : vector<16xf32>
    %298 = vector.multi_reduction <add>, %293, %cst_119 [1] : vector<16x64xf32> to vector<16xf32>
    %299 = vector.shape_cast %298 : vector<16xf32> to vector<16x1xf32>
    %cst_120 = arith.constant 6.400000e+01 : f32
    %300 = vector.broadcast %cst_120 : f32 to vector<16x1xf32>
    %301 = arith.divf %299, %300 : vector<16x1xf32>
    %302 = vector.broadcast %301 : vector<16x1xf32> to vector<16x64xf32>
    %303 = arith.subf %293, %302 : vector<16x64xf32>
    %304 = arith.mulf %303, %303 : vector<16x64xf32>
    %cst_121 = arith.constant dense<0.000000e+00> : vector<16xf32>
    %305 = vector.multi_reduction <add>, %304, %cst_121 [1] : vector<16x64xf32> to vector<16xf32>
    %306 = vector.shape_cast %305 : vector<16xf32> to vector<16x1xf32>
    %cst_122 = arith.constant 6.400000e+01 : f32
    %307 = vector.broadcast %cst_122 : f32 to vector<16x1xf32>
    %308 = arith.divf %306, %307 : vector<16x1xf32>
    %cst_123 = arith.constant 9.99999974E-6 : f32
    %309 = vector.broadcast %cst_123 : f32 to vector<16x1xf32>
    %310 = arith.addf %308, %309 : vector<16x1xf32>
    %311 = math.rsqrt %310 : vector<16x1xf32>
    %312 = vector.broadcast %311 : vector<16x1xf32> to vector<16x64xf32>
    %313 = arith.mulf %303, %312 : vector<16x64xf32>
    %314 = vector.broadcast %295 : vector<1x64xf32> to vector<16x64xf32>
    %315 = arith.mulf %313, %314 : vector<16x64xf32>
    %316 = vector.broadcast %297 : vector<1x64xf32> to vector<16x64xf32>
    %317 = arith.addf %315, %316 : vector<16x64xf32>
    %318 = arith.truncf %317 : vector<16x64xf32> to vector<16x64xbf16>
    %c1_124 = arith.constant 1 : index
    %c0_125 = arith.constant 0 : index
    %c0_126 = arith.constant 0 : index
    %319 = vector.load %arg10[%c1_124, %c0_125, %c0_126] : memref<2x64x128xbf16, #tpu.memory_space<vmem>>, vector<1x64x128xbf16>
    %320 = vector.shape_cast %319 : vector<1x64x128xbf16> to vector<64x128xbf16>
    %cst_127 = arith.constant dense<0.000000e+00> : vector<16x128xf32>
    %321 = tpu.matmul %318, %320, %cst_127 {dimension_numbers = #tpu.dot_dimension_numbers<[1], [0], [0], [1], [0, 0, 1, 1], [], []>} : vector<16x64xbf16>, vector<64x128xbf16>, vector<16x128xf32> -> vector<16x128xf32>
    %c1_128 = arith.constant 1 : index
    %c0_129 = arith.constant 0 : index
    %c0_130 = arith.constant 0 : index
    %322 = vector.load %arg11[%c1_128, %c0_129, %c0_130] : memref<2x1x128xf32, #tpu.memory_space<vmem>>, vector<1x1x128xf32>
    %323 = vector.shape_cast %322 : vector<1x1x128xf32> to vector<1x128xf32>
    %324 = vector.broadcast %323 : vector<1x128xf32> to vector<16x128xf32>
    %325 = arith.addf %321, %324 : vector<16x128xf32>
    %326 = arith.mulf %325, %325 : vector<16x128xf32>
    %327 = arith.mulf %325, %326 : vector<16x128xf32>
    %cst_131 = arith.constant 4.471500e-02 : f32
    %328 = vector.broadcast %cst_131 : f32 to vector<16x128xf32>
    %329 = arith.mulf %328, %327 : vector<16x128xf32>
    %330 = arith.addf %325, %329 : vector<16x128xf32>
    %cst_132 = arith.constant 0.797884583 : f32
    %331 = vector.broadcast %cst_132 : f32 to vector<16x128xf32>
    %332 = arith.mulf %331, %330 : vector<16x128xf32>
    %333 = math.tanh %332 : vector<16x128xf32>
    %cst_133 = arith.constant 1.000000e+00 : f32
    %334 = vector.broadcast %cst_133 : f32 to vector<16x128xf32>
    %335 = arith.addf %334, %333 : vector<16x128xf32>
    %cst_134 = arith.constant 5.000000e-01 : f32
    %336 = vector.broadcast %cst_134 : f32 to vector<16x128xf32>
    %337 = arith.mulf %336, %335 : vector<16x128xf32>
    %338 = arith.mulf %325, %337 : vector<16x128xf32>
    %339 = arith.truncf %338 : vector<16x128xf32> to vector<16x128xbf16>
    %c1_135 = arith.constant 1 : index
    %c0_136 = arith.constant 0 : index
    %c0_137 = arith.constant 0 : index
    %340 = vector.load %arg12[%c1_135, %c0_136, %c0_137] : memref<2x128x64xbf16, #tpu.memory_space<vmem>>, vector<1x128x64xbf16>
    %341 = vector.shape_cast %340 : vector<1x128x64xbf16> to vector<128x64xbf16>
    %cst_138 = arith.constant dense<0.000000e+00> : vector<16x64xf32>
    %342 = tpu.matmul %339, %341, %cst_138 {dimension_numbers = #tpu.dot_dimension_numbers<[1], [0], [0], [1], [0, 0, 1, 1], [], []>} : vector<16x128xbf16>, vector<128x64xbf16>, vector<16x64xf32> -> vector<16x64xf32>
    %343 = arith.addf %293, %342 : vector<16x64xf32>
    %c1_139 = arith.constant 1 : index
    %c0_140 = arith.constant 0 : index
    %c0_141 = arith.constant 0 : index
    %344 = vector.load %arg13[%c1_139, %c0_140, %c0_141] : memref<2x1x64xf32, #tpu.memory_space<vmem>>, vector<1x1x64xf32>
    %345 = vector.shape_cast %344 : vector<1x1x64xf32> to vector<1x64xf32>
    %346 = vector.broadcast %345 : vector<1x64xf32> to vector<16x64xf32>
    %347 = arith.addf %343, %346 : vector<16x64xf32>
    %c0_142 = arith.constant 0 : index
    %c0_143 = arith.constant 0 : index
    %348 = vector.load %arg14[%c0_142, %c0_143] : memref<1x64xf32, #tpu.memory_space<vmem>>, vector<1x64xf32>
    %c0_144 = arith.constant 0 : index
    %c0_145 = arith.constant 0 : index
    %349 = vector.load %arg15[%c0_144, %c0_145] : memref<1x64xf32, #tpu.memory_space<vmem>>, vector<1x64xf32>
    %cst_146 = arith.constant dense<0.000000e+00> : vector<16xf32>
    %350 = vector.multi_reduction <add>, %347, %cst_146 [1] : vector<16x64xf32> to vector<16xf32>
    %351 = vector.shape_cast %350 : vector<16xf32> to vector<16x1xf32>
    %cst_147 = arith.constant 6.400000e+01 : f32
    %352 = vector.broadcast %cst_147 : f32 to vector<16x1xf32>
    %353 = arith.divf %351, %352 : vector<16x1xf32>
    %354 = vector.broadcast %353 : vector<16x1xf32> to vector<16x64xf32>
    %355 = arith.subf %347, %354 : vector<16x64xf32>
    %356 = arith.mulf %355, %355 : vector<16x64xf32>
    %cst_148 = arith.constant dense<0.000000e+00> : vector<16xf32>
    %357 = vector.multi_reduction <add>, %356, %cst_148 [1] : vector<16x64xf32> to vector<16xf32>
    %358 = vector.shape_cast %357 : vector<16xf32> to vector<16x1xf32>
    %cst_149 = arith.constant 6.400000e+01 : f32
    %359 = vector.broadcast %cst_149 : f32 to vector<16x1xf32>
    %360 = arith.divf %358, %359 : vector<16x1xf32>
    %cst_150 = arith.constant 9.99999974E-6 : f32
    %361 = vector.broadcast %cst_150 : f32 to vector<16x1xf32>
    %362 = arith.addf %360, %361 : vector<16x1xf32>
    %363 = math.rsqrt %362 : vector<16x1xf32>
    %364 = vector.broadcast %363 : vector<16x1xf32> to vector<16x64xf32>
    %365 = arith.mulf %355, %364 : vector<16x64xf32>
    %366 = vector.broadcast %348 : vector<1x64xf32> to vector<16x64xf32>
    %367 = arith.mulf %365, %366 : vector<16x64xf32>
    %368 = vector.broadcast %349 : vector<1x64xf32> to vector<16x64xf32>
    %369 = arith.addf %367, %368 : vector<16x64xf32>
    %c0_151 = arith.constant 0 : index
    %c0_152 = arith.constant 0 : index
    %c0_153 = arith.constant 0 : index
    %370 = vector.load %arg16[%c0_151, %c0_152, %c0_153] : memref<1x16x64xf32, #tpu.memory_space<vmem>>, vector<1x16x64xf32>
    %371 = vector.shape_cast %370 : vector<1x16x64xf32> to vector<16x64xf32>
    %372 = vector.shape_cast %369 : vector<16x64xf32> to vector<1x16x64xf32>
    tpu.vector_store %arg16[%c0_151, %c0_152, %c0_153], %372 {strides = array<i32>} : memref<1x16x64xf32, #tpu.memory_space<vmem>>, vector<1x16x64xf32>,
    return
  }
  func.func @transform_0(%arg0: i32) -> (i32, i32, i32) {
    %c0_i32 = arith.constant 0 : i32
    %c0_i32_0 = arith.constant 0 : i32
    %c0_i32_1 = arith.constant 0 : i32
    return %arg0, %c0_i32, %c0_i32_0 : i32, i32, i32
  }
  func.func @transform_1(%arg0: i32) -> (i32, i32, i32) {
    %c0_i32 = arith.constant 0 : i32
    %c0_i32_0 = arith.constant 0 : i32
    %c0_i32_1 = arith.constant 0 : i32
    %c0_i32_2 = arith.constant 0 : i32
    return %c0_i32, %c0_i32_0, %c0_i32_1 : i32, i32, i32
  }
  func.func @transform_2(%arg0: i32) -> (i32, i32, i32) {
    %c0_i32 = arith.constant 0 : i32
    %c0_i32_0 = arith.constant 0 : i32
    %c0_i32_1 = arith.constant 0 : i32
    %c0_i32_2 = arith.constant 0 : i32
    return %c0_i32, %c0_i32_0, %c0_i32_1 : i32, i32, i32
  }
  func.func @transform_3(%arg0: i32) -> (i32, i32, i32) {
    %c0_i32 = arith.constant 0 : i32
    %c0_i32_0 = arith.constant 0 : i32
    %c0_i32_1 = arith.constant 0 : i32
    %c0_i32_2 = arith.constant 0 : i32
    return %c0_i32, %c0_i32_0, %c0_i32_1 : i32, i32, i32
  }
  func.func @transform_4(%arg0: i32) -> (i32, i32, i32) {
    %c0_i32 = arith.constant 0 : i32
    %c0_i32_0 = arith.constant 0 : i32
    %c0_i32_1 = arith.constant 0 : i32
    %c0_i32_2 = arith.constant 0 : i32
    return %c0_i32, %c0_i32_0, %c0_i32_1 : i32, i32, i32
  }
  func.func @transform_5(%arg0: i32) -> (i32, i32, i32) {
    %c0_i32 = arith.constant 0 : i32
    %c0_i32_0 = arith.constant 0 : i32
    %c0_i32_1 = arith.constant 0 : i32
    %c0_i32_2 = arith.constant 0 : i32
    return %c0_i32, %c0_i32_0, %c0_i32_1 : i32, i32, i32
  }
  func.func @transform_6(%arg0: i32) -> (i32, i32, i32) {
    %c0_i32 = arith.constant 0 : i32
    %c0_i32_0 = arith.constant 0 : i32
    %c0_i32_1 = arith.constant 0 : i32
    %c0_i32_2 = arith.constant 0 : i32
    return %c0_i32, %c0_i32_0, %c0_i32_1 : i32, i32, i32
  }
  func.func @transform_7(%arg0: i32) -> (i32, i32, i32) {
    %c0_i32 = arith.constant 0 : i32
    %c0_i32_0 = arith.constant 0 : i32
    %c0_i32_1 = arith.constant 0 : i32
    %c0_i32_2 = arith.constant 0 : i32
    return %c0_i32, %c0_i32_0, %c0_i32_1 : i32, i32, i32
  }
  func.func @transform_8(%arg0: i32) -> (i32, i32, i32) {
    %c0_i32 = arith.constant 0 : i32
    %c0_i32_0 = arith.constant 0 : i32
    %c0_i32_1 = arith.constant 0 : i32
    %c0_i32_2 = arith.constant 0 : i32
    return %c0_i32, %c0_i32_0, %c0_i32_1 : i32, i32, i32
  }
  func.func @transform_9(%arg0: i32) -> (i32, i32, i32) {
    %c0_i32 = arith.constant 0 : i32
    %c0_i32_0 = arith.constant 0 : i32
    %c0_i32_1 = arith.constant 0 : i32
    %c0_i32_2 = arith.constant 0 : i32
    return %c0_i32, %c0_i32_0, %c0_i32_1 : i32, i32, i32
  }
  func.func @transform_10(%arg0: i32) -> (i32, i32, i32) {
    %c0_i32 = arith.constant 0 : i32
    %c0_i32_0 = arith.constant 0 : i32
    %c0_i32_1 = arith.constant 0 : i32
    %c0_i32_2 = arith.constant 0 : i32
    return %c0_i32, %c0_i32_0, %c0_i32_1 : i32, i32, i32
  }
  func.func @transform_11(%arg0: i32) -> (i32, i32, i32) {
    %c0_i32 = arith.constant 0 : i32
    %c0_i32_0 = arith.constant 0 : i32
    %c0_i32_1 = arith.constant 0 : i32
    %c0_i32_2 = arith.constant 0 : i32
    return %c0_i32, %c0_i32_0, %c0_i32_1 : i32, i32, i32
  }
  func.func @transform_12(%arg0: i32) -> (i32, i32, i32) {
    %c0_i32 = arith.constant 0 : i32
    %c0_i32_0 = arith.constant 0 : i32
    %c0_i32_1 = arith.constant 0 : i32
    %c0_i32_2 = arith.constant 0 : i32
    return %c0_i32, %c0_i32_0, %c0_i32_1 : i32, i32, i32
  }
  func.func @transform_13(%arg0: i32) -> (i32, i32) {
    %c0_i32 = arith.constant 0 : i32
    %c0_i32_0 = arith.constant 0 : i32
    %c0_i32_1 = arith.constant 0 : i32
    return %c0_i32, %c0_i32_0 : i32, i32
  }
  func.func @transform_14(%arg0: i32) -> (i32, i32) {
    %c0_i32 = arith.constant 0 : i32
    %c0_i32_0 = arith.constant 0 : i32
    %c0_i32_1 = arith.constant 0 : i32
    return %c0_i32, %c0_i32_0 : i32, i32
  }
  func.func @transform_15(%arg0: i32) -> (i32, i32, i32) {
    %c0_i32 = arith.constant 0 : i32
    %c0_i32_0 = arith.constant 0 : i32
    %c0_i32_1 = arith.constant 0 : i32
    return %arg0, %c0_i32, %c0_i32_0 : i32, i32, i32
  }
}

</mosaic_0001>

<llo_original>
// kernel: whisper_encoder_debug_forward.2
$region0: #{whisper_encoder_debug_forward.2}
  #allocation0 [shape = 'u32[]', space=smem, size = 0x4, offset = 0x4, fixed_abs, tag = 'smem constant byte address 0x4 - core index']
  #allocation1 [shape = 'u32[144,128]{1,0:T(1,128)}', space=vmem, size = 0x12000, scoped, tag = 'internal scratch']
  #allocation2 [shape = 'f32[1,1]{1,0:T(1,128)S(1)}', space=vmem, size = 0x200, scoped, tag = 'scoped memory for whisper_encoder_debug_forward.2']
  %s0 = inlined_call_operand.vmem [shape: f32[2,32,128], index: 0, kind: input, shape index: {}]
  %s1 = inlined_call_operand.<no memory space> [shape: f32[1,1], index: 1, kind: input, shape index: {}]
  %s2 = inlined_call_operand.vmem [shape: f32[128,16], index: 2, kind: input, shape index: {}]
  %s3 = inlined_call_operand.vmem [shape: bf16[48,64], index: 3, kind: input, shape index: {}]
  %s4 = inlined_call_operand.vmem [shape: f32[1,64], index: 4, kind: input, shape index: {}]
  %s5 = inlined_call_operand.vmem [shape: bf16[192,64], index: 5, kind: input, shape index: {}]
  %s6 = inlined_call_operand.vmem [shape: f32[1,64], index: 6, kind: input, shape index: {}]
  %s7 = inlined_call_operand.vmem [shape: bf16[16,32], index: 7, kind: input, shape index: {}]
  %s8 = inlined_call_operand.vmem [shape: f32[16,64], index: 8, kind: input, shape index: {}]
  %s9 = inlined_call_operand.vmem [shape: f32[2,32,16], index: 9, kind: output, shape index: {0}]
  %s10 = inlined_call_operand.vmem [shape: f32[2,16,64], index: 10, kind: output, shape index: {1}]
  %11 = xla_tuple %s9, %s10
  %s12 = sld [smem:[#allocation0]]
  $region77: #{whisper_encoder_debug_forward.2} parent=0
    _
  %s14 = ssub.s32 1, %s12
  %s15 = scalar_select 0, %s14, %s12
  %v16 = vstv %s1
  %17 = vst [vmem:[#allocation2] sm:$0x1] %v16
  loop: start=0, step=1, limit=4
  $region2: #{whisper_encoder_debug_forward.2} parent=0 // loop_pre_header
    _
  $region3: #{whisper_encoder_debug_forward.2} parent=0 // loop_header
    %s19 = sphi 0, %s23
    %p20 = scmp.ge.s32.totalorder %s19, 4
    %s29 = sphi 0, %s31
    %s32 = sphi 0, %s29
    %s33 = sphi 0, %s32
    %s49 = sphi 0, %s33
    %s53 = sphi 0, %s53
    %s55 = sphi 0, %s53
    %s56 = sphi 0, %s55
    %s70 = sphi 0, %s56
    %s74 = sphi 0, %s74
    %s76 = sphi 0, %s74
    %s77 = sphi 0, %s76
    %s91 = sphi 0, %s77
    %s95 = sphi 0, %s95
    %s97 = sphi 0, %s95
    %s98 = sphi 0, %s97
    %s112 = sphi 0, %s98
    %s116 = sphi 0, %s116
    %s118 = sphi 0, %s116
    %s119 = sphi 0, %s118
    %s133 = sphi 0, %s119
    %s137 = sphi 0, %s137
    %s139 = sphi 0, %s137
    %s140 = sphi 0, %s139
    %s154 = sphi 0, %s140
    %s158 = sphi 0, %s158
    %s160 = sphi 0, %s158
    %s161 = sphi 0, %s160
    %s175 = sphi 0, %s161
    %s179 = sphi 0, %s179
    %s181 = sphi 0, %s179
    %s182 = sphi 0, %s181
    %s196 = sphi 0, %s182
    %s200 = sphi 0, %s200
    %s202 = sphi 0, %s200
    %s203 = sphi 0, %s202
    %s217 = sphi 0, %s203
    %s223 = sphi 0, %s225
    %s226 = sphi 0, %s223
    %s227 = sphi 0, %s226
    %s243 = sphi 0, %s227
    %s249 = sphi 0, %s251
    %s252 = sphi 0, %s249
    %s253 = sphi 0, %s252
    %s269 = sphi 0, %s253
  $region4: #{whisper_encoder_debug_forward.2} parent=0 // loop_header_branch
    %22 = sbr.rel (%p20) target = $region8
  $region5: #{whisper_encoder_debug_forward.2} parent=0 // loop_body
    %s24 = ssub.s32 %s19, 1
    %s25 = ssub.s32 %s19, 2
    %s26 = sadd.s32 %s19, 1
    %s27 = ssub.s32 %s19, %s26
    %p28 = scmp.eq.s32.totalorder %s27, 0
    %s30 = sadd.s32 %s29, 1
    %s31 = scalar_select %p28, %s29, %s30
    %p34 = pneg %p28
    %p35 = scmp.eq.s32.totalorder %s19, 1
    %p36 = por %p34, %p35
    %p37 = scmp.ne.s32.totalorder %s29, %s32
    %p38 = scmp.eq.s32.totalorder %s19, 0
    %p39 = por %p37, %p38
    %p40 = scmp.ne.s32.totalorder %s29, %s32
    %p41 = scmp.eq.s32.totalorder %s24, 1
    %p42 = por %p40, %p41
    %p43 = scmp.ne.s32.totalorder %s32, %s33
    %p44 = scmp.eq.s32.totalorder %s24, 0
    %p45 = por %p43, %p44
    %p46 = scmp.ne.s32.totalorder %s32, %s33
    %p47 = scmp.eq.s32.totalorder %s25, 1
    %p48 = por %p46, %p47
    %p50 = scmp.ne.s32.totalorder %s33, %s49
    %p51 = scmp.eq.s32.totalorder %s25, 0
    %p52 = por %p50, %p51
    %s54 = sadd.s32 %s53, 1
    %p57 = scmp.eq.s32.totalorder %s19, 1
    %p58 = scmp.ne.s32.totalorder %s53, %s55
    %p59 = scmp.eq.s32.totalorder %s19, 0
    %p60 = por %p58, %p59
    %p61 = scmp.ne.s32.totalorder %s53, %s55
    %p62 = scmp.eq.s32.totalorder %s24, 1
    %p63 = por %p61, %p62
    %p64 = scmp.ne.s32.totalorder %s55, %s56
    %p65 = scmp.eq.s32.totalorder %s24, 0
    %p66 = por %p64, %p65
    %p67 = scmp.ne.s32.totalorder %s55, %s56
    %p68 = scmp.eq.s32.totalorder %s25, 1
    %p69 = por %p67, %p68
    %p71 = scmp.ne.s32.totalorder %s56, %s70
    %p72 = scmp.eq.s32.totalorder %s25, 0
    %p73 = por %p71, %p72
    %s75 = sadd.s32 %s74, 1
    %p78 = scmp.eq.s32.totalorder %s19, 1
    %p79 = scmp.ne.s32.totalorder %s74, %s76
    %p80 = scmp.eq.s32.totalorder %s19, 0
    %p81 = por %p79, %p80
    %p82 = scmp.ne.s32.totalorder %s74, %s76
    %p83 = scmp.eq.s32.totalorder %s24, 1
    %p84 = por %p82, %p83
    %p85 = scmp.ne.s32.totalorder %s76, %s77
    %p86 = scmp.eq.s32.totalorder %s24, 0
    %p87 = por %p85, %p86
    %p88 = scmp.ne.s32.totalorder %s76, %s77
    %p89 = scmp.eq.s32.totalorder %s25, 1
    %p90 = por %p88, %p89
    %p92 = scmp.ne.s32.totalorder %s77, %s91
    %p93 = scmp.eq.s32.totalorder %s25, 0
    %p94 = por %p92, %p93
    %s96 = sadd.s32 %s95, 1
    %p99 = scmp.eq.s32.totalorder %s19, 1
    %p100 = scmp.ne.s32.totalorder %s95, %s97
    %p101 = scmp.eq.s32.totalorder %s19, 0
    %p102 = por %p100, %p101
    %p103 = scmp.ne.s32.totalorder %s95, %s97
    %p104 = scmp.eq.s32.totalorder %s24, 1
    %p105 = por %p103, %p104
    %p106 = scmp.ne.s32.totalorder %s97, %s98
    %p107 = scmp.eq.s32.totalorder %s24, 0
    %p108 = por %p106, %p107
    %p109 = scmp.ne.s32.totalorder %s97, %s98
    %p110 = scmp.eq.s32.totalorder %s25, 1
    %p111 = por %p109, %p110
    %p113 = scmp.ne.s32.totalorder %s98, %s112
    %p114 = scmp.eq.s32.totalorder %s25, 0
    %p115 = por %p113, %p114
    %s117 = sadd.s32 %s116, 1
    %p120 = scmp.eq.s32.totalorder %s19, 1
    %p121 = scmp.ne.s32.totalorder %s116, %s118
    %p122 = scmp.eq.s32.totalorder %s19, 0
    %p123 = por %p121, %p122
    %p124 = scmp.ne.s32.totalorder %s116, %s118
    %p125 = scmp.eq.s32.totalorder %s24, 1
    %p126 = por %p124, %p125
    %p127 = scmp.ne.s32.totalorder %s118, %s119
    %p128 = scmp.eq.s32.totalorder %s24, 0
    %p129 = por %p127, %p128
    %p130 = scmp.ne.s32.totalorder %s118, %s119
    %p131 = scmp.eq.s32.totalorder %s25, 1
    %p132 = por %p130, %p131
    %p134 = scmp.ne.s32.totalorder %s119, %s133
    %p135 = scmp.eq.s32.totalorder %s25, 0
    %p136 = por %p134, %p135
    %s138 = sadd.s32 %s137, 1
    %p141 = scmp.eq.s32.totalorder %s19, 1
    %p142 = scmp.ne.s32.totalorder %s137, %s139
    %p143 = scmp.eq.s32.totalorder %s19, 0
    %p144 = por %p142, %p143
    %p145 = scmp.ne.s32.totalorder %s137, %s139
    %p146 = scmp.eq.s32.totalorder %s24, 1
    %p147 = por %p145, %p146
    %p148 = scmp.ne.s32.totalorder %s139, %s140
    %p149 = scmp.eq.s32.totalorder %s24, 0
    %p150 = por %p148, %p149
    %p151 = scmp.ne.s32.totalorder %s139, %s140
    %p152 = scmp.eq.s32.totalorder %s25, 1
    %p153 = por %p151, %p152
    %p155 = scmp.ne.s32.totalorder %s140, %s154
    %p156 = scmp.eq.s32.totalorder %s25, 0
    %p157 = por %p155, %p156
    %s159 = sadd.s32 %s158, 1
    %p162 = scmp.eq.s32.totalorder %s19, 1
    %p163 = scmp.ne.s32.totalorder %s158, %s160
    %p164 = scmp.eq.s32.totalorder %s19, 0
    %p165 = por %p163, %p164
    %p166 = scmp.ne.s32.totalorder %s158, %s160
    %p167 = scmp.eq.s32.totalorder %s24, 1
    %p168 = por %p166, %p167
    %p169 = scmp.ne.s32.totalorder %s160, %s161
    %p170 = scmp.eq.s32.totalorder %s24, 0
    %p171 = por %p169, %p170
    %p172 = scmp.ne.s32.totalorder %s160, %s161
    %p173 = scmp.eq.s32.totalorder %s25, 1
    %p174 = por %p172, %p173
    %p176 = scmp.ne.s32.totalorder %s161, %s175
    %p177 = scmp.eq.s32.totalorder %s25, 0
    %p178 = por %p176, %p177
    %s180 = sadd.s32 %s179, 1
    %p183 = scmp.eq.s32.totalorder %s19, 1
    %p184 = scmp.ne.s32.totalorder %s179, %s181
    %p185 = scmp.eq.s32.totalorder %s19, 0
    %p186 = por %p184, %p185
    %p187 = scmp.ne.s32.totalorder %s179, %s181
    %p188 = scmp.eq.s32.totalorder %s24, 1
    %p189 = por %p187, %p188
    %p190 = scmp.ne.s32.totalorder %s181, %s182
    %p191 = scmp.eq.s32.totalorder %s24, 0
    %p192 = por %p190, %p191
    %p193 = scmp.ne.s32.totalorder %s181, %s182
    %p194 = scmp.eq.s32.totalorder %s25, 1
    %p195 = por %p193, %p194
    %p197 = scmp.ne.s32.totalorder %s182, %s196
    %p198 = scmp.eq.s32.totalorder %s25, 0
    %p199 = por %p197, %p198
    %s201 = sadd.s32 %s200, 1
    %p204 = scmp.eq.s32.totalorder %s19, 1
    %p205 = scmp.ne.s32.totalorder %s200, %s202
    %p206 = scmp.eq.s32.totalorder %s19, 0
    %p207 = por %p205, %p206
    %p208 = scmp.ne.s32.totalorder %s200, %s202
    %p209 = scmp.eq.s32.totalorder %s24, 1
    %p210 = por %p208, %p209
    %p211 = scmp.ne.s32.totalorder %s202, %s203
    %p212 = scmp.eq.s32.totalorder %s24, 0
    %p213 = por %p211, %p212
    %p214 = scmp.ne.s32.totalorder %s202, %s203
    %p215 = scmp.eq.s32.totalorder %s25, 1
    %p216 = por %p214, %p215
    %p218 = scmp.ne.s32.totalorder %s203, %s217
    %p219 = scmp.eq.s32.totalorder %s25, 0
    %p220 = por %p218, %p219
    %s221 = ssub.s32 %s19, %s26
    %p222 = scmp.eq.s32.totalorder %s221, 0
    %s224 = sadd.s32 %s223, 1
    %s225 = scalar_select %p222, %s223, %s224
    %p228 = pneg %p222
    %p229 = scmp.eq.s32.totalorder %s19, 1
    %p230 = por %p228, %p229
    %p231 = scmp.ne.s32.totalorder %s223, %s226
    %p232 = scmp.eq.s32.totalorder %s19, 0
    %p233 = por %p231, %p232
    %p234 = scmp.ne.s32.totalorder %s223, %s226
    %p235 = scmp.eq.s32.totalorder %s24, 1
    %p236 = por %p234, %p235
    %p237 = scmp.ne.s32.totalorder %s226, %s227
    %p238 = scmp.eq.s32.totalorder %s24, 0
    %p239 = por %p237, %p238
    %p240 = scmp.ne.s32.totalorder %s226, %s227
    %p241 = scmp.eq.s32.totalorder %s25, 1
    %p242 = por %p240, %p241
    %p244 = scmp.ne.s32.totalorder %s227, %s243
    %p245 = scmp.eq.s32.totalorder %s25, 0
    %p246 = por %p244, %p245
    %s247 = ssub.s32 %s19, %s26
    %p248 = scmp.eq.s32.totalorder %s247, 0
    %s250 = sadd.s32 %s249, 1
    %s251 = scalar_select %p248, %s249, %s250
    %p254 = pneg %p248
    %p255 = scmp.eq.s32.totalorder %s19, 1
    %p256 = por %p254, %p255
    %p257 = scmp.ne.s32.totalorder %s249, %s252
    %p258 = scmp.eq.s32.totalorder %s19, 0
    %p259 = por %p257, %p258
    %p260 = scmp.ne.s32.totalorder %s249, %s252
    %p261 = scmp.eq.s32.totalorder %s24, 1
    %p262 = por %p260, %p261
    %p263 = scmp.ne.s32.totalorder %s252, %s253
    %p264 = scmp.eq.s32.totalorder %s24, 0
    %p265 = por %p263, %p264
    %p266 = scmp.ne.s32.totalorder %s252, %s253
    %p267 = scmp.eq.s32.totalorder %s25, 1
    %p268 = por %p266, %p267
    %p270 = scmp.ne.s32.totalorder %s253, %s269
    %p271 = scmp.eq.s32.totalorder %s25, 0
    %p272 = por %p270, %p271
    %p273 = scmp.le.s32.totalorder 1, %s19
    %p274 = scmp.lt.s32.totalorder %s19, 3
    %p275 = pnand %p273, %p274
    %p276 = pneg %p275
    // Predicated region
    $region9: #{whisper_encoder_debug_forward.2} parent=5 // pred_check
      _
    $region10: #{whisper_encoder_debug_forward.2} parent=5 // pred_check_branch
      %278 = sbr.rel (%p275) target = $region12
    $region11: #{whisper_encoder_debug_forward.2} parent=5 // pred_region
      %s279 = ssub.s32 %s19, 1
      // Predicated region
      $region13: #{whisper_encoder_debug_forward.2} parent=11 // pred_check
        %p280 = pneg %p66
      $region14: #{whisper_encoder_debug_forward.2} parent=11 // pred_check_branch
        %282 = sbr.rel (%p280) target = $region16
      $region15: #{whisper_encoder_debug_forward.2} parent=11 // pred_region
        _
      $region16: #{whisper_encoder_debug_forward.2} parent=11 // pred_fallthru
        _
      // Predicated region
      $region17: #{whisper_encoder_debug_forward.2} parent=11 // pred_check
        %p283 = pneg %p87
      $region18: #{whisper_encoder_debug_forward.2} parent=11 // pred_check_branch
        %285 = sbr.rel (%p283) target = $region20
      $region19: #{whisper_encoder_debug_forward.2} parent=11 // pred_region
        _
      $region20: #{whisper_encoder_debug_forward.2} parent=11 // pred_fallthru
        _
      // Predicated region
      $region21: #{whisper_encoder_debug_forward.2} parent=11 // pred_check
        %p286 = pneg %p108
      $region22: #{whisper_encoder_debug_forward.2} parent=11 // pred_check_branch
        %288 = sbr.rel (%p286) target = $region24
      $region23: #{whisper_encoder_debug_forward.2} parent=11 // pred_region
        _
      $region24: #{whisper_encoder_debug_forward.2} parent=11 // pred_fallthru
        _
      // Predicated region
      $region25: #{whisper_encoder_debug_forward.2} parent=11 // pred_check
        %p289 = pneg %p129
      $region26: #{whisper_encoder_debug_forward.2} parent=11 // pred_check_branch
        %291 = sbr.rel (%p289) target = $region28
      $region27: #{whisper_encoder_debug_forward.2} parent=11 // pred_region
        _
      $region28: #{whisper_encoder_debug_forward.2} parent=11 // pred_fallthru
        _
      // Predicated region
      $region29: #{whisper_encoder_debug_forward.2} parent=11 // pred_check
        %p292 = pneg %p150
      $region30: #{whisper_encoder_debug_forward.2} parent=11 // pred_check_branch
        %294 = sbr.rel (%p292) target = $region32
      $region31: #{whisper_encoder_debug_forward.2} parent=11 // pred_region
        _
      $region32: #{whisper_encoder_debug_forward.2} parent=11 // pred_fallthru
        _
      // Predicated region
      $region33: #{whisper_encoder_debug_forward.2} parent=11 // pred_check
        %p295 = pneg %p171
      $region34: #{whisper_encoder_debug_forward.2} parent=11 // pred_check_branch
        %297 = sbr.rel (%p295) target = $region36
      $region35: #{whisper_encoder_debug_forward.2} parent=11 // pred_region
        _
      $region36: #{whisper_encoder_debug_forward.2} parent=11 // pred_fallthru
        _
      // Predicated region
      $region37: #{whisper_encoder_debug_forward.2} parent=11 // pred_check
        %p298 = pneg %p192
      $region38: #{whisper_encoder_debug_forward.2} parent=11 // pred_check_branch
        %300 = sbr.rel (%p298) target = $region40
      $region39: #{whisper_encoder_debug_forward.2} parent=11 // pred_region
        _
      $region40: #{whisper_encoder_debug_forward.2} parent=11 // pred_fallthru
        _
      // Predicated region
      $region41: #{whisper_encoder_debug_forward.2} parent=11 // pred_check
        %p301 = pneg %p213
      $region42: #{whisper_encoder_debug_forward.2} parent=11 // pred_check_branch
        %303 = sbr.rel (%p301) target = $region44
      $region43: #{whisper_encoder_debug_forward.2} parent=11 // pred_region
        _
      $region44: #{whisper_encoder_debug_forward.2} parent=11 // pred_fallthru
        _
    $region12: #{whisper_encoder_debug_forward.2} parent=5 // pred_fallthru
      _
    %p304 = scmp.lt.s32.totalorder %s19, 2
    // Predicated region
    $region45: #{whisper_encoder_debug_forward.2} parent=5 // pred_check
      %p305 = pneg %p304
    $region46: #{whisper_encoder_debug_forward.2} parent=5 // pred_check_branch
      %307 = sbr.rel (%p305) target = $region48
    $region47: #{whisper_encoder_debug_forward.2} parent=5 // pred_region
      // Predicated region
      $region49: #{whisper_encoder_debug_forward.2} parent=47 // pred_check
        %p308 = pneg %p39
      $region50: #{whisper_encoder_debug_forward.2} parent=47 // pred_check_branch
        %310 = sbr.rel (%p308) target = $region52
      $region51: #{whisper_encoder_debug_forward.2} parent=47 // pred_region
        %p311 = scmp.lt.s32.totalorder %s19, 1
        %s312 = scalar_select %p311, %s19, 1
        %s313 = smul.addr %s312, 4
        %s314 = smul.addr %s313, 8
        %s315 = scalar_lea.vmem %s0, %s314
      $region52: #{whisper_encoder_debug_forward.2} parent=47 // pred_fallthru
        _
    $region48: #{whisper_encoder_debug_forward.2} parent=5 // pred_fallthru
      _
    %p316 = scmp.le.s32.totalorder 1, %s19
    %p317 = scmp.lt.s32.totalorder %s19, 3
    %p318 = pnand %p316, %p317
    %p319 = pneg %p318
    // Predicated region
    $region53: #{whisper_encoder_debug_forward.2} parent=5 // pred_check
      _
    $region54: #{whisper_encoder_debug_forward.2} parent=5 // pred_check_branch
      %321 = sbr.rel (%p318) target = $region56
    $region55: #{whisper_encoder_debug_forward.2} parent=5 // pred_region
      %s322 = ssub.s32 %s19, 1
      %p323 = scmp.lt.s32.totalorder %s24, 1
      %s324 = scalar_select %p323, %s24, 1
      %s325 = smul.addr %s324, 4
      %s326 = smul.addr %s325, 8
      %s327 = scalar_lea.vmem %s0, %s326
      %p328 = pneg %p45
      %p329 = pneg %p42
      %p330 = pneg %p66
      %p331 = pneg %p63
      %p332 = pneg %p87
      %p333 = pneg %p84
      %p334 = pneg %p108
      %p335 = pneg %p105
      %p336 = pneg %p129
      %p337 = pneg %p126
      %p338 = pneg %p150
      %p339 = pneg %p147
      %p340 = pneg %p171
      %p341 = pneg %p168
      %p342 = pneg %p192
      %p343 = pneg %p189
      %p344 = pneg %p213
      %p345 = pneg %p210
      %p346 = pneg %p239
      %p347 = pneg %p236
      %p348 = scmp.lt.s32.totalorder %s24, 1
      %s349 = scalar_select %p348, %s24, 1
      %s350 = smul.addr %s349, 4
      %s351 = smul.addr %s350, 8
      %s352 = scalar_lea.vmem %s9, %s351
      %p353 = pneg %p265
      %p354 = pneg %p262
      %p355 = scmp.lt.s32.totalorder %s24, 1
      %s356 = scalar_select %p355, %s24, 1
      %s357 = smul.addr %s356, 2
      %s358 = smul.addr %s357, 8
      %s359 = scalar_lea.vmem %s10, %s358
      %p360 = scmp.lt.s32.totalorder %s24, 1
      %s361 = scalar_select %p360, %s24, 1
      %s362 = smul.addr %s361, 4
      %s363 = smul.addr %s362, 8
      %s364 = scalar_lea.vmem %s0, %s363
      %p365 = scmp.lt.s32.totalorder %s24, 1
      %s366 = scalar_select %p365, %s24, 1
      %s367 = smul.addr %s366, 4
      %s368 = smul.addr %s367, 8
      %s369 = scalar_lea.vmem %s9, %s368
      %p370 = scmp.lt.s32.totalorder %s24, 1
      %s371 = scalar_select %p370, %s24, 1
      %s372 = smul.addr %s371, 2
      %s373 = smul.addr %s372, 8
      %s374 = scalar_lea.vmem %s10, %s373
      %v376 = vld [vmem:[%s364] sm:$0xff]
      %v377 = vld [vmem:[%s364 + $0x8] sm:$0xff]
      %v378 = vld [vmem:[%s364 + $0x10] sm:$0xff]
      %v379 = vld [vmem:[%s364 + $0x18] sm:$0xff]
      %v380 = vld [vmem:[%s2] sm:$0xff]
      %v381 = vld [vmem:[%s2 + $0x8] sm:$0xff]
      %v382 = vld [vmem:[%s2 + $0x10] sm:$0xff]
      %v383 = vld [vmem:[%s2 + $0x18] sm:$0xff]
      %v384 = vld [vmem:[%s2 + $0x20] sm:$0xff]
      %v385 = vld [vmem:[%s2 + $0x28] sm:$0xff]
      %v386 = vld [vmem:[%s2 + $0x30] sm:$0xff]
      %v387 = vld [vmem:[%s2 + $0x38] sm:$0xff]
      %v388 = vld [vmem:[%s2 + $0x40] sm:$0xff]
      %v389 = vld [vmem:[%s2 + $0x48] sm:$0xff]
      %v390 = vld [vmem:[%s2 + $0x50] sm:$0xff]
      %v391 = vld [vmem:[%s2 + $0x58] sm:$0xff]
      %v392 = vld [vmem:[%s2 + $0x60] sm:$0xff]
      %v393 = vld [vmem:[%s2 + $0x68] sm:$0xff]
      %v394 = vld [vmem:[%s2 + $0x70] sm:$0xff]
      %v395 = vld [vmem:[%s2 + $0x78] sm:$0xff]
      %396 = vmatprep.subr.mxu0 0.0
      %397 = vmatpush1.msra.mxu0 %v380
      %398 = vmatprep.subr.mxu0 0.0
      %399 = vmatpush1.msra.mxu0 %v381
      %400 = vmatprep.subr.mxu0 0.0
      %401 = vmatpush1.msra.mxu0 %v382
      %402 = vmatprep.subr.mxu0 0.0
      %403 = vmatpush1.msra.mxu0 %v383
      %404 = vmatprep.subr.mxu0 0.0
      %405 = vmatpush1.msra.mxu0 %v384
      %406 = vmatprep.subr.mxu0 0.0
      %407 = vmatpush1.msra.mxu0 %v385
      %408 = vmatprep.subr.mxu0 0.0
      %409 = vmatpush1.msra.mxu0 %v386
      %410 = vmatprep.subr.mxu0 0.0
      %411 = vmatpush1.msra.mxu0 %v387
      %412 = vmatprep.subr.mxu0 0.0
      %413 = vmatpush1.msra.mxu0 %v388
      %414 = vmatprep.subr.mxu0 0.0
      %415 = vmatpush1.msra.mxu0 %v389
      %416 = vmatprep.subr.mxu0 0.0
      %417 = vmatpush1.msra.mxu0 %v390
      %418 = vmatprep.subr.mxu0 0.0
      %419 = vmatpush1.msra.mxu0 %v391
      %420 = vmatprep.subr.mxu0 0.0
      %421 = vmatpush1.msra.mxu0 %v392
      %422 = vmatprep.subr.mxu0 0.0
      %423 = vmatpush1.msra.mxu0 %v393
      %424 = vmatprep.subr.mxu0 0.0
      %425 = vmatpush1.msra.mxu0 %v394
      %426 = vmatprep.subr.mxu0 0.0
      %427 = vmatpush1.msra.mxu0 %v395
      %428 = vmatprep.subr.mxu0 0.0
      %429 = vmatpush1.msra.mxu0 0.0
      %430 = vmatprep.subr.mxu0 0.0
      %431 = vmatpush1.msra.mxu0 0.0
      %432 = vmatprep.subr.mxu0 0.0
      %433 = vmatpush1.msra.mxu0 0.0
      %434 = vmatprep.subr.mxu0 0.0
      %435 = vmatpush1.msra.mxu0 0.0
      %436 = vmatprep.subr.mxu0 0.0
      %437 = vmatpush1.msra.mxu0 0.0
      %438 = vmatprep.subr.mxu0 0.0
      %439 = vmatpush1.msra.mxu0 0.0
      %440 = vmatprep.subr.mxu0 0.0
      %441 = vmatpush1.msra.mxu0 0.0
      %442 = vmatprep.subr.mxu0 0.0
      %443 = vmatpush1.msra.mxu0 0.0
      %444 = vmatprep.subr.mxu0 0.0
      %445 = vmatpush1.msra.mxu0 0.0
      %446 = vmatprep.subr.mxu0 0.0
      %447 = vmatpush1.msra.mxu0 0.0
      %448 = vmatprep.subr.mxu0 0.0
      %449 = vmatpush1.msra.mxu0 0.0
      %450 = vmatprep.subr.mxu0 0.0
      %451 = vmatpush1.msra.mxu0 0.0
      %452 = vmatprep.subr.mxu0 0.0
      %453 = vmatpush1.msra.mxu0 0.0
      %454 = vmatprep.subr.mxu0 0.0
      %455 = vmatpush1.msra.mxu0 0.0
      %456 = vmatprep.subr.mxu0 0.0
      %457 = vmatpush1.msra.mxu0 0.0
      %458 = vmatprep.subr.mxu0 0.0
      %459 = vmatpush1.msra.mxu0 0.0
      %460 = vmatprep.mubr.f32.mxu0 0.0
      %461 = vmatmul.mubr.f32.gmra.mrb[0].mxu0 %v376
      %v462 = vpop.f32.mrb[0].mxu0
      %v463 = vadd.f32 0.0, %v462
      %v464 = vpop.f32.mrb[0].mxu0
      %465 = vmatprep.mubr.f32.mxu0 0.0
      %466 = vmatmul.mubr.f32.gmra.mrb[0].mxu0 %v377
      %v467 = vpop.f32.mrb[0].mxu0
      %v468 = vadd.f32 0.0, %v467
      %v469 = vpop.f32.mrb[0].mxu0
      %470 = vmatprep.mubr.f32.mxu0 0.0
      %471 = vmatmul.mubr.f32.gmra.mrb[0].mxu0 %v378
      %v472 = vpop.f32.mrb[0].mxu0
      %v473 = vadd.f32 0.0, %v472
      %v474 = vpop.f32.mrb[0].mxu0
      %475 = vmatprep.mubr.f32.mxu0 0.0
      %476 = vmatmul.mubr.f32.gmra.mrb[0].mxu0 %v379
      %v477 = vpop.f32.mrb[0].mxu0
      %v478 = vadd.f32 0.0, %v477
      %v479 = vpop.f32.mrb[0].mxu0
      %480 = vdwg.mxu0
      %v481 = vmax.f32 %v463, 1e-10
      %v482 = vmax.f32 %v468, 1e-10
      %v483 = vmax.f32 %v473, 1e-10
      %v484 = vmax.f32 %v478, 1e-10
      %v485 = vlog2.pop %v481
      %v486 = vmul.f32 %v485, 0.6931472
      %v487 = vlog2.pop %v482
      %v488 = vmul.f32 %v487, 0.6931472
      %v489 = vlog2.pop %v483
      %v490 = vmul.f32 %v489, 0.6931472
      %v491 = vlog2.pop %v484
      %v492 = vmul.f32 %v491, 0.6931472
      %v493 = vmul.f32 %v486, 0.4342945
      %v494 = vmul.f32 %v488, 0.4342945
      %v495 = vmul.f32 %v490, 0.4342945
      %v496 = vmul.f32 %v492, 0.4342945
      %v497 = vld [vmem:[#allocation2] sm:$0x1]
      %v498 = vsub.f32 %v497, 8.0
      %v500 = vlaneseq
      %v501 = vshrl.u32 %v500, 7
      %v502 = vsub.s32 0, %v501
      %v503 = vrot.slane %v498, %v502
      %504 = vset.pattern.permute.xlu0 0
      %505 = vperm.xlu0 %504, %v503
      %v506 = vpop.permute.xlu0 %505
      %v508 = vmax.f32 %v493, %v506
      %v509 = vmax.f32 %v494, %v506
      %v510 = vmax.f32 %v495, %v506
      %v511 = vmax.f32 %v496, %v506
      %v512 = vadd.f32 %v508, 4.0
      %v513 = vadd.f32 %v509, 4.0
      %v514 = vadd.f32 %v510, 4.0
      %v515 = vadd.f32 %v511, 4.0
      %v516 = vmul.f32 %v512, 0.25
      %v517 = vmul.f32 %v513, 0.25
      %v518 = vmul.f32 %v514, 0.25
      %v519 = vmul.f32 %v515, 0.25
      %vm520 = vcmask 130048
      %521 = vst.msk [vmem:[%s369] sm:$0xff] %vm520, %v516
      %522 = vst.msk [vmem:[%s369 + $0x8] sm:$0xff] %vm520, %v517
      %523 = vst.msk [vmem:[%s369 + $0x10] sm:$0xff] %vm520, %v518
      %524 = vst.msk [vmem:[%s369 + $0x18] sm:$0xff] %vm520, %v519
      %v525 = vlaneseq
      %v526 = vshrl.u32 %v525, 7
      %v527 = vadd.s32 %v526, 8
      %v528 = vadd.s32 %v526, 16
      %v529 = vadd.s32 %v526, 24
      %vm530 = vcmp.eq.s32.totalorder %v526, 0
      %vm531 = vcmp.eq.s32.totalorder %v527, 0
      %vm532 = vcmp.eq.s32.totalorder %v528, 0
      %vm533 = vcmp.eq.s32.totalorder %v529, 0
      %v534 = vrot.slane %v516, 7
      %v535 = vrot.slane %v517, 7
      %v536 = vrot.slane %v518, 7
      %v537 = vrot.slane %v519, 7
      %vm538 = vcmp.lt.s32.totalorder %v526, 1
      %v539 = vsel %vm538, %v536, %v537
      %v540 = vsel %vm538, %v535, %v536
      %v541 = vsel %vm538, %v534, %v535
      %v542 = vsel %vm538, %v537, %v534
      %v543 = vsel %vm530, 1, 0
      %v544 = vsel %vm531, 1, 0
      %v545 = vsel %vm532, 1, 0
      %v546 = vsel %vm533, 1, 0
      %vm547 = vcmp.eq.s32.totalorder %v543, 1
      %vm548 = vcmp.eq.s32.totalorder %v544, 1
      %vm549 = vcmp.eq.s32.totalorder %v545, 1
      %vm550 = vcmp.eq.s32.totalorder %v546, 1
      %v551 = vsel %vm547, 0.0, %v542
      %v552 = vsel %vm548, 0.0, %v541
      %v553 = vsel %vm549, 0.0, %v540
      %v554 = vsel %vm550, 0.0, %v539
      %vm555 = vcmp.eq.s32.totalorder %v526, 31
      %vm556 = vcmp.eq.s32.totalorder %v527, 31
      %vm557 = vcmp.eq.s32.totalorder %v528, 31
      %vm558 = vcmp.eq.s32.totalorder %v529, 31
      %v559 = vrot.slane %v516, 1
      %v560 = vrot.slane %v517, 1
      %v561 = vrot.slane %v518, 1
      %v562 = vrot.slane %v519, 1
      %vm563 = vcmp.lt.s32.totalorder %v526, 7
      %v564 = vsel %vm563, %v561, %v562
      %v565 = vsel %vm563, %v560, %v561
      %v566 = vsel %vm563, %v559, %v560
      %v567 = vsel %vm563, %v562, %v559
      %v568 = vsel %vm555, 1, 0
      %v569 = vsel %vm556, 1, 0
      %v570 = vsel %vm557, 1, 0
      %v571 = vsel %vm558, 1, 0
      %vm572 = vcmp.eq.s32.totalorder %v568, 1
      %vm573 = vcmp.eq.s32.totalorder %v569, 1
      %vm574 = vcmp.eq.s32.totalorder %v570, 1
      %vm575 = vcmp.eq.s32.totalorder %v571, 1
      %v576 = vsel %vm572, 0.0, %v566
      %v577 = vsel %vm573, 0.0, %v565
      %v578 = vsel %vm574, 0.0, %v564
      %v579 = vsel %vm575, 0.0, %v567
      %584 = vrot.lane.b32.xlu0 %v516, 16
      %v585 = vpop.permute.xlu0 %584
      %586 = vrot.lane.b32.xlu0 %v517, 16
      %v587 = vpop.permute.xlu0 %586
      %588 = vrot.lane.b32.xlu0 %v518, 16
      %v589 = vpop.permute.xlu0 %588
      %590 = vrot.lane.b32.xlu0 %v519, 16
      %v591 = vpop.permute.xlu0 %590
      %600 = vrot.lane.b32.xlu0 %v576, 32
      %v601 = vpop.permute.xlu0 %600
      %602 = vrot.lane.b32.xlu0 %v577, 32
      %v603 = vpop.permute.xlu0 %602
      %604 = vrot.lane.b32.xlu0 %v578, 32
      %v605 = vpop.permute.xlu0 %604
      %606 = vrot.lane.b32.xlu0 %v579, 32
      %v607 = vpop.permute.xlu0 %606
      %v612 = vsel %vm520, %v551, %v585
      %v613 = vsel %vm520, %v552, %v587
      %v614 = vsel %vm520, %v553, %v589
      %v615 = vsel %vm520, %v554, %v591
      %vm616 = vcmask 261120
      %v617 = vsel %vm616, %v612, %v601
      %v618 = vsel %vm616, %v613, %v603
      %v619 = vsel %vm616, %v614, %v605
      %v620 = vsel %vm616, %v615, %v607
      %v621 = vpack.c.bf16 %v618, %v617
      %v622 = vpack.c.bf16 %v620, %v619
      %v623 = vld [vmem:[%s3] sm:$0xf]
      %v624 = vld [vmem:[%s3 + $0x4] sm:$0xf]
      %v625 = vld [vmem:[%s3 + $0x8] sm:$0xf]
      %v626 = vld [vmem:[%s3 + $0xc] sm:$0xf]
      %v627 = vld [vmem:[%s3 + $0x10] sm:$0xf]
      %v628 = vld [vmem:[%s3 + $0x14] sm:$0xf]
      %v629 = vld [vmem:[%s4] sm:$0x1]
      %v631 = vlaneseq
      %v632 = vshrl.u32 %v631, 7
      %v633 = vsub.s32 0, %v632
      %v634 = vrot.slane %v629, %v633
      %v642 = vunpack.c.l.b16 %v623
      %v643 = vunpack.c.l.b16 %v624
      %v644 = vunpack.c.l.b16 %v625
      %v645 = vunpack.c.l.b16 %v626
      %v646 = vunpack.c.l.b16 %v627
      %v647 = vunpack.c.l.b16 %v628
      %v648 = vpack.c.b16 %v643, %v642
      %v649 = vpack.c.b16 %v645, %v644
      %v650 = vpack.c.b16 %v647, %v646
      %vm654 = vcmask 392192
      %v656 = vsel %vm654, %v621, 0
      %v659 = vsel %vm654, %v622, 0
      %661 = vmatprep.subr.bf16.mxu0 0
      %662 = vmatpush1.bf16.msra.mxu0 %v648
      %663 = vmatprep.subr.bf16.mxu0 0
      %664 = vmatpush1.bf16.msra.mxu0 %v649
      %665 = vmatprep.subr.bf16.mxu0 0
      %666 = vmatpush1.bf16.msra.mxu0 %v650
      %667 = vmatprep.subr.bf16.mxu0 0
      %668 = vmatpush1.bf16.msra.mxu0 0
      %669 = vmatprep.subr.bf16.mxu0 0
      %670 = vmatpush1.bf16.msra.mxu0 0
      %671 = vmatprep.subr.bf16.mxu0 0
      %672 = vmatpush1.bf16.msra.mxu0 0
      %673 = vmatprep.subr.bf16.mxu0 0
      %674 = vmatpush1.bf16.msra.mxu0 0
      %675 = vmatprep.subr.bf16.mxu0 0
      %676 = vmatpush1.bf16.msra.mxu0 0
      %677 = vmatprep.subr.bf16.mxu0 0
      %678 = vmatpush1.bf16.msra.mxu0 0
      %679 = vmatprep.subr.bf16.mxu0 0
      %680 = vmatpush1.bf16.msra.mxu0 0
      %681 = vmatprep.subr.bf16.mxu0 0
      %682 = vmatpush1.bf16.msra.mxu0 0
      %683 = vmatprep.subr.bf16.mxu0 0
      %684 = vmatpush1.bf16.msra.mxu0 0
      %685 = vmatprep.subr.bf16.mxu0 0
      %686 = vmatpush1.bf16.msra.mxu0 0
      %687 = vmatprep.subr.bf16.mxu0 0
      %688 = vmatpush1.bf16.msra.mxu0 0
      %689 = vmatprep.subr.bf16.mxu0 0
      %690 = vmatpush1.bf16.msra.mxu0 0
      %691 = vmatprep.subr.bf16.mxu0 0
      %692 = vmatpush1.bf16.msra.mxu0 0
      %693 = vmatprep.mubr.bf16.mxu0 0
      %694 = vmatmul.mubr.bf16.gmra.mrb[0].mxu0 %v656
      %v695 = vpop.f32.mrb[0].mxu0
      %v696 = vadd.f32 %v634, %v695
      %v697 = vpop.f32.mrb[0].mxu0
      %v698 = vpop.f32.mrb[0].mxu0
      %v699 = vadd.f32 %v634, %v698
      %v700 = vpop.f32.mrb[0].mxu0
      %701 = vmatprep.mubr.bf16.mxu0 0
      %702 = vmatmul.mubr.bf16.gmra.mrb[0].mxu0 %v659
      %v703 = vpop.f32.mrb[0].mxu0
      %v704 = vadd.f32 %v634, %v703
      %v705 = vpop.f32.mrb[0].mxu0
      %v706 = vpop.f32.mrb[0].mxu0
      %v707 = vadd.f32 %v634, %v706
      %v708 = vpop.f32.mrb[0].mxu0
      %709 = vdwg.mxu0
      %v710 = vmul.f32 %v696, %v696
      %v711 = vmul.f32 %v699, %v699
      %v712 = vmul.f32 %v704, %v704
      %v713 = vmul.f32 %v707, %v707
      %v714 = vmul.f32 %v696, %v710
      %v715 = vmul.f32 %v699, %v711
      %v716 = vmul.f32 %v704, %v712
      %v717 = vmul.f32 %v707, %v713
      %v718 = vmul.f32 %v714, 0.044715
      %v719 = vmul.f32 %v715, 0.044715
      %v720 = vmul.f32 %v716, 0.044715
      %v721 = vmul.f32 %v717, 0.044715
      %v722 = vadd.f32 %v696, %v718
      %v723 = vadd.f32 %v699, %v719
      %v724 = vadd.f32 %v704, %v720
      %v725 = vadd.f32 %v707, %v721
      %v726 = vmul.f32 %v722, 0.7978846
      %v727 = vmul.f32 %v723, 0.7978846
      %v728 = vmul.f32 %v724, 0.7978846
      %v729 = vmul.f32 %v725, 0.7978846
      %v730 = vtanh.pop %v726
      %v731 = vtanh.pop %v727
      %v732 = vtanh.pop %v728
      %v733 = vtanh.pop %v729
      %v734 = vadd.f32 %v730, 1.0
      %v735 = vadd.f32 %v731, 1.0
      %v736 = vadd.f32 %v732, 1.0
      %v737 = vadd.f32 %v733, 1.0
      %v738 = vmul.f32 %v734, 0.5
      %v739 = vmul.f32 %v735, 0.5
      %v740 = vmul.f32 %v736, 0.5
      %v741 = vmul.f32 %v737, 0.5
      %v742 = vmul.f32 %v696, %v738
      %v743 = vmul.f32 %v699, %v739
      %v744 = vmul.f32 %v704, %v740
      %v745 = vmul.f32 %v707, %v741
      %v746 = vrot.slane %v742, 7
      %v747 = vrot.slane %v743, 7
      %v748 = vrot.slane %v744, 7
      %v749 = vrot.slane %v745, 7
      %v750 = vsel %vm538, %v748, %v749
      %v751 = vsel %vm538, %v747, %v748
      %v752 = vsel %vm538, %v746, %v747
      %v753 = vsel %vm538, %v749, %v746
      %v754 = vsel %vm547, 0.0, %v753
      %v755 = vsel %vm548, 0.0, %v752
      %v756 = vsel %vm549, 0.0, %v751
      %v757 = vsel %vm550, 0.0, %v750
      %v758 = vrot.slane %v742, 1
      %v759 = vrot.slane %v743, 1
      %v760 = vrot.slane %v744, 1
      %v761 = vrot.slane %v745, 1
      %v762 = vsel %vm563, %v760, %v761
      %v763 = vsel %vm563, %v759, %v760
      %v764 = vsel %vm563, %v758, %v759
      %v765 = vsel %vm563, %v761, %v758
      %v766 = vsel %vm572, 0.0, %v764
      %v767 = vsel %vm573, 0.0, %v763
      %v768 = vsel %vm574, 0.0, %v762
      %v769 = vsel %vm575, 0.0, %v765
      %774 = vrot.lane.b32.xlu0 %v742, 64
      %v775 = vpop.permute.xlu0 %774
      %776 = vrot.lane.b32.xlu0 %v743, 64
      %v777 = vpop.permute.xlu0 %776
      %778 = vrot.lane.b32.xlu0 %v744, 64
      %v779 = vpop.permute.xlu0 %778
      %780 = vrot.lane.b32.xlu0 %v745, 64
      %v781 = vpop.permute.xlu0 %780
      %vm786 = vcmask 523264
      %v787 = vsel %vm786, %v754, %v775
      %v788 = vsel %vm786, %v755, %v777
      %v789 = vsel %vm786, %v756, %v779
      %v790 = vsel %vm786, %v757, %v781
      %v791 = vpack.c.bf16 %v788, %v787
      %v792 = vpack.c.bf16 %v767, %v766
      %v793 = vpack.c.bf16 %v790, %v789
      %v794 = vpack.c.bf16 %v769, %v768
      %v795 = vld [vmem:[%s7] sm:$0xf]
      %v796 = vld [vmem:[%s7 + $0x4] sm:$0xf]
      %v799 = vunpack.c.l.b16 %v795
      %v800 = vunpack.c.l.b16 %v796
      %v801 = vpack.c.b16 %v800, %v799
      %v803 = vsel %vm616, %v801, 0
      %805 = vmatprep.subr.bf16.mxu0 %v792
      %806 = vmatpush1.bf16.msra.mxu0 %v791
      %807 = vmatprep.subr.bf16.mxu0 %v794
      %808 = vmatpush1.bf16.msra.mxu0 %v793
      %809 = vmatprep.subr.bf16.mxu0 0
      %810 = vmatpush1.bf16.msra.mxu0 0
      %811 = vmatprep.subr.bf16.mxu0 0
      %812 = vmatpush1.bf16.msra.mxu0 0
      %813 = vmatprep.subr.bf16.mxu0 0
      %814 = vmatpush1.bf16.msra.mxu0 0
      %815 = vmatprep.subr.bf16.mxu0 0
      %816 = vmatpush1.bf16.msra.mxu0 0
      %817 = vmatprep.subr.bf16.mxu0 0
      %818 = vmatpush1.bf16.msra.mxu0 0
      %819 = vmatprep.subr.bf16.mxu0 0
      %820 = vmatpush1.bf16.msra.mxu0 0
      %821 = vmatprep.subr.bf16.mxu0 0
      %822 = vmatpush1.bf16.msra.mxu0 0
      %823 = vmatprep.subr.bf16.mxu0 0
      %824 = vmatpush1.bf16.msra.mxu0 0
      %825 = vmatprep.subr.bf16.mxu0 0
      %826 = vmatpush1.bf16.msra.mxu0 0
      %827 = vmatprep.subr.bf16.mxu0 0
      %828 = vmatpush1.bf16.msra.mxu0 0
      %829 = vmatprep.subr.bf16.mxu0 0
      %830 = vmatpush1.bf16.msra.mxu0 0
      %831 = vmatprep.subr.bf16.mxu0 0
      %832 = vmatpush1.bf16.msra.mxu0 0
      %833 = vmatprep.subr.bf16.mxu0 0
      %834 = vmatpush1.bf16.msra.mxu0 0
      %835 = vmatprep.subr.bf16.mxu0 0
      %836 = vmatpush1.bf16.msra.mxu0 0
      %837 = vmatprep.mubr.bf16.mxu0 0
      %838 = vmatmul.mubr.bf16.gmra.mrb[0].mxu0 %v803
      %v839 = vpop.f32.mrb[0].mxu0
      %v840 = vadd.f32 0.0, %v839
      %v841 = vpop.f32.mrb[0].mxu0
      %v842 = vadd.f32 0.0, %v841
      %v843 = vpop.f32.mrb[0].mxu0
      %v844 = vadd.f32 0.0, %v843
      %v845 = vpop.f32.mrb[0].mxu0
      %v846 = vadd.f32 0.0, %v845
      %847 = vdwg.mxu0
      %v848 = vpack.c.bf16 %v844, %v840
      %v849 = vpack.c.bf16 %v846, %v842
      %v850 = vld [vmem:[%s5] sm:$0xf]
      %v851 = vld [vmem:[%s5 + $0x4] sm:$0xf]
      %v852 = vld [vmem:[%s5 + $0x8] sm:$0xf]
      %v853 = vld [vmem:[%s5 + $0xc] sm:$0xf]
      %v854 = vld [vmem:[%s5 + $0x10] sm:$0xf]
      %v855 = vld [vmem:[%s5 + $0x14] sm:$0xf]
      %v856 = vld [vmem:[%s5 + $0x18] sm:$0xf]
      %v857 = vld [vmem:[%s5 + $0x1c] sm:$0xf]
      %v858 = vld [vmem:[%s5 + $0x20] sm:$0xf]
      %v859 = vld [vmem:[%s5 + $0x24] sm:$0xf]
      %v860 = vld [vmem:[%s5 + $0x28] sm:$0xf]
      %v861 = vld [vmem:[%s5 + $0x2c] sm:$0xf]
      %v862 = vld [vmem:[%s5 + $0x30] sm:$0xf]
      %v863 = vld [vmem:[%s5 + $0x34] sm:$0xf]
      %v864 = vld [vmem:[%s5 + $0x38] sm:$0xf]
      %v865 = vld [vmem:[%s5 + $0x3c] sm:$0xf]
      %v866 = vld [vmem:[%s5 + $0x40] sm:$0xf]
      %v867 = vld [vmem:[%s5 + $0x44] sm:$0xf]
      %v868 = vld [vmem:[%s5 + $0x48] sm:$0xf]
      %v869 = vld [vmem:[%s5 + $0x4c] sm:$0xf]
      %v870 = vld [vmem:[%s5 + $0x50] sm:$0xf]
      %v871 = vld [vmem:[%s5 + $0x54] sm:$0xf]
      %v872 = vld [vmem:[%s5 + $0x58] sm:$0xf]
      %v873 = vld [vmem:[%s5 + $0x5c] sm:$0xf]
      %v874 = vld [vmem:[%s6] sm:$0x1]
      %v876 = vlaneseq
      %v877 = vshrl.u32 %v876, 7
      %v878 = vsub.s32 0, %v877
      %v879 = vrot.slane %v874, %v878
      %v905 = vunpack.c.l.b16 %v850
      %v906 = vunpack.c.l.b16 %v851
      %v907 = vunpack.c.l.b16 %v852
      %v908 = vunpack.c.l.b16 %v853
      %v909 = vunpack.c.l.b16 %v854
      %v910 = vunpack.c.l.b16 %v855
      %v911 = vunpack.c.l.b16 %v856
      %v912 = vunpack.c.l.b16 %v857
      %v913 = vunpack.c.l.b16 %v858
      %v914 = vunpack.c.l.b16 %v859
      %v915 = vunpack.c.l.b16 %v860
      %v916 = vunpack.c.l.b16 %v861
      %v917 = vunpack.c.l.b16 %v862
      %v918 = vunpack.c.l.b16 %v863
      %v919 = vunpack.c.l.b16 %v864
      %v920 = vunpack.c.l.b16 %v865
      %v921 = vunpack.c.l.b16 %v866
      %v922 = vunpack.c.l.b16 %v867
      %v923 = vunpack.c.l.b16 %v868
      %v924 = vunpack.c.l.b16 %v869
      %v925 = vunpack.c.l.b16 %v870
      %v926 = vunpack.c.l.b16 %v871
      %v927 = vunpack.c.l.b16 %v872
      %v928 = vunpack.c.l.b16 %v873
      %v929 = vpack.c.b16 %v906, %v905
      %v930 = vpack.c.b16 %v908, %v907
      %v931 = vpack.c.b16 %v910, %v909
      %v932 = vpack.c.b16 %v912, %v911
      %v933 = vpack.c.b16 %v914, %v913
      %v934 = vpack.c.b16 %v916, %v915
      %v935 = vpack.c.b16 %v918, %v917
      %v936 = vpack.c.b16 %v920, %v919
      %v937 = vpack.c.b16 %v922, %v921
      %v938 = vpack.c.b16 %v924, %v923
      %v939 = vpack.c.b16 %v926, %v925
      %v940 = vpack.c.b16 %v928, %v927
      %v954 = vsel %vm786, %v849, 0
      %956 = vmatprep.subr.bf16.mxu0 0
      %957 = vmatpush1.bf16.msra.mxu0 %v929
      %958 = vmatprep.subr.bf16.mxu0 0
      %959 = vmatpush1.bf16.msra.mxu0 %v930
      %960 = vmatprep.subr.bf16.mxu0 0
      %961 = vmatpush1.bf16.msra.mxu0 %v931
      %962 = vmatprep.subr.bf16.mxu0 0
      %963 = vmatpush1.bf16.msra.mxu0 %v932
      %964 = vmatprep.subr.bf16.mxu0 0
      %965 = vmatpush1.bf16.msra.mxu0 %v933
      %966 = vmatprep.subr.bf16.mxu0 0
      %967 = vmatpush1.bf16.msra.mxu0 %v934
      %968 = vmatprep.subr.bf16.mxu0 0
      %969 = vmatpush1.bf16.msra.mxu0 %v935
      %970 = vmatprep.subr.bf16.mxu0 0
      %971 = vmatpush1.bf16.msra.mxu0 %v936
      %972 = vmatprep.subr.bf16.mxu0 0
      %973 = vmatpush1.bf16.msra.mxu0 %v937
      %974 = vmatprep.subr.bf16.mxu0 0
      %975 = vmatpush1.bf16.msra.mxu0 %v938
      %976 = vmatprep.subr.bf16.mxu0 0
      %977 = vmatpush1.bf16.msra.mxu0 %v939
      %978 = vmatprep.subr.bf16.mxu0 0
      %979 = vmatpush1.bf16.msra.mxu0 %v940
      %980 = vmatprep.subr.bf16.mxu0 0
      %981 = vmatpush1.bf16.msra.mxu0 0
      %982 = vmatprep.subr.bf16.mxu0 0
      %983 = vmatpush1.bf16.msra.mxu0 0
      %984 = vmatprep.subr.bf16.mxu0 0
      %985 = vmatpush1.bf16.msra.mxu0 0
      %986 = vmatprep.subr.bf16.mxu0 0
      %987 = vmatpush1.bf16.msra.mxu0 0
      %988 = vmatprep.mubr.bf16.mxu0 %v954
      %989 = vmatmul.mubr.bf16.gmra.mrb[0].mxu0 %v848
      %v990 = vpop.f32.mrb[0].mxu0
      %v991 = vadd.f32 %v879, %v990
      %v992 = vpop.f32.mrb[0].mxu0
      %v993 = vpop.f32.mrb[0].mxu0
      %v994 = vadd.f32 %v879, %v993
      %v995 = vpop.f32.mrb[0].mxu0
      %996 = vdwg.mxu0
      %v997 = vmul.f32 %v991, %v991
      %v998 = vmul.f32 %v994, %v994
      %v999 = vmul.f32 %v991, %v997
      %v1000 = vmul.f32 %v994, %v998
      %v1001 = vmul.f32 %v999, 0.044715
      %v1002 = vmul.f32 %v1000, 0.044715
      %v1003 = vadd.f32 %v991, %v1001
      %v1004 = vadd.f32 %v994, %v1002
      %v1005 = vmul.f32 %v1003, 0.7978846
      %v1006 = vmul.f32 %v1004, 0.7978846
      %v1007 = vtanh.pop %v1005
      %v1008 = vtanh.pop %v1006
      %v1009 = vadd.f32 %v1007, 1.0
      %v1010 = vadd.f32 %v1008, 1.0
      %v1011 = vmul.f32 %v1009, 0.5
      %v1012 = vmul.f32 %v1010, 0.5
      %v1013 = vmul.f32 %v991, %v1011
      %v1014 = vmul.f32 %v994, %v1012
      %v1015 = vld [vmem:[%s8] sm:$0xff]
      %v1016 = vld [vmem:[%s8 + $0x8] sm:$0xff]
      %v1017 = vadd.f32 %v1013, %v1015
      %v1018 = vadd.f32 %v1014, %v1016
      %1019 = vst.msk [vmem:[%s374] sm:$0xff] %vm786, %v1017
      %1020 = vst.msk [vmem:[%s374 + $0x8] sm:$0xff] %vm786, %v1018
      %p1021 = scmp.lt.s32.totalorder %s24, 1
      %s1022 = scalar_select %p1021, %s24, 1
      %s1023 = smul.addr %s1022, 4
      %s1024 = smul.addr %s1023, 8
      %s1025 = scalar_lea.vmem %s9, %s1024
      %p1026 = scmp.lt.s32.totalorder %s24, 1
      %s1027 = scalar_select %p1026, %s24, 1
      %s1028 = smul.addr %s1027, 2
      %s1029 = smul.addr %s1028, 8
      %s1030 = scalar_lea.vmem %s10, %s1029
      // Predicated region
      $region57: #{whisper_encoder_debug_forward.2} parent=55 // pred_check
        %p1031 = pneg %p236
      $region58: #{whisper_encoder_debug_forward.2} parent=55 // pred_check_branch
        %1033 = sbr.rel (%p1031) target = $region60
      $region59: #{whisper_encoder_debug_forward.2} parent=55 // pred_region
        _
      $region60: #{whisper_encoder_debug_forward.2} parent=55 // pred_fallthru
        _
      // Predicated region
      $region61: #{whisper_encoder_debug_forward.2} parent=55 // pred_check
        %p1034 = pneg %p262
      $region62: #{whisper_encoder_debug_forward.2} parent=55 // pred_check_branch
        %1036 = sbr.rel (%p1034) target = $region64
      $region63: #{whisper_encoder_debug_forward.2} parent=55 // pred_region
        _
      $region64: #{whisper_encoder_debug_forward.2} parent=55 // pred_fallthru
        _
    $region56: #{whisper_encoder_debug_forward.2} parent=5 // pred_fallthru
      _
    %p1037 = scmp.le.s32.totalorder 2, %s19
    // Predicated region
    $region65: #{whisper_encoder_debug_forward.2} parent=5 // pred_check
      %p1038 = pneg %p1037
    $region66: #{whisper_encoder_debug_forward.2} parent=5 // pred_check_branch
      %1040 = sbr.rel (%p1038) target = $region68
    $region67: #{whisper_encoder_debug_forward.2} parent=5 // pred_region
      %s1041 = ssub.s32 %s19, 2
      // Predicated region
      $region69: #{whisper_encoder_debug_forward.2} parent=67 // pred_check
        %p1042 = pneg %p242
      $region70: #{whisper_encoder_debug_forward.2} parent=67 // pred_check_branch
        %1044 = sbr.rel (%p1042) target = $region72
      $region71: #{whisper_encoder_debug_forward.2} parent=67 // pred_region
        %p1045 = scmp.lt.s32.totalorder %s25, 1
        %s1046 = scalar_select %p1045, %s25, 1
        %s1047 = smul.addr %s1046, 4
        %s1048 = smul.addr %s1047, 8
        %s1049 = scalar_lea.vmem %s9, %s1048
      $region72: #{whisper_encoder_debug_forward.2} parent=67 // pred_fallthru
        _
      // Predicated region
      $region73: #{whisper_encoder_debug_forward.2} parent=67 // pred_check
        %p1050 = pneg %p268
      $region74: #{whisper_encoder_debug_forward.2} parent=67 // pred_check_branch
        %1052 = sbr.rel (%p1050) target = $region76
      $region75: #{whisper_encoder_debug_forward.2} parent=67 // pred_region
        %p1053 = scmp.lt.s32.totalorder %s25, 1
        %s1054 = scalar_select %p1053, %s25, 1
        %s1055 = smul.addr %s1054, 2
        %s1056 = smul.addr %s1055, 8
        %s1057 = scalar_lea.vmem %s10, %s1056
      $region76: #{whisper_encoder_debug_forward.2} parent=67 // pred_fallthru
        _
    $region68: #{whisper_encoder_debug_forward.2} parent=5 // pred_fallthru
      _
  $region6: #{whisper_encoder_debug_forward.2} parent=0 // loop_footer
    %s23 = sadd.s32 1, %s19
  $region7: #{whisper_encoder_debug_forward.2} parent=0 // loop_footer_branch
    %18 = sbr.rel target = $region3
  $region8: #{whisper_encoder_debug_forward.2} parent=0 // loop_exit
    _

// kernel: whisper_encoder_debug_forward.3
$region0: #{whisper_encoder_debug_forward.3}
  #allocation0 [shape = 'u32[]', space=smem, size = 0x4, offset = 0x4, fixed_abs, tag = 'smem constant byte address 0x4 - core index']
  #allocation1 [shape = 'u32[144,128]{1,0:T(1,128)}', space=vmem, size = 0x12000, scoped, tag = 'internal scratch']
  %s0 = inlined_call_operand.vmem [shape: f32[2,16,64], index: 0, kind: input, shape index: {}]
  %s1 = inlined_call_operand.vmem [shape: f32[2,1,64], index: 1, kind: input, shape index: {}]
  %s2 = inlined_call_operand.vmem [shape: f32[2,1,64], index: 2, kind: input, shape index: {}]
  %s3 = inlined_call_operand.vmem [shape: bf16[2,64,192], index: 3, kind: input, shape index: {}]
  %s4 = inlined_call_operand.vmem [shape: f32[2,1,192], index: 4, kind: input, shape index: {}]
  %s5 = inlined_call_operand.vmem [shape: bf16[2,64,64], index: 5, kind: input, shape index: {}]
  %s6 = inlined_call_operand.vmem [shape: f32[2,1,64], index: 6, kind: input, shape index: {}]
  %s7 = inlined_call_operand.vmem [shape: f32[2,1,64], index: 7, kind: input, shape index: {}]
  %s8 = inlined_call_operand.vmem [shape: f32[2,1,64], index: 8, kind: input, shape index: {}]
  %s9 = inlined_call_operand.vmem [shape: bf16[2,64,128], index: 9, kind: input, shape index: {}]
  %s10 = inlined_call_operand.vmem [shape: f32[2,1,128], index: 10, kind: input, shape index: {}]
  %s11 = inlined_call_operand.vmem [shape: bf16[2,128,64], index: 11, kind: input, shape index: {}]
  %s12 = inlined_call_operand.vmem [shape: f32[2,1,64], index: 12, kind: input, shape index: {}]
  %s13 = inlined_call_operand.vmem [shape: f32[1,64], index: 13, kind: input, shape index: {}]
  %s14 = inlined_call_operand.vmem [shape: f32[1,64], index: 14, kind: input, shape index: {}]
  %s15 = inlined_call_operand.hbm [shape: f32[2,16,64], index: 15, kind: output, shape index: {}]
  %s16 = sld [smem:[#allocation0]]
  $region93: #{whisper_encoder_debug_forward.3} parent=0
    _
  %s18 = ssub.s32 1, %s16
  %s19 = scalar_select 0, %s18, %s16
  $region1: #{whisper_encoder_debug_forward.3} parent=0
    #allocation2 [shape = 'u8[16384]{0}', space=vmem, size = 0x4000, scoped, tag = 'output window, operand 0']
    #allocation3 [shape = 's32[2]{0}', space=sflag, size = 0x8, scoped, tag = 'scoped memory for whisper_encoder_debug_forward.3']
    %20 = vsyncpa [#allocation3], 0
    %s21 = scalar_lea.sflag [#allocation3], 1
    %22 = vsyncpa %s21, 0
    loop: start=0, step=1, limit=4
    $region2: #{whisper_encoder_debug_forward.3} parent=1 // loop_pre_header
      _
    $region3: #{whisper_encoder_debug_forward.3} parent=1 // loop_header
      %s24 = sphi 0, %s28
      %p25 = scmp.ge.s32.totalorder %s24, 4
      %s34 = sphi 0, %s36
      %s37 = sphi 0, %s34
      %s38 = sphi 0, %s37
      %s54 = sphi 0, %s38
      %s58 = sphi 0, %s58
      %s60 = sphi 0, %s58
      %s61 = sphi 0, %s60
      %s75 = sphi 0, %s61
      %s79 = sphi 0, %s79
      %s81 = sphi 0, %s79
      %s82 = sphi 0, %s81
      %s96 = sphi 0, %s82
      %s100 = sphi 0, %s100
      %s102 = sphi 0, %s100
      %s103 = sphi 0, %s102
      %s117 = sphi 0, %s103
      %s121 = sphi 0, %s121
      %s123 = sphi 0, %s121
      %s124 = sphi 0, %s123
      %s138 = sphi 0, %s124
      %s142 = sphi 0, %s142
      %s144 = sphi 0, %s142
      %s145 = sphi 0, %s144
      %s159 = sphi 0, %s145
      %s163 = sphi 0, %s163
      %s165 = sphi 0, %s163
      %s166 = sphi 0, %s165
      %s180 = sphi 0, %s166
      %s184 = sphi 0, %s184
      %s186 = sphi 0, %s184
      %s187 = sphi 0, %s186
      %s201 = sphi 0, %s187
      %s205 = sphi 0, %s205
      %s207 = sphi 0, %s205
      %s208 = sphi 0, %s207
      %s222 = sphi 0, %s208
      %s226 = sphi 0, %s226
      %s228 = sphi 0, %s226
      %s229 = sphi 0, %s228
      %s243 = sphi 0, %s229
      %s247 = sphi 0, %s247
      %s249 = sphi 0, %s247
      %s250 = sphi 0, %s249
      %s264 = sphi 0, %s250
      %s268 = sphi 0, %s268
      %s270 = sphi 0, %s268
      %s271 = sphi 0, %s270
      %s285 = sphi 0, %s271
      %s289 = sphi 0, %s289
      %s291 = sphi 0, %s289
      %s292 = sphi 0, %s291
      %s306 = sphi 0, %s292
      %s310 = sphi 0, %s310
      %s312 = sphi 0, %s310
      %s313 = sphi 0, %s312
      %s327 = sphi 0, %s313
      %s331 = sphi 0, %s331
      %s333 = sphi 0, %s331
      %s334 = sphi 0, %s333
      %s348 = sphi 0, %s334
      %s354 = sphi 0, %s356
      %s357 = sphi 0, %s354
      %s358 = sphi 0, %s357
      %s374 = sphi 0, %s358
    $region4: #{whisper_encoder_debug_forward.3} parent=1 // loop_header_branch
      %27 = sbr.rel (%p25) target = $region8
    $region5: #{whisper_encoder_debug_forward.3} parent=1 // loop_body
      %s29 = ssub.s32 %s24, 1
      %s30 = ssub.s32 %s24, 2
      %s31 = sadd.s32 %s24, 1
      %s32 = ssub.s32 %s24, %s31
      %p33 = scmp.eq.s32.totalorder %s32, 0
      %s35 = sadd.s32 %s34, 1
      %s36 = scalar_select %p33, %s34, %s35
      %p39 = pneg %p33
      %p40 = scmp.eq.s32.totalorder %s24, 1
      %p41 = por %p39, %p40
      %p42 = scmp.ne.s32.totalorder %s34, %s37
      %p43 = scmp.eq.s32.totalorder %s24, 0
      %p44 = por %p42, %p43
      %p45 = scmp.ne.s32.totalorder %s34, %s37
      %p46 = scmp.eq.s32.totalorder %s29, 1
      %p47 = por %p45, %p46
      %p48 = scmp.ne.s32.totalorder %s37, %s38
      %p49 = scmp.eq.s32.totalorder %s29, 0
      %p50 = por %p48, %p49
      %p51 = scmp.ne.s32.totalorder %s37, %s38
      %p52 = scmp.eq.s32.totalorder %s30, 1
      %p53 = por %p51, %p52
      %p55 = scmp.ne.s32.totalorder %s38, %s54
      %p56 = scmp.eq.s32.totalorder %s30, 0
      %p57 = por %p55, %p56
      %s59 = sadd.s32 %s58, 1
      %p62 = scmp.eq.s32.totalorder %s24, 1
      %p63 = scmp.ne.s32.totalorder %s58, %s60
      %p64 = scmp.eq.s32.totalorder %s24, 0
      %p65 = por %p63, %p64
      %p66 = scmp.ne.s32.totalorder %s58, %s60
      %p67 = scmp.eq.s32.totalorder %s29, 1
      %p68 = por %p66, %p67
      %p69 = scmp.ne.s32.totalorder %s60, %s61
      %p70 = scmp.eq.s32.totalorder %s29, 0
      %p71 = por %p69, %p70
      %p72 = scmp.ne.s32.totalorder %s60, %s61
      %p73 = scmp.eq.s32.totalorder %s30, 1
      %p74 = por %p72, %p73
      %p76 = scmp.ne.s32.totalorder %s61, %s75
      %p77 = scmp.eq.s32.totalorder %s30, 0
      %p78 = por %p76, %p77
      %s80 = sadd.s32 %s79, 1
      %p83 = scmp.eq.s32.totalorder %s24, 1
      %p84 = scmp.ne.s32.totalorder %s79, %s81
      %p85 = scmp.eq.s32.totalorder %s24, 0
      %p86 = por %p84, %p85
      %p87 = scmp.ne.s32.totalorder %s79, %s81
      %p88 = scmp.eq.s32.totalorder %s29, 1
      %p89 = por %p87, %p88
      %p90 = scmp.ne.s32.totalorder %s81, %s82
      %p91 = scmp.eq.s32.totalorder %s29, 0
      %p92 = por %p90, %p91
      %p93 = scmp.ne.s32.totalorder %s81, %s82
      %p94 = scmp.eq.s32.totalorder %s30, 1
      %p95 = por %p93, %p94
      %p97 = scmp.ne.s32.totalorder %s82, %s96
      %p98 = scmp.eq.s32.totalorder %s30, 0
      %p99 = por %p97, %p98
      %s101 = sadd.s32 %s100, 1
      %p104 = scmp.eq.s32.totalorder %s24, 1
      %p105 = scmp.ne.s32.totalorder %s100, %s102
      %p106 = scmp.eq.s32.totalorder %s24, 0
      %p107 = por %p105, %p106
      %p108 = scmp.ne.s32.totalorder %s100, %s102
      %p109 = scmp.eq.s32.totalorder %s29, 1
      %p110 = por %p108, %p109
      %p111 = scmp.ne.s32.totalorder %s102, %s103
      %p112 = scmp.eq.s32.totalorder %s29, 0
      %p113 = por %p111, %p112
      %p114 = scmp.ne.s32.totalorder %s102, %s103
      %p115 = scmp.eq.s32.totalorder %s30, 1
      %p116 = por %p114, %p115
      %p118 = scmp.ne.s32.totalorder %s103, %s117
      %p119 = scmp.eq.s32.totalorder %s30, 0
      %p120 = por %p118, %p119
      %s122 = sadd.s32 %s121, 1
      %p125 = scmp.eq.s32.totalorder %s24, 1
      %p126 = scmp.ne.s32.totalorder %s121, %s123
      %p127 = scmp.eq.s32.totalorder %s24, 0
      %p128 = por %p126, %p127
      %p129 = scmp.ne.s32.totalorder %s121, %s123
      %p130 = scmp.eq.s32.totalorder %s29, 1
      %p131 = por %p129, %p130
      %p132 = scmp.ne.s32.totalorder %s123, %s124
      %p133 = scmp.eq.s32.totalorder %s29, 0
      %p134 = por %p132, %p133
      %p135 = scmp.ne.s32.totalorder %s123, %s124
      %p136 = scmp.eq.s32.totalorder %s30, 1
      %p137 = por %p135, %p136
      %p139 = scmp.ne.s32.totalorder %s124, %s138
      %p140 = scmp.eq.s32.totalorder %s30, 0
      %p141 = por %p139, %p140
      %s143 = sadd.s32 %s142, 1
      %p146 = scmp.eq.s32.totalorder %s24, 1
      %p147 = scmp.ne.s32.totalorder %s142, %s144
      %p148 = scmp.eq.s32.totalorder %s24, 0
      %p149 = por %p147, %p148
      %p150 = scmp.ne.s32.totalorder %s142, %s144
      %p151 = scmp.eq.s32.totalorder %s29, 1
      %p152 = por %p150, %p151
      %p153 = scmp.ne.s32.totalorder %s144, %s145
      %p154 = scmp.eq.s32.totalorder %s29, 0
      %p155 = por %p153, %p154
      %p156 = scmp.ne.s32.totalorder %s144, %s145
      %p157 = scmp.eq.s32.totalorder %s30, 1
      %p158 = por %p156, %p157
      %p160 = scmp.ne.s32.totalorder %s145, %s159
      %p161 = scmp.eq.s32.totalorder %s30, 0
      %p162 = por %p160, %p161
      %s164 = sadd.s32 %s163, 1
      %p167 = scmp.eq.s32.totalorder %s24, 1
      %p168 = scmp.ne.s32.totalorder %s163, %s165
      %p169 = scmp.eq.s32.totalorder %s24, 0
      %p170 = por %p168, %p169
      %p171 = scmp.ne.s32.totalorder %s163, %s165
      %p172 = scmp.eq.s32.totalorder %s29, 1
      %p173 = por %p171, %p172
      %p174 = scmp.ne.s32.totalorder %s165, %s166
      %p175 = scmp.eq.s32.totalorder %s29, 0
      %p176 = por %p174, %p175
      %p177 = scmp.ne.s32.totalorder %s165, %s166
      %p178 = scmp.eq.s32.totalorder %s30, 1
      %p179 = por %p177, %p178
      %p181 = scmp.ne.s32.totalorder %s166, %s180
      %p182 = scmp.eq.s32.totalorder %s30, 0
      %p183 = por %p181, %p182
      %s185 = sadd.s32 %s184, 1
      %p188 = scmp.eq.s32.totalorder %s24, 1
      %p189 = scmp.ne.s32.totalorder %s184, %s186
      %p190 = scmp.eq.s32.totalorder %s24, 0
      %p191 = por %p189, %p190
      %p192 = scmp.ne.s32.totalorder %s184, %s186
      %p193 = scmp.eq.s32.totalorder %s29, 1
      %p194 = por %p192, %p193
      %p195 = scmp.ne.s32.totalorder %s186, %s187
      %p196 = scmp.eq.s32.totalorder %s29, 0
      %p197 = por %p195, %p196
      %p198 = scmp.ne.s32.totalorder %s186, %s187
      %p199 = scmp.eq.s32.totalorder %s30, 1
      %p200 = por %p198, %p199
      %p202 = scmp.ne.s32.totalorder %s187, %s201
      %p203 = scmp.eq.s32.totalorder %s30, 0
      %p204 = por %p202, %p203
      %s206 = sadd.s32 %s205, 1
      %p209 = scmp.eq.s32.totalorder %s24, 1
      %p210 = scmp.ne.s32.totalorder %s205, %s207
      %p211 = scmp.eq.s32.totalorder %s24, 0
      %p212 = por %p210, %p211
      %p213 = scmp.ne.s32.totalorder %s205, %s207
      %p214 = scmp.eq.s32.totalorder %s29, 1
      %p215 = por %p213, %p214
      %p216 = scmp.ne.s32.totalorder %s207, %s208
      %p217 = scmp.eq.s32.totalorder %s29, 0
      %p218 = por %p216, %p217
      %p219 = scmp.ne.s32.totalorder %s207, %s208
      %p220 = scmp.eq.s32.totalorder %s30, 1
      %p221 = por %p219, %p220
      %p223 = scmp.ne.s32.totalorder %s208, %s222
      %p224 = scmp.eq.s32.totalorder %s30, 0
      %p225 = por %p223, %p224
      %s227 = sadd.s32 %s226, 1
      %p230 = scmp.eq.s32.totalorder %s24, 1
      %p231 = scmp.ne.s32.totalorder %s226, %s228
      %p232 = scmp.eq.s32.totalorder %s24, 0
      %p233 = por %p231, %p232
      %p234 = scmp.ne.s32.totalorder %s226, %s228
      %p235 = scmp.eq.s32.totalorder %s29, 1
      %p236 = por %p234, %p235
      %p237 = scmp.ne.s32.totalorder %s228, %s229
      %p238 = scmp.eq.s32.totalorder %s29, 0
      %p239 = por %p237, %p238
      %p240 = scmp.ne.s32.totalorder %s228, %s229
      %p241 = scmp.eq.s32.totalorder %s30, 1
      %p242 = por %p240, %p241
      %p244 = scmp.ne.s32.totalorder %s229, %s243
      %p245 = scmp.eq.s32.totalorder %s30, 0
      %p246 = por %p244, %p245
      %s248 = sadd.s32 %s247, 1
      %p251 = scmp.eq.s32.totalorder %s24, 1
      %p252 = scmp.ne.s32.totalorder %s247, %s249
      %p253 = scmp.eq.s32.totalorder %s24, 0
      %p254 = por %p252, %p253
      %p255 = scmp.ne.s32.totalorder %s247, %s249
      %p256 = scmp.eq.s32.totalorder %s29, 1
      %p257 = por %p255, %p256
      %p258 = scmp.ne.s32.totalorder %s249, %s250
      %p259 = scmp.eq.s32.totalorder %s29, 0
      %p260 = por %p258, %p259
      %p261 = scmp.ne.s32.totalorder %s249, %s250
      %p262 = scmp.eq.s32.totalorder %s30, 1
      %p263 = por %p261, %p262
      %p265 = scmp.ne.s32.totalorder %s250, %s264
      %p266 = scmp.eq.s32.totalorder %s30, 0
      %p267 = por %p265, %p266
      %s269 = sadd.s32 %s268, 1
      %p272 = scmp.eq.s32.totalorder %s24, 1
      %p273 = scmp.ne.s32.totalorder %s268, %s270
      %p274 = scmp.eq.s32.totalorder %s24, 0
      %p275 = por %p273, %p274
      %p276 = scmp.ne.s32.totalorder %s268, %s270
      %p277 = scmp.eq.s32.totalorder %s29, 1
      %p278 = por %p276, %p277
      %p279 = scmp.ne.s32.totalorder %s270, %s271
      %p280 = scmp.eq.s32.totalorder %s29, 0
      %p281 = por %p279, %p280
      %p282 = scmp.ne.s32.totalorder %s270, %s271
      %p283 = scmp.eq.s32.totalorder %s30, 1
      %p284 = por %p282, %p283
      %p286 = scmp.ne.s32.totalorder %s271, %s285
      %p287 = scmp.eq.s32.totalorder %s30, 0
      %p288 = por %p286, %p287
      %s290 = sadd.s32 %s289, 1
      %p293 = scmp.eq.s32.totalorder %s24, 1
      %p294 = scmp.ne.s32.totalorder %s289, %s291
      %p295 = scmp.eq.s32.totalorder %s24, 0
      %p296 = por %p294, %p295
      %p297 = scmp.ne.s32.totalorder %s289, %s291
      %p298 = scmp.eq.s32.totalorder %s29, 1
      %p299 = por %p297, %p298
      %p300 = scmp.ne.s32.totalorder %s291, %s292
      %p301 = scmp.eq.s32.totalorder %s29, 0
      %p302 = por %p300, %p301
      %p303 = scmp.ne.s32.totalorder %s291, %s292
      %p304 = scmp.eq.s32.totalorder %s30, 1
      %p305 = por %p303, %p304
      %p307 = scmp.ne.s32.totalorder %s292, %s306
      %p308 = scmp.eq.s32.totalorder %s30, 0
      %p309 = por %p307, %p308
      %s311 = sadd.s32 %s310, 1
      %p314 = scmp.eq.s32.totalorder %s24, 1
      %p315 = scmp.ne.s32.totalorder %s310, %s312
      %p316 = scmp.eq.s32.totalorder %s24, 0
      %p317 = por %p315, %p316
      %p318 = scmp.ne.s32.totalorder %s310, %s312
      %p319 = scmp.eq.s32.totalorder %s29, 1
      %p320 = por %p318, %p319
      %p321 = scmp.ne.s32.totalorder %s312, %s313
      %p322 = scmp.eq.s32.totalorder %s29, 0
      %p323 = por %p321, %p322
      %p324 = scmp.ne.s32.totalorder %s312, %s313
      %p325 = scmp.eq.s32.totalorder %s30, 1
      %p326 = por %p324, %p325
      %p328 = scmp.ne.s32.totalorder %s313, %s327
      %p329 = scmp.eq.s32.totalorder %s30, 0
      %p330 = por %p328, %p329
      %s332 = sadd.s32 %s331, 1
      %p335 = scmp.eq.s32.totalorder %s24, 1
      %p336 = scmp.ne.s32.totalorder %s331, %s333
      %p337 = scmp.eq.s32.totalorder %s24, 0
      %p338 = por %p336, %p337
      %p339 = scmp.ne.s32.totalorder %s331, %s333
      %p340 = scmp.eq.s32.totalorder %s29, 1
      %p341 = por %p339, %p340
      %p342 = scmp.ne.s32.totalorder %s333, %s334
      %p343 = scmp.eq.s32.totalorder %s29, 0
      %p344 = por %p342, %p343
      %p345 = scmp.ne.s32.totalorder %s333, %s334
      %p346 = scmp.eq.s32.totalorder %s30, 1
      %p347 = por %p345, %p346
      %p349 = scmp.ne.s32.totalorder %s334, %s348
      %p350 = scmp.eq.s32.totalorder %s30, 0
      %p351 = por %p349, %p350
      %s352 = ssub.s32 %s24, %s31
      %p353 = scmp.eq.s32.totalorder %s352, 0
      %s355 = sadd.s32 %s354, 1
      %s356 = scalar_select %p353, %s354, %s355
      %p359 = pneg %p353
      %p360 = scmp.eq.s32.totalorder %s24, 1
      %p361 = por %p359, %p360
      %p362 = scmp.ne.s32.totalorder %s354, %s357
      %p363 = scmp.eq.s32.totalorder %s24, 0
      %p364 = por %p362, %p363
      %p365 = scmp.ne.s32.totalorder %s354, %s357
      %p366 = scmp.eq.s32.totalorder %s29, 1
      %p367 = por %p365, %p366
      %p368 = scmp.ne.s32.totalorder %s357, %s358
      %p369 = scmp.eq.s32.totalorder %s29, 0
      %p370 = por %p368, %p369
      %p371 = scmp.ne.s32.totalorder %s357, %s358
      %p372 = scmp.eq.s32.totalorder %s30, 1
      %p373 = por %p371, %p372
      %p375 = scmp.ne.s32.totalorder %s358, %s374
      %p376 = scmp.eq.s32.totalorder %s30, 0
      %p377 = por %p375, %p376
      %p378 = scmp.le.s32.totalorder 1, %s24
      %p379 = scmp.lt.s32.totalorder %s24, 3
      %p380 = pnand %p378, %p379
      %p381 = pneg %p380
      // Predicated region
      $region9: #{whisper_encoder_debug_forward.3} parent=5 // pred_check
        _
      $region10: #{whisper_encoder_debug_forward.3} parent=5 // pred_check_branch
        %383 = sbr.rel (%p380) target = $region12
      $region11: #{whisper_encoder_debug_forward.3} parent=5 // pred_region
        %s384 = ssub.s32 %s24, 1
        // Predicated region
        $region13: #{whisper_encoder_debug_forward.3} parent=11 // pred_check
          %p385 = pneg %p71
        $region14: #{whisper_encoder_debug_forward.3} parent=11 // pred_check_branch
          %387 = sbr.rel (%p385) target = $region16
        $region15: #{whisper_encoder_debug_forward.3} parent=11 // pred_region
          _
        $region16: #{whisper_encoder_debug_forward.3} parent=11 // pred_fallthru
          _
        // Predicated region
        $region17: #{whisper_encoder_debug_forward.3} parent=11 // pred_check
          %p388 = pneg %p92
        $region18: #{whisper_encoder_debug_forward.3} parent=11 // pred_check_branch
          %390 = sbr.rel (%p388) target = $region20
        $region19: #{whisper_encoder_debug_forward.3} parent=11 // pred_region
          _
        $region20: #{whisper_encoder_debug_forward.3} parent=11 // pred_fallthru
          _
        // Predicated region
        $region21: #{whisper_encoder_debug_forward.3} parent=11 // pred_check
          %p391 = pneg %p113
        $region22: #{whisper_encoder_debug_forward.3} parent=11 // pred_check_branch
          %393 = sbr.rel (%p391) target = $region24
        $region23: #{whisper_encoder_debug_forward.3} parent=11 // pred_region
          _
        $region24: #{whisper_encoder_debug_forward.3} parent=11 // pred_fallthru
          _
        // Predicated region
        $region25: #{whisper_encoder_debug_forward.3} parent=11 // pred_check
          %p394 = pneg %p134
        $region26: #{whisper_encoder_debug_forward.3} parent=11 // pred_check_branch
          %396 = sbr.rel (%p394) target = $region28
        $region27: #{whisper_encoder_debug_forward.3} parent=11 // pred_region
          _
        $region28: #{whisper_encoder_debug_forward.3} parent=11 // pred_fallthru
          _
        // Predicated region
        $region29: #{whisper_encoder_debug_forward.3} parent=11 // pred_check
          %p397 = pneg %p155
        $region30: #{whisper_encoder_debug_forward.3} parent=11 // pred_check_branch
          %399 = sbr.rel (%p397) target = $region32
        $region31: #{whisper_encoder_debug_forward.3} parent=11 // pred_region
          _
        $region32: #{whisper_encoder_debug_forward.3} parent=11 // pred_fallthru
          _
        // Predicated region
        $region33: #{whisper_encoder_debug_forward.3} parent=11 // pred_check
          %p400 = pneg %p176
        $region34: #{whisper_encoder_debug_forward.3} parent=11 // pred_check_branch
          %402 = sbr.rel (%p400) target = $region36
        $region35: #{whisper_encoder_debug_forward.3} parent=11 // pred_region
          _
        $region36: #{whisper_encoder_debug_forward.3} parent=11 // pred_fallthru
          _
        // Predicated region
        $region37: #{whisper_encoder_debug_forward.3} parent=11 // pred_check
          %p403 = pneg %p197
        $region38: #{whisper_encoder_debug_forward.3} parent=11 // pred_check_branch
          %405 = sbr.rel (%p403) target = $region40
        $region39: #{whisper_encoder_debug_forward.3} parent=11 // pred_region
          _
        $region40: #{whisper_encoder_debug_forward.3} parent=11 // pred_fallthru
          _
        // Predicated region
        $region41: #{whisper_encoder_debug_forward.3} parent=11 // pred_check
          %p406 = pneg %p218
        $region42: #{whisper_encoder_debug_forward.3} parent=11 // pred_check_branch
          %408 = sbr.rel (%p406) target = $region44
        $region43: #{whisper_encoder_debug_forward.3} parent=11 // pred_region
          _
        $region44: #{whisper_encoder_debug_forward.3} parent=11 // pred_fallthru
          _
        // Predicated region
        $region45: #{whisper_encoder_debug_forward.3} parent=11 // pred_check
          %p409 = pneg %p239
        $region46: #{whisper_encoder_debug_forward.3} parent=11 // pred_check_branch
          %411 = sbr.rel (%p409) target = $region48
        $region47: #{whisper_encoder_debug_forward.3} parent=11 // pred_region
          _
        $region48: #{whisper_encoder_debug_forward.3} parent=11 // pred_fallthru
          _
        // Predicated region
        $region49: #{whisper_encoder_debug_forward.3} parent=11 // pred_check
          %p412 = pneg %p260
        $region50: #{whisper_encoder_debug_forward.3} parent=11 // pred_check_branch
          %414 = sbr.rel (%p412) target = $region52
        $region51: #{whisper_encoder_debug_forward.3} parent=11 // pred_region
          _
        $region52: #{whisper_encoder_debug_forward.3} parent=11 // pred_fallthru
          _
        // Predicated region
        $region53: #{whisper_encoder_debug_forward.3} parent=11 // pred_check
          %p415 = pneg %p281
        $region54: #{whisper_encoder_debug_forward.3} parent=11 // pred_check_branch
          %417 = sbr.rel (%p415) target = $region56
        $region55: #{whisper_encoder_debug_forward.3} parent=11 // pred_region
          _
        $region56: #{whisper_encoder_debug_forward.3} parent=11 // pred_fallthru
          _
        // Predicated region
        $region57: #{whisper_encoder_debug_forward.3} parent=11 // pred_check
          %p418 = pneg %p302
        $region58: #{whisper_encoder_debug_forward.3} parent=11 // pred_check_branch
          %420 = sbr.rel (%p418) target = $region60
        $region59: #{whisper_encoder_debug_forward.3} parent=11 // pred_region
          _
        $region60: #{whisper_encoder_debug_forward.3} parent=11 // pred_fallthru
          _
        // Predicated region
        $region61: #{whisper_encoder_debug_forward.3} parent=11 // pred_check
          %p421 = pneg %p323
        $region62: #{whisper_encoder_debug_forward.3} parent=11 // pred_check_branch
          %423 = sbr.rel (%p421) target = $region64
        $region63: #{whisper_encoder_debug_forward.3} parent=11 // pred_region
          _
        $region64: #{whisper_encoder_debug_forward.3} parent=11 // pred_fallthru
          _
        // Predicated region
        $region65: #{whisper_encoder_debug_forward.3} parent=11 // pred_check
          %p424 = pneg %p344
        $region66: #{whisper_encoder_debug_forward.3} parent=11 // pred_check_branch
          %426 = sbr.rel (%p424) target = $region68
        $region67: #{whisper_encoder_debug_forward.3} parent=11 // pred_region
          _
        $region68: #{whisper_encoder_debug_forward.3} parent=11 // pred_fallthru
          _
      $region12: #{whisper_encoder_debug_forward.3} parent=5 // pred_fallthru
        _
      %p427 = scmp.lt.s32.totalorder %s24, 2
      // Predicated region
      $region69: #{whisper_encoder_debug_forward.3} parent=5 // pred_check
        %p428 = pneg %p427
      $region70: #{whisper_encoder_debug_forward.3} parent=5 // pred_check_branch
        %430 = sbr.rel (%p428) target = $region72
      $region71: #{whisper_encoder_debug_forward.3} parent=5 // pred_region
        // Predicated region
        $region73: #{whisper_encoder_debug_forward.3} parent=71 // pred_check
          %p431 = pneg %p44
        $region74: #{whisper_encoder_debug_forward.3} parent=71 // pred_check_branch
          %433 = sbr.rel (%p431) target = $region76
        $region75: #{whisper_encoder_debug_forward.3} parent=71 // pred_region
          %p434 = scmp.lt.s32.totalorder %s24, 1
          %s435 = scalar_select %p434, %s24, 1
          %s436 = smul.addr %s435, 2
          %s437 = smul.addr %s436, 8
          %s438 = scalar_lea.vmem %s0, %s437
        $region76: #{whisper_encoder_debug_forward.3} parent=71 // pred_fallthru
          _
      $region72: #{whisper_encoder_debug_forward.3} parent=5 // pred_fallthru
        _
      %p439 = scmp.le.s32.totalorder 1, %s24
      %p440 = scmp.lt.s32.totalorder %s24, 3
      %p441 = pnand %p439, %p440
      %p442 = pneg %p441
      // Predicated region
      $region77: #{whisper_encoder_debug_forward.3} parent=5 // pred_check
        _
      $region78: #{whisper_encoder_debug_forward.3} parent=5 // pred_check_branch
        %444 = sbr.rel (%p441) target = $region80
      $region79: #{whisper_encoder_debug_forward.3} parent=5 // pred_region
        %s445 = ssub.s32 %s24, 1
        %p446 = scmp.lt.s32.totalorder %s29, 1
        %s447 = scalar_select %p446, %s29, 1
        %s448 = smul.addr %s447, 2
        %s449 = smul.addr %s448, 8
        %s450 = scalar_lea.vmem %s0, %s449
        %p451 = pneg %p50
        %p452 = pneg %p47
        %p453 = pneg %p71
        %p454 = pneg %p68
        %p455 = pneg %p92
        %p456 = pneg %p89
        %p457 = pneg %p113
        %p458 = pneg %p110
        %p459 = pneg %p134
        %p460 = pneg %p131
        %p461 = pneg %p155
        %p462 = pneg %p152
        %p463 = pneg %p176
        %p464 = pneg %p173
        %p465 = pneg %p197
        %p466 = pneg %p194
        %p467 = pneg %p218
        %p468 = pneg %p215
        %p469 = pneg %p239
        %p470 = pneg %p236
        %p471 = pneg %p260
        %p472 = pneg %p257
        %p473 = pneg %p281
        %p474 = pneg %p278
        %p475 = pneg %p302
        %p476 = pneg %p299
        %p477 = pneg %p323
        %p478 = pneg %p320
        %p479 = pneg %p344
        %p480 = pneg %p341
        %p481 = pneg %p370
        %p482 = pneg %p367
        %s483 = sand.u32 %s357, 1
        %s484 = scalar_lea.sflag [#allocation3], %s483
        %s485 = sand.u32 %s357, 1
        %s486 = smul.addr %s485, 16
        %s487 = scalar_lea.vmem [#allocation2], %s486
        %p488 = scmp.lt.s32.totalorder %s29, 1
        %s489 = scalar_select %p488, %s29, 1
        %s490 = smul.addr %s489, 2
        %s491 = smul.addr %s490, 8
        %s492 = scalar_lea.vmem %s0, %s491
        %v494 = vld [vmem:[%s492] sm:$0xff]
        %v495 = vld [vmem:[%s492 + $0x8] sm:$0xff]
        %v496 = vld [vmem:[%s1] sm:$0x1]
        %v497 = vld [vmem:[%s2] sm:$0x1]
        %vm498 = vcmask 523264
        %v499 = vsel %vm498, %v494, 0.0
        %500 = vadd.xlane.f32.xlu0 %v499
        %v501 = vpop.xlane.xlu0 %500
        %v502 = vsel %vm498, %v495, 0.0
        %503 = vadd.xlane.f32.xlu0 %v502
        %v504 = vpop.xlane.xlu0 %503
        %v505 = vrcp.pop 64.0
        %v506 = vmul.f32 %v501, %v505
        %v507 = vmul.f32 %v504, %v505
        %v508 = vsub.f32 %v494, %v506
        %v509 = vsub.f32 %v495, %v507
        %v510 = vmul.f32 %v508, %v508
        %v511 = vmul.f32 %v509, %v509
        %v512 = vsel %vm498, %v510, 0.0
        %513 = vadd.xlane.f32.xlu0 %v512
        %v514 = vpop.xlane.xlu0 %513
        %v515 = vsel %vm498, %v511, 0.0
        %516 = vadd.xlane.f32.xlu0 %v515
        %v517 = vpop.xlane.xlu0 %516
        %v518 = vmul.f32 %v514, %v505
        %v519 = vmul.f32 %v517, %v505
        %v520 = vadd.f32 %v518, 1e-05
        %v521 = vadd.f32 %v519, 1e-05
        %v522 = vrsqrt.pop %v520
        %v523 = vrsqrt.pop %v521
        %v524 = vmul.f32 %v508, %v522
        %v525 = vmul.f32 %v509, %v523
        %v527 = vlaneseq
        %v528 = vshrl.u32 %v527, 7
        %v529 = vsub.s32 0, %v528
        %v530 = vrot.slane %v496, %v529
        %v532 = vmul.f32 %v524, %v530
        %v533 = vmul.f32 %v525, %v530
        %v535 = vlaneseq
        %v536 = vshrl.u32 %v535, 7
        %v537 = vsub.s32 0, %v536
        %v538 = vrot.slane %v497, %v537
        %v540 = vadd.f32 %v532, %v538
        %v541 = vadd.f32 %v533, %v538
        %v542 = vpack.c.bf16 %v541, %v540
        %v543 = vld [vmem:[%s3] sm:$0xff]
        %v544 = vld [vmem:[%s3 + $0x8] sm:$0xff]
        %v545 = vld [vmem:[%s3 + $0x10] sm:$0xff]
        %v546 = vld [vmem:[%s3 + $0x18] sm:$0xff]
        %v547 = vld [vmem:[%s3 + $0x20] sm:$0xff]
        %v548 = vld [vmem:[%s3 + $0x28] sm:$0xff]
        %v549 = vld [vmem:[%s3 + $0x30] sm:$0xff]
        %v550 = vld [vmem:[%s3 + $0x38] sm:$0xff]
        %v551 = vld [vmem:[%s4] sm:$0x3]
        %v553 = vlaneseq
        %v554 = vshrl.u32 %v553, 7
        %v555 = vsub.s32 0, %v554
        %v556 = vrot.slane %v551, %v555
        %v557 = vlaneseq
        %v558 = vshrl.u32 %v557, 7
        %v559 = vsub.s32 1, %v558
        %v560 = vrot.slane %v551, %v559
        %v571 = vunpack.c.l.b16 %v543
        %v572 = vunpack.c.h.b16 %v543
        %v573 = vunpack.c.l.b16 %v544
        %v574 = vunpack.c.h.b16 %v544
        %v575 = vunpack.c.l.b16 %v545
        %v576 = vunpack.c.h.b16 %v545
        %v577 = vunpack.c.l.b16 %v546
        %v578 = vunpack.c.h.b16 %v546
        %v579 = vunpack.c.l.b16 %v547
        %v580 = vunpack.c.h.b16 %v547
        %v581 = vunpack.c.l.b16 %v548
        %v582 = vunpack.c.h.b16 %v548
        %v583 = vunpack.c.l.b16 %v549
        %v584 = vunpack.c.h.b16 %v549
        %v585 = vunpack.c.l.b16 %v550
        %v586 = vunpack.c.h.b16 %v550
        %v587 = vpack.c.b16 %v573, %v571
        %v588 = vpack.c.b16 %v574, %v572
        %v589 = vpack.c.b16 %v577, %v575
        %v590 = vpack.c.b16 %v578, %v576
        %v591 = vpack.c.b16 %v581, %v579
        %v592 = vpack.c.b16 %v582, %v580
        %v593 = vpack.c.b16 %v585, %v583
        %v594 = vpack.c.b16 %v586, %v584
        %v604 = vsel %vm498, %v542, 0
        %606 = vmatprep.subr.bf16.mxu0 %v588
        %607 = vmatpush1.bf16.msra.mxu0 %v587
        %608 = vmatprep.subr.bf16.mxu0 %v590
        %609 = vmatpush1.bf16.msra.mxu0 %v589
        %610 = vmatprep.subr.bf16.mxu0 %v592
        %611 = vmatpush1.bf16.msra.mxu0 %v591
        %612 = vmatprep.subr.bf16.mxu0 %v594
        %613 = vmatpush1.bf16.msra.mxu0 %v593
        %614 = vmatprep.subr.bf16.mxu0 0
        %615 = vmatpush1.bf16.msra.mxu0 0
        %616 = vmatprep.subr.bf16.mxu0 0
        %617 = vmatpush1.bf16.msra.mxu0 0
        %618 = vmatprep.subr.bf16.mxu0 0
        %619 = vmatpush1.bf16.msra.mxu0 0
        %620 = vmatprep.subr.bf16.mxu0 0
        %621 = vmatpush1.bf16.msra.mxu0 0
        %622 = vmatprep.subr.bf16.mxu0 0
        %623 = vmatpush1.bf16.msra.mxu0 0
        %624 = vmatprep.subr.bf16.mxu0 0
        %625 = vmatpush1.bf16.msra.mxu0 0
        %626 = vmatprep.subr.bf16.mxu0 0
        %627 = vmatpush1.bf16.msra.mxu0 0
        %628 = vmatprep.subr.bf16.mxu0 0
        %629 = vmatpush1.bf16.msra.mxu0 0
        %630 = vmatprep.subr.bf16.mxu0 0
        %631 = vmatpush1.bf16.msra.mxu0 0
        %632 = vmatprep.subr.bf16.mxu0 0
        %633 = vmatpush1.bf16.msra.mxu0 0
        %634 = vmatprep.subr.bf16.mxu0 0
        %635 = vmatpush1.bf16.msra.mxu0 0
        %636 = vmatprep.subr.bf16.mxu0 0
        %637 = vmatpush1.bf16.msra.mxu0 0
        %638 = vmatprep.mubr.bf16.mxu0 0
        %639 = vmatmul.mubr.bf16.gmra.mrb[0].mxu0 %v604
        %v640 = vpop.f32.mrb[0].mxu0
        %v641 = vadd.f32 %v556, %v640
        %v642 = vpop.f32.mrb[0].mxu0
        %v643 = vadd.f32 %v560, %v642
        %v644 = vpop.f32.mrb[0].mxu0
        %v645 = vadd.f32 %v556, %v644
        %v646 = vpop.f32.mrb[0].mxu0
        %v647 = vadd.f32 %v560, %v646
        %648 = vdwg.mxu0
        %v649 = vmul.f32 %v641, 0.25
        %v650 = vmul.f32 %v645, 0.25
        %v651 = vpack.c.bf16 %v650, %v649
        %v652 = vpack.c.bf16 %v645, %v641
        %v653 = vpack.c.bf16 %v647, %v643
        %655 = vrot.lane.b32.xlu0 %v652, 64
        %v656 = vpop.permute.xlu0 %655
        %vm657 = vcmask 130048
        %v659 = vsel %vm657, %v651, 0
        %v662 = vsel %vm657, %v656, 0
        %664 = vmatprep.subr.bf16.mxu0 0
        %665 = vmatpush1.bf16.xpose.msra.mxu0 %v662
        %666 = vmatprep.subr.bf16.mxu0 0
        %667 = vmatpush1.bf16.xpose.msra.mxu0 0
        %668 = vmatprep.subr.bf16.mxu0 0
        %669 = vmatpush1.bf16.xpose.msra.mxu0 0
        %670 = vmatprep.subr.bf16.mxu0 0
        %671 = vmatpush1.bf16.xpose.msra.mxu0 0
        %672 = vmatprep.subr.bf16.mxu0 0
        %673 = vmatpush1.bf16.xpose.msra.mxu0 0
        %674 = vmatprep.subr.bf16.mxu0 0
        %675 = vmatpush1.bf16.xpose.msra.mxu0 0
        %676 = vmatprep.subr.bf16.mxu0 0
        %677 = vmatpush1.bf16.xpose.msra.mxu0 0
        %678 = vmatprep.subr.bf16.mxu0 0
        %679 = vmatpush1.bf16.xpose.msra.mxu0 0
        %680 = vmatprep.subr.bf16.mxu0 0
        %681 = vmatpush1.bf16.xpose.msra.mxu0 0
        %682 = vmatprep.subr.bf16.mxu0 0
        %683 = vmatpush1.bf16.xpose.msra.mxu0 0
        %684 = vmatprep.subr.bf16.mxu0 0
        %685 = vmatpush1.bf16.xpose.msra.mxu0 0
        %686 = vmatprep.subr.bf16.mxu0 0
        %687 = vmatpush1.bf16.xpose.msra.mxu0 0
        %688 = vmatprep.subr.bf16.mxu0 0
        %689 = vmatpush1.bf16.xpose.msra.mxu0 0
        %690 = vmatprep.subr.bf16.mxu0 0
        %691 = vmatpush1.bf16.xpose.msra.mxu0 0
        %692 = vmatprep.subr.bf16.mxu0 0
        %693 = vmatpush1.bf16.xpose.msra.mxu0 0
        %694 = vmatprep.subr.bf16.mxu0 0
        %695 = vmatpush1.bf16.xpose.msra.mxu0 0
        %696 = vmatprep.mubr.bf16.mxu0 0
        %697 = vmatmul.mubr.bf16.gmra.mrb[0].mxu0 %v659
        %v698 = vpop.f32.mrb[0].mxu0
        %v699 = vadd.f32 0.0, %v698
        %v700 = vpop.f32.mrb[0].mxu0
        %v701 = vpop.f32.mrb[0].mxu0
        %v702 = vadd.f32 0.0, %v701
        %v703 = vpop.f32.mrb[0].mxu0
        %704 = vdwg.mxu0
        %v705 = vsel %vm657, %v699, -inf
        %706 = vmax.xlane.f32.xlu0 %v705
        %v707 = vpop.xlane.xlu0 %706
        %v708 = vsel %vm657, %v702, -inf
        %709 = vmax.xlane.f32.xlu0 %v708
        %v710 = vpop.xlane.xlu0 %709
        %v711 = vsub.f32 %v699, %v707
        %v712 = vsub.f32 %v702, %v710
        %v713 = vmul.f32 %v711, 1.442695
        %v714 = vpow.pop %v713
        %v715 = vmul.f32 %v712, 1.442695
        %v716 = vpow.pop %v715
        %v717 = vsel %vm657, %v714, 0.0
        %718 = vadd.xlane.f32.xlu0 %v717
        %v719 = vpop.xlane.xlu0 %718
        %v720 = vsel %vm657, %v716, 0.0
        %721 = vadd.xlane.f32.xlu0 %v720
        %v722 = vpop.xlane.xlu0 %721
        %v723 = vrcp.pop %v719
        %v724 = vmul.f32 %v714, %v723
        %v725 = vrcp.pop %v722
        %v726 = vmul.f32 %v716, %v725
        %v727 = vpack.c.bf16 %v726, %v724
        %v729 = vsel %vm657, %v727, 0
        %731 = vmatprep.subr.bf16.mxu0 0
        %732 = vmatpush1.bf16.msra.mxu0 %v653
        %733 = vmatprep.subr.bf16.mxu0 0
        %734 = vmatpush1.bf16.msra.mxu0 0
        %735 = vmatprep.subr.bf16.mxu0 0
        %736 = vmatpush1.bf16.msra.mxu0 0
        %737 = vmatprep.subr.bf16.mxu0 0
        %738 = vmatpush1.bf16.msra.mxu0 0
        %739 = vmatprep.subr.bf16.mxu0 0
        %740 = vmatpush1.bf16.msra.mxu0 0
        %741 = vmatprep.subr.bf16.mxu0 0
        %742 = vmatpush1.bf16.msra.mxu0 0
        %743 = vmatprep.subr.bf16.mxu0 0
        %744 = vmatpush1.bf16.msra.mxu0 0
        %745 = vmatprep.subr.bf16.mxu0 0
        %746 = vmatpush1.bf16.msra.mxu0 0
        %747 = vmatprep.subr.bf16.mxu0 0
        %748 = vmatpush1.bf16.msra.mxu0 0
        %749 = vmatprep.subr.bf16.mxu0 0
        %750 = vmatpush1.bf16.msra.mxu0 0
        %751 = vmatprep.subr.bf16.mxu0 0
        %752 = vmatpush1.bf16.msra.mxu0 0
        %753 = vmatprep.subr.bf16.mxu0 0
        %754 = vmatpush1.bf16.msra.mxu0 0
        %755 = vmatprep.subr.bf16.mxu0 0
        %756 = vmatpush1.bf16.msra.mxu0 0
        %757 = vmatprep.subr.bf16.mxu0 0
        %758 = vmatpush1.bf16.msra.mxu0 0
        %759 = vmatprep.subr.bf16.mxu0 0
        %760 = vmatpush1.bf16.msra.mxu0 0
        %761 = vmatprep.subr.bf16.mxu0 0
        %762 = vmatpush1.bf16.msra.mxu0 0
        %763 = vmatprep.mubr.bf16.mxu0 0
        %764 = vmatmul.mubr.bf16.gmra.mrb[0].mxu0 %v729
        %v765 = vpop.f32.mrb[0].mxu0
        %v766 = vadd.f32 0.0, %v765
        %v767 = vpop.f32.mrb[0].mxu0
        %v768 = vpop.f32.mrb[0].mxu0
        %v769 = vadd.f32 0.0, %v768
        %v770 = vpop.f32.mrb[0].mxu0
        %771 = vdwg.mxu0
        %773 = vrot.lane.b32.xlu0 %v651, 112
        %v774 = vpop.permute.xlu0 %773
        %775 = vrot.lane.b32.xlu0 %v652, 48
        %v776 = vpop.permute.xlu0 %775
        %v778 = vsel %vm657, %v774, 0
        %v781 = vsel %vm657, %v776, 0
        %783 = vmatprep.subr.bf16.mxu0 0
        %784 = vmatpush1.bf16.xpose.msra.mxu0 %v781
        %785 = vmatprep.subr.bf16.mxu0 0
        %786 = vmatpush1.bf16.xpose.msra.mxu0 0
        %787 = vmatprep.subr.bf16.mxu0 0
        %788 = vmatpush1.bf16.xpose.msra.mxu0 0
        %789 = vmatprep.subr.bf16.mxu0 0
        %790 = vmatpush1.bf16.xpose.msra.mxu0 0
        %791 = vmatprep.subr.bf16.mxu0 0
        %792 = vmatpush1.bf16.xpose.msra.mxu0 0
        %793 = vmatprep.subr.bf16.mxu0 0
        %794 = vmatpush1.bf16.xpose.msra.mxu0 0
        %795 = vmatprep.subr.bf16.mxu0 0
        %796 = vmatpush1.bf16.xpose.msra.mxu0 0
        %797 = vmatprep.subr.bf16.mxu0 0
        %798 = vmatpush1.bf16.xpose.msra.mxu0 0
        %799 = vmatprep.subr.bf16.mxu0 0
        %800 = vmatpush1.bf16.xpose.msra.mxu0 0
        %801 = vmatprep.subr.bf16.mxu0 0
        %802 = vmatpush1.bf16.xpose.msra.mxu0 0
        %803 = vmatprep.subr.bf16.mxu0 0
        %804 = vmatpush1.bf16.xpose.msra.mxu0 0
        %805 = vmatprep.subr.bf16.mxu0 0
        %806 = vmatpush1.bf16.xpose.msra.mxu0 0
        %807 = vmatprep.subr.bf16.mxu0 0
        %808 = vmatpush1.bf16.xpose.msra.mxu0 0
        %809 = vmatprep.subr.bf16.mxu0 0
        %810 = vmatpush1.bf16.xpose.msra.mxu0 0
        %811 = vmatprep.subr.bf16.mxu0 0
        %812 = vmatpush1.bf16.xpose.msra.mxu0 0
        %813 = vmatprep.subr.bf16.mxu0 0
        %814 = vmatpush1.bf16.xpose.msra.mxu0 0
        %815 = vmatprep.mubr.bf16.mxu0 0
        %816 = vmatmul.mubr.bf16.gmra.mrb[0].mxu0 %v778
        %v817 = vpop.f32.mrb[0].mxu0
        %v818 = vadd.f32 0.0, %v817
        %v819 = vpop.f32.mrb[0].mxu0
        %v820 = vpop.f32.mrb[0].mxu0
        %v821 = vadd.f32 0.0, %v820
        %v822 = vpop.f32.mrb[0].mxu0
        %823 = vdwg.mxu0
        %v824 = vsel %vm657, %v818, -inf
        %825 = vmax.xlane.f32.xlu0 %v824
        %v826 = vpop.xlane.xlu0 %825
        %v827 = vsel %vm657, %v821, -inf
        %828 = vmax.xlane.f32.xlu0 %v827
        %v829 = vpop.xlane.xlu0 %828
        %v830 = vsub.f32 %v818, %v826
        %v831 = vsub.f32 %v821, %v829
        %v832 = vmul.f32 %v830, 1.442695
        %v833 = vpow.pop %v832
        %v834 = vmul.f32 %v831, 1.442695
        %v835 = vpow.pop %v834
        %v836 = vsel %vm657, %v833, 0.0
        %837 = vadd.xlane.f32.xlu0 %v836
        %v838 = vpop.xlane.xlu0 %837
        %v839 = vsel %vm657, %v835, 0.0
        %840 = vadd.xlane.f32.xlu0 %v839
        %v841 = vpop.xlane.xlu0 %840
        %v842 = vrcp.pop %v838
        %v843 = vmul.f32 %v833, %v842
        %v844 = vrcp.pop %v841
        %v845 = vmul.f32 %v835, %v844
        %v846 = vpack.c.bf16 %v845, %v843
        %848 = vrot.lane.b32.xlu0 %v653, 112
        %v849 = vpop.permute.xlu0 %848
        %v852 = vsel %vm657, %v846, 0
        %854 = vmatprep.subr.bf16.mxu0 0
        %855 = vmatpush1.bf16.msra.mxu0 %v849
        %856 = vmatprep.subr.bf16.mxu0 0
        %857 = vmatpush1.bf16.msra.mxu0 0
        %858 = vmatprep.subr.bf16.mxu0 0
        %859 = vmatpush1.bf16.msra.mxu0 0
        %860 = vmatprep.subr.bf16.mxu0 0
        %861 = vmatpush1.bf16.msra.mxu0 0
        %862 = vmatprep.subr.bf16.mxu0 0
        %863 = vmatpush1.bf16.msra.mxu0 0
        %864 = vmatprep.subr.bf16.mxu0 0
        %865 = vmatpush1.bf16.msra.mxu0 0
        %866 = vmatprep.subr.bf16.mxu0 0
        %867 = vmatpush1.bf16.msra.mxu0 0
        %868 = vmatprep.subr.bf16.mxu0 0
        %869 = vmatpush1.bf16.msra.mxu0 0
        %870 = vmatprep.subr.bf16.mxu0 0
        %871 = vmatpush1.bf16.msra.mxu0 0
        %872 = vmatprep.subr.bf16.mxu0 0
        %873 = vmatpush1.bf16.msra.mxu0 0
        %874 = vmatprep.subr.bf16.mxu0 0
        %875 = vmatpush1.bf16.msra.mxu0 0
        %876 = vmatprep.subr.bf16.mxu0 0
        %877 = vmatpush1.bf16.msra.mxu0 0
        %878 = vmatprep.subr.bf16.mxu0 0
        %879 = vmatpush1.bf16.msra.mxu0 0
        %880 = vmatprep.subr.bf16.mxu0 0
        %881 = vmatpush1.bf16.msra.mxu0 0
        %882 = vmatprep.subr.bf16.mxu0 0
        %883 = vmatpush1.bf16.msra.mxu0 0
        %884 = vmatprep.subr.bf16.mxu0 0
        %885 = vmatpush1.bf16.msra.mxu0 0
        %886 = vmatprep.mubr.bf16.mxu0 0
        %887 = vmatmul.mubr.bf16.gmra.mrb[0].mxu0 %v852
        %v888 = vpop.f32.mrb[0].mxu0
        %v889 = vadd.f32 0.0, %v888
        %v890 = vpop.f32.mrb[0].mxu0
        %v891 = vpop.f32.mrb[0].mxu0
        %v892 = vadd.f32 0.0, %v891
        %v893 = vpop.f32.mrb[0].mxu0
        %894 = vdwg.mxu0
        %895 = vrot.lane.b32.xlu0 %v651, 96
        %v896 = vpop.permute.xlu0 %895
        %897 = vrot.lane.b32.xlu0 %v652, 32
        %v898 = vpop.permute.xlu0 %897
        %v900 = vsel %vm657, %v896, 0
        %v903 = vsel %vm657, %v898, 0
        %905 = vmatprep.subr.bf16.mxu0 0
        %906 = vmatpush1.bf16.xpose.msra.mxu0 %v903
        %907 = vmatprep.subr.bf16.mxu0 0
        %908 = vmatpush1.bf16.xpose.msra.mxu0 0
        %909 = vmatprep.subr.bf16.mxu0 0
        %910 = vmatpush1.bf16.xpose.msra.mxu0 0
        %911 = vmatprep.subr.bf16.mxu0 0
        %912 = vmatpush1.bf16.xpose.msra.mxu0 0
        %913 = vmatprep.subr.bf16.mxu0 0
        %914 = vmatpush1.bf16.xpose.msra.mxu0 0
        %915 = vmatprep.subr.bf16.mxu0 0
        %916 = vmatpush1.bf16.xpose.msra.mxu0 0
        %917 = vmatprep.subr.bf16.mxu0 0
        %918 = vmatpush1.bf16.xpose.msra.mxu0 0
        %919 = vmatprep.subr.bf16.mxu0 0
        %920 = vmatpush1.bf16.xpose.msra.mxu0 0
        %921 = vmatprep.subr.bf16.mxu0 0
        %922 = vmatpush1.bf16.xpose.msra.mxu0 0
        %923 = vmatprep.subr.bf16.mxu0 0
        %924 = vmatpush1.bf16.xpose.msra.mxu0 0
        %925 = vmatprep.subr.bf16.mxu0 0
        %926 = vmatpush1.bf16.xpose.msra.mxu0 0
        %927 = vmatprep.subr.bf16.mxu0 0
        %928 = vmatpush1.bf16.xpose.msra.mxu0 0
        %929 = vmatprep.subr.bf16.mxu0 0
        %930 = vmatpush1.bf16.xpose.msra.mxu0 0
        %931 = vmatprep.subr.bf16.mxu0 0
        %932 = vmatpush1.bf16.xpose.msra.mxu0 0
        %933 = vmatprep.subr.bf16.mxu0 0
        %934 = vmatpush1.bf16.xpose.msra.mxu0 0
        %935 = vmatprep.subr.bf16.mxu0 0
        %936 = vmatpush1.bf16.xpose.msra.mxu0 0
        %937 = vmatprep.mubr.bf16.mxu0 0
        %938 = vmatmul.mubr.bf16.gmra.mrb[0].mxu0 %v900
        %v939 = vpop.f32.mrb[0].mxu0
        %v940 = vadd.f32 0.0, %v939
        %v941 = vpop.f32.mrb[0].mxu0
        %v942 = vpop.f32.mrb[0].mxu0
        %v943 = vadd.f32 0.0, %v942
        %v944 = vpop.f32.mrb[0].mxu0
        %945 = vdwg.mxu0
        %v946 = vsel %vm657, %v940, -inf
        %947 = vmax.xlane.f32.xlu0 %v946
        %v948 = vpop.xlane.xlu0 %947
        %v949 = vsel %vm657, %v943, -inf
        %950 = vmax.xlane.f32.xlu0 %v949
        %v951 = vpop.xlane.xlu0 %950
        %v952 = vsub.f32 %v940, %v948
        %v953 = vsub.f32 %v943, %v951
        %v954 = vmul.f32 %v952, 1.442695
        %v955 = vpow.pop %v954
        %v956 = vmul.f32 %v953, 1.442695
        %v957 = vpow.pop %v956
        %v958 = vsel %vm657, %v955, 0.0
        %959 = vadd.xlane.f32.xlu0 %v958
        %v960 = vpop.xlane.xlu0 %959
        %v961 = vsel %vm657, %v957, 0.0
        %962 = vadd.xlane.f32.xlu0 %v961
        %v963 = vpop.xlane.xlu0 %962
        %v964 = vrcp.pop %v960
        %v965 = vmul.f32 %v955, %v964
        %v966 = vrcp.pop %v963
        %v967 = vmul.f32 %v957, %v966
        %v968 = vpack.c.bf16 %v967, %v965
        %969 = vrot.lane.b32.xlu0 %v653, 96
        %v970 = vpop.permute.xlu0 %969
        %v973 = vsel %vm657, %v968, 0
        %975 = vmatprep.subr.bf16.mxu0 0
        %976 = vmatpush1.bf16.msra.mxu0 %v970
        %977 = vmatprep.subr.bf16.mxu0 0
        %978 = vmatpush1.bf16.msra.mxu0 0
        %979 = vmatprep.subr.bf16.mxu0 0
        %980 = vmatpush1.bf16.msra.mxu0 0
        %981 = vmatprep.subr.bf16.mxu0 0
        %982 = vmatpush1.bf16.msra.mxu0 0
        %983 = vmatprep.subr.bf16.mxu0 0
        %984 = vmatpush1.bf16.msra.mxu0 0
        %985 = vmatprep.subr.bf16.mxu0 0
        %986 = vmatpush1.bf16.msra.mxu0 0
        %987 = vmatprep.subr.bf16.mxu0 0
        %988 = vmatpush1.bf16.msra.mxu0 0
        %989 = vmatprep.subr.bf16.mxu0 0
        %990 = vmatpush1.bf16.msra.mxu0 0
        %991 = vmatprep.subr.bf16.mxu0 0
        %992 = vmatpush1.bf16.msra.mxu0 0
        %993 = vmatprep.subr.bf16.mxu0 0
        %994 = vmatpush1.bf16.msra.mxu0 0
        %995 = vmatprep.subr.bf16.mxu0 0
        %996 = vmatpush1.bf16.msra.mxu0 0
        %997 = vmatprep.subr.bf16.mxu0 0
        %998 = vmatpush1.bf16.msra.mxu0 0
        %999 = vmatprep.subr.bf16.mxu0 0
        %1000 = vmatpush1.bf16.msra.mxu0 0
        %1001 = vmatprep.subr.bf16.mxu0 0
        %1002 = vmatpush1.bf16.msra.mxu0 0
        %1003 = vmatprep.subr.bf16.mxu0 0
        %1004 = vmatpush1.bf16.msra.mxu0 0
        %1005 = vmatprep.subr.bf16.mxu0 0
        %1006 = vmatpush1.bf16.msra.mxu0 0
        %1007 = vmatprep.mubr.bf16.mxu0 0
        %1008 = vmatmul.mubr.bf16.gmra.mrb[0].mxu0 %v973
        %v1009 = vpop.f32.mrb[0].mxu0
        %v1010 = vadd.f32 0.0, %v1009
        %v1011 = vpop.f32.mrb[0].mxu0
        %v1012 = vpop.f32.mrb[0].mxu0
        %v1013 = vadd.f32 0.0, %v1012
        %v1014 = vpop.f32.mrb[0].mxu0
        %1015 = vdwg.mxu0
        %1016 = vrot.lane.b32.xlu0 %v651, 80
        %v1017 = vpop.permute.xlu0 %1016
        %1018 = vrot.lane.b32.xlu0 %v652, 16
        %v1019 = vpop.permute.xlu0 %1018
        %v1021 = vsel %vm657, %v1017, 0
        %v1024 = vsel %vm657, %v1019, 0
        %1026 = vmatprep.subr.bf16.mxu0 0
        %1027 = vmatpush1.bf16.xpose.msra.mxu0 %v1024
        %1028 = vmatprep.subr.bf16.mxu0 0
        %1029 = vmatpush1.bf16.xpose.msra.mxu0 0
        %1030 = vmatprep.subr.bf16.mxu0 0
        %1031 = vmatpush1.bf16.xpose.msra.mxu0 0
        %1032 = vmatprep.subr.bf16.mxu0 0
        %1033 = vmatpush1.bf16.xpose.msra.mxu0 0
        %1034 = vmatprep.subr.bf16.mxu0 0
        %1035 = vmatpush1.bf16.xpose.msra.mxu0 0
        %1036 = vmatprep.subr.bf16.mxu0 0
        %1037 = vmatpush1.bf16.xpose.msra.mxu0 0
        %1038 = vmatprep.subr.bf16.mxu0 0
        %1039 = vmatpush1.bf16.xpose.msra.mxu0 0
        %1040 = vmatprep.subr.bf16.mxu0 0
        %1041 = vmatpush1.bf16.xpose.msra.mxu0 0
        %1042 = vmatprep.subr.bf16.mxu0 0
        %1043 = vmatpush1.bf16.xpose.msra.mxu0 0
        %1044 = vmatprep.subr.bf16.mxu0 0
        %1045 = vmatpush1.bf16.xpose.msra.mxu0 0
        %1046 = vmatprep.subr.bf16.mxu0 0
        %1047 = vmatpush1.bf16.xpose.msra.mxu0 0
        %1048 = vmatprep.subr.bf16.mxu0 0
        %1049 = vmatpush1.bf16.xpose.msra.mxu0 0
        %1050 = vmatprep.subr.bf16.mxu0 0
        %1051 = vmatpush1.bf16.xpose.msra.mxu0 0
        %1052 = vmatprep.subr.bf16.mxu0 0
        %1053 = vmatpush1.bf16.xpose.msra.mxu0 0
        %1054 = vmatprep.subr.bf16.mxu0 0
        %1055 = vmatpush1.bf16.xpose.msra.mxu0 0
        %1056 = vmatprep.subr.bf16.mxu0 0
        %1057 = vmatpush1.bf16.xpose.msra.mxu0 0
        %1058 = vmatprep.mubr.bf16.mxu0 0
        %1059 = vmatmul.mubr.bf16.gmra.mrb[0].mxu0 %v1021
        %v1060 = vpop.f32.mrb[0].mxu0
        %v1061 = vadd.f32 0.0, %v1060
        %v1062 = vpop.f32.mrb[0].mxu0
        %v1063 = vpop.f32.mrb[0].mxu0
        %v1064 = vadd.f32 0.0, %v1063
        %v1065 = vpop.f32.mrb[0].mxu0
        %1066 = vdwg.mxu0
        %v1067 = vsel %vm657, %v1061, -inf
        %1068 = vmax.xlane.f32.xlu0 %v1067
        %v1069 = vpop.xlane.xlu0 %1068
        %v1070 = vsel %vm657, %v1064, -inf
        %1071 = vmax.xlane.f32.xlu0 %v1070
        %v1072 = vpop.xlane.xlu0 %1071
        %v1073 = vsub.f32 %v1061, %v1069
        %v1074 = vsub.f32 %v1064, %v1072
        %v1075 = vmul.f32 %v1073, 1.442695
        %v1076 = vpow.pop %v1075
        %v1077 = vmul.f32 %v1074, 1.442695
        %v1078 = vpow.pop %v1077
        %v1079 = vsel %vm657, %v1076, 0.0
        %1080 = vadd.xlane.f32.xlu0 %v1079
        %v1081 = vpop.xlane.xlu0 %1080
        %v1082 = vsel %vm657, %v1078, 0.0
        %1083 = vadd.xlane.f32.xlu0 %v1082
        %v1084 = vpop.xlane.xlu0 %1083
        %v1085 = vrcp.pop %v1081
        %v1086 = vmul.f32 %v1076, %v1085
        %v1087 = vrcp.pop %v1084
        %v1088 = vmul.f32 %v1078, %v1087
        %v1089 = vpack.c.bf16 %v1088, %v1086
        %1090 = vrot.lane.b32.xlu0 %v653, 80
        %v1091 = vpop.permute.xlu0 %1090
        %v1094 = vsel %vm657, %v1089, 0
        %1096 = vmatprep.subr.bf16.mxu0 0
        %1097 = vmatpush1.bf16.msra.mxu0 %v1091
        %1098 = vmatprep.subr.bf16.mxu0 0
        %1099 = vmatpush1.bf16.msra.mxu0 0
        %1100 = vmatprep.subr.bf16.mxu0 0
        %1101 = vmatpush1.bf16.msra.mxu0 0
        %1102 = vmatprep.subr.bf16.mxu0 0
        %1103 = vmatpush1.bf16.msra.mxu0 0
        %1104 = vmatprep.subr.bf16.mxu0 0
        %1105 = vmatpush1.bf16.msra.mxu0 0
        %1106 = vmatprep.subr.bf16.mxu0 0
        %1107 = vmatpush1.bf16.msra.mxu0 0
        %1108 = vmatprep.subr.bf16.mxu0 0
        %1109 = vmatpush1.bf16.msra.mxu0 0
        %1110 = vmatprep.subr.bf16.mxu0 0
        %1111 = vmatpush1.bf16.msra.mxu0 0
        %1112 = vmatprep.subr.bf16.mxu0 0
        %1113 = vmatpush1.bf16.msra.mxu0 0
        %1114 = vmatprep.subr.bf16.mxu0 0
        %1115 = vmatpush1.bf16.msra.mxu0 0
        %1116 = vmatprep.subr.bf16.mxu0 0
        %1117 = vmatpush1.bf16.msra.mxu0 0
        %1118 = vmatprep.subr.bf16.mxu0 0
        %1119 = vmatpush1.bf16.msra.mxu0 0
        %1120 = vmatprep.subr.bf16.mxu0 0
        %1121 = vmatpush1.bf16.msra.mxu0 0
        %1122 = vmatprep.subr.bf16.mxu0 0
        %1123 = vmatpush1.bf16.msra.mxu0 0
        %1124 = vmatprep.subr.bf16.mxu0 0
        %1125 = vmatpush1.bf16.msra.mxu0 0
        %1126 = vmatprep.subr.bf16.mxu0 0
        %1127 = vmatpush1.bf16.msra.mxu0 0
        %1128 = vmatprep.mubr.bf16.mxu0 0
        %1129 = vmatmul.mubr.bf16.gmra.mrb[0].mxu0 %v1094
        %v1130 = vpop.f32.mrb[0].mxu0
        %v1131 = vadd.f32 0.0, %v1130
        %v1132 = vpop.f32.mrb[0].mxu0
        %v1133 = vpop.f32.mrb[0].mxu0
        %v1134 = vadd.f32 0.0, %v1133
        %v1135 = vpop.f32.mrb[0].mxu0
        %1136 = vdwg.mxu0
        %1139 = vrot.lane.b32.xlu0 %v889, 16
        %v1140 = vpop.permute.xlu0 %1139
        %1141 = vrot.lane.b32.xlu0 %v892, 16
        %v1142 = vpop.permute.xlu0 %1141
        %1147 = vrot.lane.b32.xlu0 %v1010, 32
        %v1148 = vpop.permute.xlu0 %1147
        %1149 = vrot.lane.b32.xlu0 %v1013, 32
        %v1150 = vpop.permute.xlu0 %1149
        %1155 = vrot.lane.b32.xlu0 %v1131, 48
        %v1156 = vpop.permute.xlu0 %1155
        %1157 = vrot.lane.b32.xlu0 %v1134, 48
        %v1158 = vpop.permute.xlu0 %1157
        %v1161 = vsel %vm657, %v766, %v1140
        %v1162 = vsel %vm657, %v769, %v1142
        %vm1163 = vcmask 261120
        %v1164 = vsel %vm1163, %v1161, %v1148
        %v1165 = vsel %vm1163, %v1162, %v1150
        %vm1166 = vcmask 392192
        %v1167 = vsel %vm1166, %v1164, %v1156
        %v1168 = vsel %vm1166, %v1165, %v1158
        %v1169 = vpack.c.bf16 %v1168, %v1167
        %v1170 = vld [vmem:[%s5] sm:$0xf]
        %v1171 = vld [vmem:[%s5 + $0x4] sm:$0xf]
        %v1172 = vld [vmem:[%s5 + $0x8] sm:$0xf]
        %v1173 = vld [vmem:[%s5 + $0xc] sm:$0xf]
        %v1174 = vld [vmem:[%s5 + $0x10] sm:$0xf]
        %v1175 = vld [vmem:[%s5 + $0x14] sm:$0xf]
        %v1176 = vld [vmem:[%s5 + $0x18] sm:$0xf]
        %v1177 = vld [vmem:[%s5 + $0x1c] sm:$0xf]
        %v1178 = vld [vmem:[%s6] sm:$0x1]
        %v1180 = vlaneseq
        %v1181 = vshrl.u32 %v1180, 7
        %v1182 = vsub.s32 0, %v1181
        %v1183 = vrot.slane %v1178, %v1182
        %v1193 = vunpack.c.l.b16 %v1170
        %v1194 = vunpack.c.l.b16 %v1171
        %v1195 = vunpack.c.l.b16 %v1172
        %v1196 = vunpack.c.l.b16 %v1173
        %v1197 = vunpack.c.l.b16 %v1174
        %v1198 = vunpack.c.l.b16 %v1175
        %v1199 = vunpack.c.l.b16 %v1176
        %v1200 = vunpack.c.l.b16 %v1177
        %v1201 = vpack.c.b16 %v1194, %v1193
        %v1202 = vpack.c.b16 %v1196, %v1195
        %v1203 = vpack.c.b16 %v1198, %v1197
        %v1204 = vpack.c.b16 %v1200, %v1199
        %v1210 = vsel %vm498, %v1169, 0
        %1212 = vmatprep.subr.bf16.mxu0 0
        %1213 = vmatpush1.bf16.msra.mxu0 %v1201
        %1214 = vmatprep.subr.bf16.mxu0 0
        %1215 = vmatpush1.bf16.msra.mxu0 %v1202
        %1216 = vmatprep.subr.bf16.mxu0 0
        %1217 = vmatpush1.bf16.msra.mxu0 %v1203
        %1218 = vmatprep.subr.bf16.mxu0 0
        %1219 = vmatpush1.bf16.msra.mxu0 %v1204
        %1220 = vmatprep.subr.bf16.mxu0 0
        %1221 = vmatpush1.bf16.msra.mxu0 0
        %1222 = vmatprep.subr.bf16.mxu0 0
        %1223 = vmatpush1.bf16.msra.mxu0 0
        %1224 = vmatprep.subr.bf16.mxu0 0
        %1225 = vmatpush1.bf16.msra.mxu0 0
        %1226 = vmatprep.subr.bf16.mxu0 0
        %1227 = vmatpush1.bf16.msra.mxu0 0
        %1228 = vmatprep.subr.bf16.mxu0 0
        %1229 = vmatpush1.bf16.msra.mxu0 0
        %1230 = vmatprep.subr.bf16.mxu0 0
        %1231 = vmatpush1.bf16.msra.mxu0 0
        %1232 = vmatprep.subr.bf16.mxu0 0
        %1233 = vmatpush1.bf16.msra.mxu0 0
        %1234 = vmatprep.subr.bf16.mxu0 0
        %1235 = vmatpush1.bf16.msra.mxu0 0
        %1236 = vmatprep.subr.bf16.mxu0 0
        %1237 = vmatpush1.bf16.msra.mxu0 0
        %1238 = vmatprep.subr.bf16.mxu0 0
        %1239 = vmatpush1.bf16.msra.mxu0 0
        %1240 = vmatprep.subr.bf16.mxu0 0
        %1241 = vmatpush1.bf16.msra.mxu0 0
        %1242 = vmatprep.subr.bf16.mxu0 0
        %1243 = vmatpush1.bf16.msra.mxu0 0
        %1244 = vmatprep.mubr.bf16.mxu0 0
        %1245 = vmatmul.mubr.bf16.gmra.mrb[0].mxu0 %v1210
        %v1246 = vpop.f32.mrb[0].mxu0
        %v1247 = vadd.f32 %v1183, %v1246
        %v1248 = vpop.f32.mrb[0].mxu0
        %v1249 = vpop.f32.mrb[0].mxu0
        %v1250 = vadd.f32 %v1183, %v1249
        %v1251 = vpop.f32.mrb[0].mxu0
        %1252 = vdwg.mxu0
        %v1253 = vadd.f32 %v494, %v1247
        %v1254 = vadd.f32 %v495, %v1250
        %v1255 = vld [vmem:[%s7] sm:$0x1]
        %v1256 = vld [vmem:[%s8] sm:$0x1]
        %v1257 = vsel %vm498, %v1253, 0.0
        %1258 = vadd.xlane.f32.xlu0 %v1257
        %v1259 = vpop.xlane.xlu0 %1258
        %v1260 = vsel %vm498, %v1254, 0.0
        %1261 = vadd.xlane.f32.xlu0 %v1260
        %v1262 = vpop.xlane.xlu0 %1261
        %v1263 = vmul.f32 %v1259, %v505
        %v1264 = vmul.f32 %v1262, %v505
        %v1265 = vsub.f32 %v1253, %v1263
        %v1266 = vsub.f32 %v1254, %v1264
        %v1267 = vmul.f32 %v1265, %v1265
        %v1268 = vmul.f32 %v1266, %v1266
        %v1269 = vsel %vm498, %v1267, 0.0
        %1270 = vadd.xlane.f32.xlu0 %v1269
        %v1271 = vpop.xlane.xlu0 %1270
        %v1272 = vsel %vm498, %v1268, 0.0
        %1273 = vadd.xlane.f32.xlu0 %v1272
        %v1274 = vpop.xlane.xlu0 %1273
        %v1275 = vmul.f32 %v1271, %v505
        %v1276 = vmul.f32 %v1274, %v505
        %v1277 = vadd.f32 %v1275, 1e-05
        %v1278 = vadd.f32 %v1276, 1e-05
        %v1279 = vrsqrt.pop %v1277
        %v1280 = vrsqrt.pop %v1278
        %v1281 = vmul.f32 %v1265, %v1279
        %v1282 = vmul.f32 %v1266, %v1280
        %v1284 = vlaneseq
        %v1285 = vshrl.u32 %v1284, 7
        %v1286 = vsub.s32 0, %v1285
        %v1287 = vrot.slane %v1255, %v1286
        %v1289 = vmul.f32 %v1281, %v1287
        %v1290 = vmul.f32 %v1282, %v1287
        %v1292 = vlaneseq
        %v1293 = vshrl.u32 %v1292, 7
        %v1294 = vsub.s32 0, %v1293
        %v1295 = vrot.slane %v1256, %v1294
        %v1297 = vadd.f32 %v1289, %v1295
        %v1298 = vadd.f32 %v1290, %v1295
        %v1299 = vpack.c.bf16 %v1298, %v1297
        %v1300 = vld [vmem:[%s9] sm:$0xf]
        %v1301 = vld [vmem:[%s9 + $0x4] sm:$0xf]
        %v1302 = vld [vmem:[%s9 + $0x8] sm:$0xf]
        %v1303 = vld [vmem:[%s9 + $0xc] sm:$0xf]
        %v1304 = vld [vmem:[%s9 + $0x10] sm:$0xf]
        %v1305 = vld [vmem:[%s9 + $0x14] sm:$0xf]
        %v1306 = vld [vmem:[%s9 + $0x18] sm:$0xf]
        %v1307 = vld [vmem:[%s9 + $0x1c] sm:$0xf]
        %v1308 = vld [vmem:[%s10] sm:$0x1]
        %v1310 = vlaneseq
        %v1311 = vshrl.u32 %v1310, 7
        %v1312 = vsub.s32 0, %v1311
        %v1313 = vrot.slane %v1308, %v1312
        %v1323 = vunpack.c.l.b16 %v1300
        %v1324 = vunpack.c.l.b16 %v1301
        %v1325 = vunpack.c.l.b16 %v1302
        %v1326 = vunpack.c.l.b16 %v1303
        %v1327 = vunpack.c.l.b16 %v1304
        %v1328 = vunpack.c.l.b16 %v1305
        %v1329 = vunpack.c.l.b16 %v1306
        %v1330 = vunpack.c.l.b16 %v1307
        %v1331 = vpack.c.b16 %v1324, %v1323
        %v1332 = vpack.c.b16 %v1326, %v1325
        %v1333 = vpack.c.b16 %v1328, %v1327
        %v1334 = vpack.c.b16 %v1330, %v1329
        %v1340 = vsel %vm498, %v1299, 0
        %1342 = vmatprep.subr.bf16.mxu0 0
        %1343 = vmatpush1.bf16.msra.mxu0 %v1331
        %1344 = vmatprep.subr.bf16.mxu0 0
        %1345 = vmatpush1.bf16.msra.mxu0 %v1332
        %1346 = vmatprep.subr.bf16.mxu0 0
        %1347 = vmatpush1.bf16.msra.mxu0 %v1333
        %1348 = vmatprep.subr.bf16.mxu0 0
        %1349 = vmatpush1.bf16.msra.mxu0 %v1334
        %1350 = vmatprep.subr.bf16.mxu0 0
        %1351 = vmatpush1.bf16.msra.mxu0 0
        %1352 = vmatprep.subr.bf16.mxu0 0
        %1353 = vmatpush1.bf16.msra.mxu0 0
        %1354 = vmatprep.subr.bf16.mxu0 0
        %1355 = vmatpush1.bf16.msra.mxu0 0
        %1356 = vmatprep.subr.bf16.mxu0 0
        %1357 = vmatpush1.bf16.msra.mxu0 0
        %1358 = vmatprep.subr.bf16.mxu0 0
        %1359 = vmatpush1.bf16.msra.mxu0 0
        %1360 = vmatprep.subr.bf16.mxu0 0
        %1361 = vmatpush1.bf16.msra.mxu0 0
        %1362 = vmatprep.subr.bf16.mxu0 0
        %1363 = vmatpush1.bf16.msra.mxu0 0
        %1364 = vmatprep.subr.bf16.mxu0 0
        %1365 = vmatpush1.bf16.msra.mxu0 0
        %1366 = vmatprep.subr.bf16.mxu0 0
        %1367 = vmatpush1.bf16.msra.mxu0 0
        %1368 = vmatprep.subr.bf16.mxu0 0
        %1369 = vmatpush1.bf16.msra.mxu0 0
        %1370 = vmatprep.subr.bf16.mxu0 0
        %1371 = vmatpush1.bf16.msra.mxu0 0
        %1372 = vmatprep.subr.bf16.mxu0 0
        %1373 = vmatpush1.bf16.msra.mxu0 0
        %1374 = vmatprep.mubr.bf16.mxu0 0
        %1375 = vmatmul.mubr.bf16.gmra.mrb[0].mxu0 %v1340
        %v1376 = vpop.f32.mrb[0].mxu0
        %v1377 = vadd.f32 %v1313, %v1376
        %v1378 = vpop.f32.mrb[0].mxu0
        %v1379 = vpop.f32.mrb[0].mxu0
        %v1380 = vadd.f32 %v1313, %v1379
        %v1381 = vpop.f32.mrb[0].mxu0
        %1382 = vdwg.mxu0
        %v1383 = vmul.f32 %v1377, %v1377
        %v1384 = vmul.f32 %v1380, %v1380
        %v1385 = vmul.f32 %v1377, %v1383
        %v1386 = vmul.f32 %v1380, %v1384
        %v1387 = vmul.f32 %v1385, 0.044715
        %v1388 = vmul.f32 %v1386, 0.044715
        %v1389 = vadd.f32 %v1377, %v1387
        %v1390 = vadd.f32 %v1380, %v1388
        %v1391 = vmul.f32 %v1389, 0.7978846
        %v1392 = vmul.f32 %v1390, 0.7978846
        %v1393 = vtanh.pop %v1391
        %v1394 = vtanh.pop %v1392
        %v1395 = vadd.f32 %v1393, 1.0
        %v1396 = vadd.f32 %v1394, 1.0
        %v1397 = vmul.f32 %v1395, 0.5
        %v1398 = vmul.f32 %v1396, 0.5
        %v1399 = vmul.f32 %v1377, %v1397
        %v1400 = vmul.f32 %v1380, %v1398
        %v1401 = vpack.c.bf16 %v1400, %v1399
        %v1402 = vld [vmem:[%s11] sm:$0xf]
        %v1403 = vld [vmem:[%s11 + $0x4] sm:$0xf]
        %v1404 = vld [vmem:[%s11 + $0x8] sm:$0xf]
        %v1405 = vld [vmem:[%s11 + $0xc] sm:$0xf]
        %v1406 = vld [vmem:[%s11 + $0x10] sm:$0xf]
        %v1407 = vld [vmem:[%s11 + $0x14] sm:$0xf]
        %v1408 = vld [vmem:[%s11 + $0x18] sm:$0xf]
        %v1409 = vld [vmem:[%s11 + $0x1c] sm:$0xf]
        %v1410 = vld [vmem:[%s11 + $0x20] sm:$0xf]
        %v1411 = vld [vmem:[%s11 + $0x24] sm:$0xf]
        %v1412 = vld [vmem:[%s11 + $0x28] sm:$0xf]
        %v1413 = vld [vmem:[%s11 + $0x2c] sm:$0xf]
        %v1414 = vld [vmem:[%s11 + $0x30] sm:$0xf]
        %v1415 = vld [vmem:[%s11 + $0x34] sm:$0xf]
        %v1416 = vld [vmem:[%s11 + $0x38] sm:$0xf]
        %v1417 = vld [vmem:[%s11 + $0x3c] sm:$0xf]
        %v1434 = vunpack.c.l.b16 %v1402
        %v1435 = vunpack.c.l.b16 %v1403
        %v1436 = vunpack.c.l.b16 %v1404
        %v1437 = vunpack.c.l.b16 %v1405
        %v1438 = vunpack.c.l.b16 %v1406
        %v1439 = vunpack.c.l.b16 %v1407
        %v1440 = vunpack.c.l.b16 %v1408
        %v1441 = vunpack.c.l.b16 %v1409
        %v1442 = vunpack.c.l.b16 %v1410
        %v1443 = vunpack.c.l.b16 %v1411
        %v1444 = vunpack.c.l.b16 %v1412
        %v1445 = vunpack.c.l.b16 %v1413
        %v1446 = vunpack.c.l.b16 %v1414
        %v1447 = vunpack.c.l.b16 %v1415
        %v1448 = vunpack.c.l.b16 %v1416
        %v1449 = vunpack.c.l.b16 %v1417
        %v1450 = vpack.c.b16 %v1435, %v1434
        %v1451 = vpack.c.b16 %v1437, %v1436
        %v1452 = vpack.c.b16 %v1439, %v1438
        %v1453 = vpack.c.b16 %v1441, %v1440
        %v1454 = vpack.c.b16 %v1443, %v1442
        %v1455 = vpack.c.b16 %v1445, %v1444
        %v1456 = vpack.c.b16 %v1447, %v1446
        %v1457 = vpack.c.b16 %v1449, %v1448
        %1466 = vmatprep.subr.bf16.mxu0 0
        %1467 = vmatpush1.bf16.msra.mxu0 %v1450
        %1468 = vmatprep.subr.bf16.mxu0 0
        %1469 = vmatpush1.bf16.msra.mxu0 %v1451
        %1470 = vmatprep.subr.bf16.mxu0 0
        %1471 = vmatpush1.bf16.msra.mxu0 %v1452
        %1472 = vmatprep.subr.bf16.mxu0 0
        %1473 = vmatpush1.bf16.msra.mxu0 %v1453
        %1474 = vmatprep.subr.bf16.mxu0 0
        %1475 = vmatpush1.bf16.msra.mxu0 %v1454
        %1476 = vmatprep.subr.bf16.mxu0 0
        %1477 = vmatpush1.bf16.msra.mxu0 %v1455
        %1478 = vmatprep.subr.bf16.mxu0 0
        %1479 = vmatpush1.bf16.msra.mxu0 %v1456
        %1480 = vmatprep.subr.bf16.mxu0 0
        %1481 = vmatpush1.bf16.msra.mxu0 %v1457
        %1482 = vmatprep.subr.bf16.mxu0 0
        %1483 = vmatpush1.bf16.msra.mxu0 0
        %1484 = vmatprep.subr.bf16.mxu0 0
        %1485 = vmatpush1.bf16.msra.mxu0 0
        %1486 = vmatprep.subr.bf16.mxu0 0
        %1487 = vmatpush1.bf16.msra.mxu0 0
        %1488 = vmatprep.subr.bf16.mxu0 0
        %1489 = vmatpush1.bf16.msra.mxu0 0
        %1490 = vmatprep.subr.bf16.mxu0 0
        %1491 = vmatpush1.bf16.msra.mxu0 0
        %1492 = vmatprep.subr.bf16.mxu0 0
        %1493 = vmatpush1.bf16.msra.mxu0 0
        %1494 = vmatprep.subr.bf16.mxu0 0
        %1495 = vmatpush1.bf16.msra.mxu0 0
        %1496 = vmatprep.subr.bf16.mxu0 0
        %1497 = vmatpush1.bf16.msra.mxu0 0
        %1498 = vmatprep.mubr.bf16.mxu0 0
        %1499 = vmatmul.mubr.bf16.gmra.mrb[0].mxu0 %v1401
        %v1500 = vpop.f32.mrb[0].mxu0
        %v1501 = vadd.f32 0.0, %v1500
        %v1502 = vpop.f32.mrb[0].mxu0
        %v1503 = vpop.f32.mrb[0].mxu0
        %v1504 = vadd.f32 0.0, %v1503
        %v1505 = vpop.f32.mrb[0].mxu0
        %1506 = vdwg.mxu0
        %v1507 = vadd.f32 %v1253, %v1501
        %v1508 = vadd.f32 %v1254, %v1504
        %v1509 = vld [vmem:[%s12] sm:$0x1]
        %v1511 = vlaneseq
        %v1512 = vshrl.u32 %v1511, 7
        %v1513 = vsub.s32 0, %v1512
        %v1514 = vrot.slane %v1509, %v1513
        %v1516 = vadd.f32 %v1507, %v1514
        %v1517 = vadd.f32 %v1508, %v1514
        %s1518 = scalar_lea.vmem %s1, 1
        %v1519 = vld [vmem:[%s1518] sm:$0x1]
        %s1520 = scalar_lea.vmem %s2, 1
        %v1521 = vld [vmem:[%s1520] sm:$0x1]
        %v1522 = vsel %vm498, %v1516, 0.0
        %1523 = vadd.xlane.f32.xlu0 %v1522
        %v1524 = vpop.xlane.xlu0 %1523
        %v1525 = vsel %vm498, %v1517, 0.0
        %1526 = vadd.xlane.f32.xlu0 %v1525
        %v1527 = vpop.xlane.xlu0 %1526
        %v1528 = vmul.f32 %v1524, %v505
        %v1529 = vmul.f32 %v1527, %v505
        %v1530 = vsub.f32 %v1516, %v1528
        %v1531 = vsub.f32 %v1517, %v1529
        %v1532 = vmul.f32 %v1530, %v1530
        %v1533 = vmul.f32 %v1531, %v1531
        %v1534 = vsel %vm498, %v1532, 0.0
        %1535 = vadd.xlane.f32.xlu0 %v1534
        %v1536 = vpop.xlane.xlu0 %1535
        %v1537 = vsel %vm498, %v1533, 0.0
        %1538 = vadd.xlane.f32.xlu0 %v1537
        %v1539 = vpop.xlane.xlu0 %1538
        %v1540 = vmul.f32 %v1536, %v505
        %v1541 = vmul.f32 %v1539, %v505
        %v1542 = vadd.f32 %v1540, 1e-05
        %v1543 = vadd.f32 %v1541, 1e-05
        %v1544 = vrsqrt.pop %v1542
        %v1545 = vrsqrt.pop %v1543
        %v1546 = vmul.f32 %v1530, %v1544
        %v1547 = vmul.f32 %v1531, %v1545
        %v1549 = vlaneseq
        %v1550 = vshrl.u32 %v1549, 7
        %v1551 = vsub.s32 0, %v1550
        %v1552 = vrot.slane %v1519, %v1551
        %v1554 = vmul.f32 %v1546, %v1552
        %v1555 = vmul.f32 %v1547, %v1552
        %v1557 = vlaneseq
        %v1558 = vshrl.u32 %v1557, 7
        %v1559 = vsub.s32 0, %v1558
        %v1560 = vrot.slane %v1521, %v1559
        %v1562 = vadd.f32 %v1554, %v1560
        %v1563 = vadd.f32 %v1555, %v1560
        %v1564 = vpack.c.bf16 %v1563, %v1562
        %s1565 = scalar_lea.vmem %s3, 64
        %v1566 = vld [vmem:[%s1565] sm:$0xff]
        %v1567 = vld [vmem:[%s1565 + $0x8] sm:$0xff]
        %v1568 = vld [vmem:[%s1565 + $0x10] sm:$0xff]
        %v1569 = vld [vmem:[%s1565 + $0x18] sm:$0xff]
        %v1570 = vld [vmem:[%s1565 + $0x20] sm:$0xff]
        %v1571 = vld [vmem:[%s1565 + $0x28] sm:$0xff]
        %v1572 = vld [vmem:[%s1565 + $0x30] sm:$0xff]
        %v1573 = vld [vmem:[%s1565 + $0x38] sm:$0xff]
        %s1574 = scalar_lea.vmem %s4, 2
        %v1575 = vld [vmem:[%s1574] sm:$0x3]
        %v1577 = vlaneseq
        %v1578 = vshrl.u32 %v1577, 7
        %v1579 = vsub.s32 0, %v1578
        %v1580 = vrot.slane %v1575, %v1579
        %v1581 = vlaneseq
        %v1582 = vshrl.u32 %v1581, 7
        %v1583 = vsub.s32 1, %v1582
        %v1584 = vrot.slane %v1575, %v1583
        %v1595 = vunpack.c.l.b16 %v1566
        %v1596 = vunpack.c.h.b16 %v1566
        %v1597 = vunpack.c.l.b16 %v1567
        %v1598 = vunpack.c.h.b16 %v1567
        %v1599 = vunpack.c.l.b16 %v1568
        %v1600 = vunpack.c.h.b16 %v1568
        %v1601 = vunpack.c.l.b16 %v1569
        %v1602 = vunpack.c.h.b16 %v1569
        %v1603 = vunpack.c.l.b16 %v1570
        %v1604 = vunpack.c.h.b16 %v1570
        %v1605 = vunpack.c.l.b16 %v1571
        %v1606 = vunpack.c.h.b16 %v1571
        %v1607 = vunpack.c.l.b16 %v1572
        %v1608 = vunpack.c.h.b16 %v1572
        %v1609 = vunpack.c.l.b16 %v1573
        %v1610 = vunpack.c.h.b16 %v1573
        %v1611 = vpack.c.b16 %v1597, %v1595
        %v1612 = vpack.c.b16 %v1598, %v1596
        %v1613 = vpack.c.b16 %v1601, %v1599
        %v1614 = vpack.c.b16 %v1602, %v1600
        %v1615 = vpack.c.b16 %v1605, %v1603
        %v1616 = vpack.c.b16 %v1606, %v1604
        %v1617 = vpack.c.b16 %v1609, %v1607
        %v1618 = vpack.c.b16 %v1610, %v1608
        %v1628 = vsel %vm498, %v1564, 0
        %1630 = vmatprep.subr.bf16.mxu0 %v1612
        %1631 = vmatpush1.bf16.msra.mxu0 %v1611
        %1632 = vmatprep.subr.bf16.mxu0 %v1614
        %1633 = vmatpush1.bf16.msra.mxu0 %v1613
        %1634 = vmatprep.subr.bf16.mxu0 %v1616
        %1635 = vmatpush1.bf16.msra.mxu0 %v1615
        %1636 = vmatprep.subr.bf16.mxu0 %v1618
        %1637 = vmatpush1.bf16.msra.mxu0 %v1617
        %1638 = vmatprep.subr.bf16.mxu0 0
        %1639 = vmatpush1.bf16.msra.mxu0 0
        %1640 = vmatprep.subr.bf16.mxu0 0
        %1641 = vmatpush1.bf16.msra.mxu0 0
        %1642 = vmatprep.subr.bf16.mxu0 0
        %1643 = vmatpush1.bf16.msra.mxu0 0
        %1644 = vmatprep.subr.bf16.mxu0 0
        %1645 = vmatpush1.bf16.msra.mxu0 0
        %1646 = vmatprep.subr.bf16.mxu0 0
        %1647 = vmatpush1.bf16.msra.mxu0 0
        %1648 = vmatprep.subr.bf16.mxu0 0
        %1649 = vmatpush1.bf16.msra.mxu0 0
        %1650 = vmatprep.subr.bf16.mxu0 0
        %1651 = vmatpush1.bf16.msra.mxu0 0
        %1652 = vmatprep.subr.bf16.mxu0 0
        %1653 = vmatpush1.bf16.msra.mxu0 0
        %1654 = vmatprep.subr.bf16.mxu0 0
        %1655 = vmatpush1.bf16.msra.mxu0 0
        %1656 = vmatprep.subr.bf16.mxu0 0
        %1657 = vmatpush1.bf16.msra.mxu0 0
        %1658 = vmatprep.subr.bf16.mxu0 0
        %1659 = vmatpush1.bf16.msra.mxu0 0
        %1660 = vmatprep.subr.bf16.mxu0 0
        %1661 = vmatpush1.bf16.msra.mxu0 0
        %1662 = vmatprep.mubr.bf16.mxu0 0
        %1663 = vmatmul.mubr.bf16.gmra.mrb[0].mxu0 %v1628
        %v1664 = vpop.f32.mrb[0].mxu0
        %v1665 = vadd.f32 %v1580, %v1664
        %v1666 = vpop.f32.mrb[0].mxu0
        %v1667 = vadd.f32 %v1584, %v1666
        %v1668 = vpop.f32.mrb[0].mxu0
        %v1669 = vadd.f32 %v1580, %v1668
        %v1670 = vpop.f32.mrb[0].mxu0
        %v1671 = vadd.f32 %v1584, %v1670
        %1672 = vdwg.mxu0
        %v1673 = vmul.f32 %v1665, 0.25
        %v1674 = vmul.f32 %v1669, 0.25
        %v1675 = vpack.c.bf16 %v1674, %v1673
        %v1676 = vpack.c.bf16 %v1669, %v1665
        %v1677 = vpack.c.bf16 %v1671, %v1667
        %1679 = vrot.lane.b32.xlu0 %v1676, 64
        %v1680 = vpop.permute.xlu0 %1679
        %v1682 = vsel %vm657, %v1675, 0
        %v1685 = vsel %vm657, %v1680, 0
        %1687 = vmatprep.subr.bf16.mxu0 0
        %1688 = vmatpush1.bf16.xpose.msra.mxu0 %v1685
        %1689 = vmatprep.subr.bf16.mxu0 0
        %1690 = vmatpush1.bf16.xpose.msra.mxu0 0
        %1691 = vmatprep.subr.bf16.mxu0 0
        %1692 = vmatpush1.bf16.xpose.msra.mxu0 0
        %1693 = vmatprep.subr.bf16.mxu0 0
        %1694 = vmatpush1.bf16.xpose.msra.mxu0 0
        %1695 = vmatprep.subr.bf16.mxu0 0
        %1696 = vmatpush1.bf16.xpose.msra.mxu0 0
        %1697 = vmatprep.subr.bf16.mxu0 0
        %1698 = vmatpush1.bf16.xpose.msra.mxu0 0
        %1699 = vmatprep.subr.bf16.mxu0 0
        %1700 = vmatpush1.bf16.xpose.msra.mxu0 0
        %1701 = vmatprep.subr.bf16.mxu0 0
        %1702 = vmatpush1.bf16.xpose.msra.mxu0 0
        %1703 = vmatprep.subr.bf16.mxu0 0
        %1704 = vmatpush1.bf16.xpose.msra.mxu0 0
        %1705 = vmatprep.subr.bf16.mxu0 0
        %1706 = vmatpush1.bf16.xpose.msra.mxu0 0
        %1707 = vmatprep.subr.bf16.mxu0 0
        %1708 = vmatpush1.bf16.xpose.msra.mxu0 0
        %1709 = vmatprep.subr.bf16.mxu0 0
        %1710 = vmatpush1.bf16.xpose.msra.mxu0 0
        %1711 = vmatprep.subr.bf16.mxu0 0
        %1712 = vmatpush1.bf16.xpose.msra.mxu0 0
        %1713 = vmatprep.subr.bf16.mxu0 0
        %1714 = vmatpush1.bf16.xpose.msra.mxu0 0
        %1715 = vmatprep.subr.bf16.mxu0 0
        %1716 = vmatpush1.bf16.xpose.msra.mxu0 0
        %1717 = vmatprep.subr.bf16.mxu0 0
        %1718 = vmatpush1.bf16.xpose.msra.mxu0 0
        %1719 = vmatprep.mubr.bf16.mxu0 0
        %1720 = vmatmul.mubr.bf16.gmra.mrb[0].mxu0 %v1682
        %v1721 = vpop.f32.mrb[0].mxu0
        %v1722 = vadd.f32 0.0, %v1721
        %v1723 = vpop.f32.mrb[0].mxu0
        %v1724 = vpop.f32.mrb[0].mxu0
        %v1725 = vadd.f32 0.0, %v1724
        %v1726 = vpop.f32.mrb[0].mxu0
        %1727 = vdwg.mxu0
        %v1728 = vsel %vm657, %v1722, -inf
        %1729 = vmax.xlane.f32.xlu0 %v1728
        %v1730 = vpop.xlane.xlu0 %1729
        %v1731 = vsel %vm657, %v1725, -inf
        %1732 = vmax.xlane.f32.xlu0 %v1731
        %v1733 = vpop.xlane.xlu0 %1732
        %v1734 = vsub.f32 %v1722, %v1730
        %v1735 = vsub.f32 %v1725, %v1733
        %v1736 = vmul.f32 %v1734, 1.442695
        %v1737 = vpow.pop %v1736
        %v1738 = vmul.f32 %v1735, 1.442695
        %v1739 = vpow.pop %v1738
        %v1740 = vsel %vm657, %v1737, 0.0
        %1741 = vadd.xlane.f32.xlu0 %v1740
        %v1742 = vpop.xlane.xlu0 %1741
        %v1743 = vsel %vm657, %v1739, 0.0
        %1744 = vadd.xlane.f32.xlu0 %v1743
        %v1745 = vpop.xlane.xlu0 %1744
        %v1746 = vrcp.pop %v1742
        %v1747 = vmul.f32 %v1737, %v1746
        %v1748 = vrcp.pop %v1745
        %v1749 = vmul.f32 %v1739, %v1748
        %v1750 = vpack.c.bf16 %v1749, %v1747
        %v1752 = vsel %vm657, %v1750, 0
        %1754 = vmatprep.subr.bf16.mxu0 0
        %1755 = vmatpush1.bf16.msra.mxu0 %v1677
        %1756 = vmatprep.subr.bf16.mxu0 0
        %1757 = vmatpush1.bf16.msra.mxu0 0
        %1758 = vmatprep.subr.bf16.mxu0 0
        %1759 = vmatpush1.bf16.msra.mxu0 0
        %1760 = vmatprep.subr.bf16.mxu0 0
        %1761 = vmatpush1.bf16.msra.mxu0 0
        %1762 = vmatprep.subr.bf16.mxu0 0
        %1763 = vmatpush1.bf16.msra.mxu0 0
        %1764 = vmatprep.subr.bf16.mxu0 0
        %1765 = vmatpush1.bf16.msra.mxu0 0
        %1766 = vmatprep.subr.bf16.mxu0 0
        %1767 = vmatpush1.bf16.msra.mxu0 0
        %1768 = vmatprep.subr.bf16.mxu0 0
        %1769 = vmatpush1.bf16.msra.mxu0 0
        %1770 = vmatprep.subr.bf16.mxu0 0
        %1771 = vmatpush1.bf16.msra.mxu0 0
        %1772 = vmatprep.subr.bf16.mxu0 0
        %1773 = vmatpush1.bf16.msra.mxu0 0
        %1774 = vmatprep.subr.bf16.mxu0 0
        %1775 = vmatpush1.bf16.msra.mxu0 0
        %1776 = vmatprep.subr.bf16.mxu0 0
        %1777 = vmatpush1.bf16.msra.mxu0 0
        %1778 = vmatprep.subr.bf16.mxu0 0
        %1779 = vmatpush1.bf16.msra.mxu0 0
        %1780 = vmatprep.subr.bf16.mxu0 0
        %1781 = vmatpush1.bf16.msra.mxu0 0
        %1782 = vmatprep.subr.bf16.mxu0 0
        %1783 = vmatpush1.bf16.msra.mxu0 0
        %1784 = vmatprep.subr.bf16.mxu0 0
        %1785 = vmatpush1.bf16.msra.mxu0 0
        %1786 = vmatprep.mubr.bf16.mxu0 0
        %1787 = vmatmul.mubr.bf16.gmra.mrb[0].mxu0 %v1752
        %v1788 = vpop.f32.mrb[0].mxu0
        %v1789 = vadd.f32 0.0, %v1788
        %v1790 = vpop.f32.mrb[0].mxu0
        %v1791 = vpop.f32.mrb[0].mxu0
        %v1792 = vadd.f32 0.0, %v1791
        %v1793 = vpop.f32.mrb[0].mxu0
        %1794 = vdwg.mxu0
        %1796 = vrot.lane.b32.xlu0 %v1675, 112
        %v1797 = vpop.permute.xlu0 %1796
        %1798 = vrot.lane.b32.xlu0 %v1676, 48
        %v1799 = vpop.permute.xlu0 %1798
        %v1801 = vsel %vm657, %v1797, 0
        %v1804 = vsel %vm657, %v1799, 0
        %1806 = vmatprep.subr.bf16.mxu0 0
        %1807 = vmatpush1.bf16.xpose.msra.mxu0 %v1804
        %1808 = vmatprep.subr.bf16.mxu0 0
        %1809 = vmatpush1.bf16.xpose.msra.mxu0 0
        %1810 = vmatprep.subr.bf16.mxu0 0
        %1811 = vmatpush1.bf16.xpose.msra.mxu0 0
        %1812 = vmatprep.subr.bf16.mxu0 0
        %1813 = vmatpush1.bf16.xpose.msra.mxu0 0
        %1814 = vmatprep.subr.bf16.mxu0 0
        %1815 = vmatpush1.bf16.xpose.msra.mxu0 0
        %1816 = vmatprep.subr.bf16.mxu0 0
        %1817 = vmatpush1.bf16.xpose.msra.mxu0 0
        %1818 = vmatprep.subr.bf16.mxu0 0
        %1819 = vmatpush1.bf16.xpose.msra.mxu0 0
        %1820 = vmatprep.subr.bf16.mxu0 0
        %1821 = vmatpush1.bf16.xpose.msra.mxu0 0
        %1822 = vmatprep.subr.bf16.mxu0 0
        %1823 = vmatpush1.bf16.xpose.msra.mxu0 0
        %1824 = vmatprep.subr.bf16.mxu0 0
        %1825 = vmatpush1.bf16.xpose.msra.mxu0 0
        %1826 = vmatprep.subr.bf16.mxu0 0
        %1827 = vmatpush1.bf16.xpose.msra.mxu0 0
        %1828 = vmatprep.subr.bf16.mxu0 0
        %1829 = vmatpush1.bf16.xpose.msra.mxu0 0
        %1830 = vmatprep.subr.bf16.mxu0 0
        %1831 = vmatpush1.bf16.xpose.msra.mxu0 0
        %1832 = vmatprep.subr.bf16.mxu0 0
        %1833 = vmatpush1.bf16.xpose.msra.mxu0 0
        %1834 = vmatprep.subr.bf16.mxu0 0
        %1835 = vmatpush1.bf16.xpose.msra.mxu0 0
        %1836 = vmatprep.subr.bf16.mxu0 0
        %1837 = vmatpush1.bf16.xpose.msra.mxu0 0
        %1838 = vmatprep.mubr.bf16.mxu0 0
        %1839 = vmatmul.mubr.bf16.gmra.mrb[0].mxu0 %v1801
        %v1840 = vpop.f32.mrb[0].mxu0
        %v1841 = vadd.f32 0.0, %v1840
        %v1842 = vpop.f32.mrb[0].mxu0
        %v1843 = vpop.f32.mrb[0].mxu0
        %v1844 = vadd.f32 0.0, %v1843
        %v1845 = vpop.f32.mrb[0].mxu0
        %1846 = vdwg.mxu0
        %v1847 = vsel %vm657, %v1841, -inf
        %1848 = vmax.xlane.f32.xlu0 %v1847
        %v1849 = vpop.xlane.xlu0 %1848
        %v1850 = vsel %vm657, %v1844, -inf
        %1851 = vmax.xlane.f32.xlu0 %v1850
        %v1852 = vpop.xlane.xlu0 %1851
        %v1853 = vsub.f32 %v1841, %v1849
        %v1854 = vsub.f32 %v1844, %v1852
        %v1855 = vmul.f32 %v1853, 1.442695
        %v1856 = vpow.pop %v1855
        %v1857 = vmul.f32 %v1854, 1.442695
        %v1858 = vpow.pop %v1857
        %v1859 = vsel %vm657, %v1856, 0.0
        %1860 = vadd.xlane.f32.xlu0 %v1859
        %v1861 = vpop.xlane.xlu0 %1860
        %v1862 = vsel %vm657, %v1858, 0.0
        %1863 = vadd.xlane.f32.xlu0 %v1862
        %v1864 = vpop.xlane.xlu0 %1863
        %v1865 = vrcp.pop %v1861
        %v1866 = vmul.f32 %v1856, %v1865
        %v1867 = vrcp.pop %v1864
        %v1868 = vmul.f32 %v1858, %v1867
        %v1869 = vpack.c.bf16 %v1868, %v1866
        %1871 = vrot.lane.b32.xlu0 %v1677, 112
        %v1872 = vpop.permute.xlu0 %1871
        %v1875 = vsel %vm657, %v1869, 0
        %1877 = vmatprep.subr.bf16.mxu0 0
        %1878 = vmatpush1.bf16.msra.mxu0 %v1872
        %1879 = vmatprep.subr.bf16.mxu0 0
        %1880 = vmatpush1.bf16.msra.mxu0 0
        %1881 = vmatprep.subr.bf16.mxu0 0
        %1882 = vmatpush1.bf16.msra.mxu0 0
        %1883 = vmatprep.subr.bf16.mxu0 0
        %1884 = vmatpush1.bf16.msra.mxu0 0
        %1885 = vmatprep.subr.bf16.mxu0 0
        %1886 = vmatpush1.bf16.msra.mxu0 0
        %1887 = vmatprep.subr.bf16.mxu0 0
        %1888 = vmatpush1.bf16.msra.mxu0 0
        %1889 = vmatprep.subr.bf16.mxu0 0
        %1890 = vmatpush1.bf16.msra.mxu0 0
        %1891 = vmatprep.subr.bf16.mxu0 0
        %1892 = vmatpush1.bf16.msra.mxu0 0
        %1893 = vmatprep.subr.bf16.mxu0 0
        %1894 = vmatpush1.bf16.msra.mxu0 0
        %1895 = vmatprep.subr.bf16.mxu0 0
        %1896 = vmatpush1.bf16.msra.mxu0 0
        %1897 = vmatprep.subr.bf16.mxu0 0
        %1898 = vmatpush1.bf16.msra.mxu0 0
        %1899 = vmatprep.subr.bf16.mxu0 0
        %1900 = vmatpush1.bf16.msra.mxu0 0
        %1901 = vmatprep.subr.bf16.mxu0 0
        %1902 = vmatpush1.bf16.msra.mxu0 0
        %1903 = vmatprep.subr.bf16.mxu0 0
        %1904 = vmatpush1.bf16.msra.mxu0 0
        %1905 = vmatprep.subr.bf16.mxu0 0
        %1906 = vmatpush1.bf16.msra.mxu0 0
        %1907 = vmatprep.subr.bf16.mxu0 0
        %1908 = vmatpush1.bf16.msra.mxu0 0
        %1909 = vmatprep.mubr.bf16.mxu0 0
        %1910 = vmatmul.mubr.bf16.gmra.mrb[0].mxu0 %v1875
        %v1911 = vpop.f32.mrb[0].mxu0
        %v1912 = vadd.f32 0.0, %v1911
        %v1913 = vpop.f32.mrb[0].mxu0
        %v1914 = vpop.f32.mrb[0].mxu0
        %v1915 = vadd.f32 0.0, %v1914
        %v1916 = vpop.f32.mrb[0].mxu0
        %1917 = vdwg.mxu0
        %1918 = vrot.lane.b32.xlu0 %v1675, 96
        %v1919 = vpop.permute.xlu0 %1918
        %1920 = vrot.lane.b32.xlu0 %v1676, 32
        %v1921 = vpop.permute.xlu0 %1920
        %v1923 = vsel %vm657, %v1919, 0
        %v1926 = vsel %vm657, %v1921, 0
        %1928 = vmatprep.subr.bf16.mxu0 0
        %1929 = vmatpush1.bf16.xpose.msra.mxu0 %v1926
        %1930 = vmatprep.subr.bf16.mxu0 0
        %1931 = vmatpush1.bf16.xpose.msra.mxu0 0
        %1932 = vmatprep.subr.bf16.mxu0 0
        %1933 = vmatpush1.bf16.xpose.msra.mxu0 0
        %1934 = vmatprep.subr.bf16.mxu0 0
        %1935 = vmatpush1.bf16.xpose.msra.mxu0 0
        %1936 = vmatprep.subr.bf16.mxu0 0
        %1937 = vmatpush1.bf16.xpose.msra.mxu0 0
        %1938 = vmatprep.subr.bf16.mxu0 0
        %1939 = vmatpush1.bf16.xpose.msra.mxu0 0
        %1940 = vmatprep.subr.bf16.mxu0 0
        %1941 = vmatpush1.bf16.xpose.msra.mxu0 0
        %1942 = vmatprep.subr.bf16.mxu0 0
        %1943 = vmatpush1.bf16.xpose.msra.mxu0 0
        %1944 = vmatprep.subr.bf16.mxu0 0
        %1945 = vmatpush1.bf16.xpose.msra.mxu0 0
        %1946 = vmatprep.subr.bf16.mxu0 0
        %1947 = vmatpush1.bf16.xpose.msra.mxu0 0
        %1948 = vmatprep.subr.bf16.mxu0 0
        %1949 = vmatpush1.bf16.xpose.msra.mxu0 0
        %1950 = vmatprep.subr.bf16.mxu0 0
        %1951 = vmatpush1.bf16.xpose.msra.mxu0 0
        %1952 = vmatprep.subr.bf16.mxu0 0
        %1953 = vmatpush1.bf16.xpose.msra.mxu0 0
        %1954 = vmatprep.subr.bf16.mxu0 0
        %1955 = vmatpush1.bf16.xpose.msra.mxu0 0
        %1956 = vmatprep.subr.bf16.mxu0 0
        %1957 = vmatpush1.bf16.xpose.msra.mxu0 0
        %1958 = vmatprep.subr.bf16.mxu0 0
        %1959 = vmatpush1.bf16.xpose.msra.mxu0 0
        %1960 = vmatprep.mubr.bf16.mxu0 0
        %1961 = vmatmul.mubr.bf16.gmra.mrb[0].mxu0 %v1923
        %v1962 = vpop.f32.mrb[0].mxu0
        %v1963 = vadd.f32 0.0, %v1962
        %v1964 = vpop.f32.mrb[0].mxu0
        %v1965 = vpop.f32.mrb[0].mxu0
        %v1966 = vadd.f32 0.0, %v1965
        %v1967 = vpop.f32.mrb[0].mxu0
        %1968 = vdwg.mxu0
        %v1969 = vsel %vm657, %v1963, -inf
        %1970 = vmax.xlane.f32.xlu0 %v1969
        %v1971 = vpop.xlane.xlu0 %1970
        %v1972 = vsel %vm657, %v1966, -inf
        %1973 = vmax.xlane.f32.xlu0 %v1972
        %v1974 = vpop.xlane.xlu0 %1973
        %v1975 = vsub.f32 %v1963, %v1971
        %v1976 = vsub.f32 %v1966, %v1974
        %v1977 = vmul.f32 %v1975, 1.442695
        %v1978 = vpow.pop %v1977
        %v1979 = vmul.f32 %v1976, 1.442695
        %v1980 = vpow.pop %v1979
        %v1981 = vsel %vm657, %v1978, 0.0
        %1982 = vadd.xlane.f32.xlu0 %v1981
        %v1983 = vpop.xlane.xlu0 %1982
        %v1984 = vsel %vm657, %v1980, 0.0
        %1985 = vadd.xlane.f32.xlu0 %v1984
        %v1986 = vpop.xlane.xlu0 %1985
        %v1987 = vrcp.pop %v1983
        %v1988 = vmul.f32 %v1978, %v1987
        %v1989 = vrcp.pop %v1986
        %v1990 = vmul.f32 %v1980, %v1989
        %v1991 = vpack.c.bf16 %v1990, %v1988
        %1992 = vrot.lane.b32.xlu0 %v1677, 96
        %v1993 = vpop.permute.xlu0 %1992
        %v1996 = vsel %vm657, %v1991, 0
        %1998 = vmatprep.subr.bf16.mxu0 0
        %1999 = vmatpush1.bf16.msra.mxu0 %v1993
        %2000 = vmatprep.subr.bf16.mxu0 0
        %2001 = vmatpush1.bf16.msra.mxu0 0
        %2002 = vmatprep.subr.bf16.mxu0 0
        %2003 = vmatpush1.bf16.msra.mxu0 0
        %2004 = vmatprep.subr.bf16.mxu0 0
        %2005 = vmatpush1.bf16.msra.mxu0 0
        %2006 = vmatprep.subr.bf16.mxu0 0
        %2007 = vmatpush1.bf16.msra.mxu0 0
        %2008 = vmatprep.subr.bf16.mxu0 0
        %2009 = vmatpush1.bf16.msra.mxu0 0
        %2010 = vmatprep.subr.bf16.mxu0 0
        %2011 = vmatpush1.bf16.msra.mxu0 0
        %2012 = vmatprep.subr.bf16.mxu0 0
        %2013 = vmatpush1.bf16.msra.mxu0 0
        %2014 = vmatprep.subr.bf16.mxu0 0
        %2015 = vmatpush1.bf16.msra.mxu0 0
        %2016 = vmatprep.subr.bf16.mxu0 0
        %2017 = vmatpush1.bf16.msra.mxu0 0
        %2018 = vmatprep.subr.bf16.mxu0 0
        %2019 = vmatpush1.bf16.msra.mxu0 0
        %2020 = vmatprep.subr.bf16.mxu0 0
        %2021 = vmatpush1.bf16.msra.mxu0 0
        %2022 = vmatprep.subr.bf16.mxu0 0
        %2023 = vmatpush1.bf16.msra.mxu0 0
        %2024 = vmatprep.subr.bf16.mxu0 0
        %2025 = vmatpush1.bf16.msra.mxu0 0
        %2026 = vmatprep.subr.bf16.mxu0 0
        %2027 = vmatpush1.bf16.msra.mxu0 0
        %2028 = vmatprep.subr.bf16.mxu0 0
        %2029 = vmatpush1.bf16.msra.mxu0 0
        %2030 = vmatprep.mubr.bf16.mxu0 0
        %2031 = vmatmul.mubr.bf16.gmra.mrb[0].mxu0 %v1996
        %v2032 = vpop.f32.mrb[0].mxu0
        %v2033 = vadd.f32 0.0, %v2032
        %v2034 = vpop.f32.mrb[0].mxu0
        %v2035 = vpop.f32.mrb[0].mxu0
        %v2036 = vadd.f32 0.0, %v2035
        %v2037 = vpop.f32.mrb[0].mxu0
        %2038 = vdwg.mxu0
        %2039 = vrot.lane.b32.xlu0 %v1675, 80
        %v2040 = vpop.permute.xlu0 %2039
        %2041 = vrot.lane.b32.xlu0 %v1676, 16
        %v2042 = vpop.permute.xlu0 %2041
        %v2044 = vsel %vm657, %v2040, 0
        %v2047 = vsel %vm657, %v2042, 0
        %2049 = vmatprep.subr.bf16.mxu0 0
        %2050 = vmatpush1.bf16.xpose.msra.mxu0 %v2047
        %2051 = vmatprep.subr.bf16.mxu0 0
        %2052 = vmatpush1.bf16.xpose.msra.mxu0 0
        %2053 = vmatprep.subr.bf16.mxu0 0
        %2054 = vmatpush1.bf16.xpose.msra.mxu0 0
        %2055 = vmatprep.subr.bf16.mxu0 0
        %2056 = vmatpush1.bf16.xpose.msra.mxu0 0
        %2057 = vmatprep.subr.bf16.mxu0 0
        %2058 = vmatpush1.bf16.xpose.msra.mxu0 0
        %2059 = vmatprep.subr.bf16.mxu0 0
        %2060 = vmatpush1.bf16.xpose.msra.mxu0 0
        %2061 = vmatprep.subr.bf16.mxu0 0
        %2062 = vmatpush1.bf16.xpose.msra.mxu0 0
        %2063 = vmatprep.subr.bf16.mxu0 0
        %2064 = vmatpush1.bf16.xpose.msra.mxu0 0
        %2065 = vmatprep.subr.bf16.mxu0 0
        %2066 = vmatpush1.bf16.xpose.msra.mxu0 0
        %2067 = vmatprep.subr.bf16.mxu0 0
        %2068 = vmatpush1.bf16.xpose.msra.mxu0 0
        %2069 = vmatprep.subr.bf16.mxu0 0
        %2070 = vmatpush1.bf16.xpose.msra.mxu0 0
        %2071 = vmatprep.subr.bf16.mxu0 0
        %2072 = vmatpush1.bf16.xpose.msra.mxu0 0
        %2073 = vmatprep.subr.bf16.mxu0 0
        %2074 = vmatpush1.bf16.xpose.msra.mxu0 0
        %2075 = vmatprep.subr.bf16.mxu0 0
        %2076 = vmatpush1.bf16.xpose.msra.mxu0 0
        %2077 = vmatprep.subr.bf16.mxu0 0
        %2078 = vmatpush1.bf16.xpose.msra.mxu0 0
        %2079 = vmatprep.subr.bf16.mxu0 0
        %2080 = vmatpush1.bf16.xpose.msra.mxu0 0
        %2081 = vmatprep.mubr.bf16.mxu0 0
        %2082 = vmatmul.mubr.bf16.gmra.mrb[0].mxu0 %v2044
        %v2083 = vpop.f32.mrb[0].mxu0
        %v2084 = vadd.f32 0.0, %v2083
        %v2085 = vpop.f32.mrb[0].mxu0
        %v2086 = vpop.f32.mrb[0].mxu0
        %v2087 = vadd.f32 0.0, %v2086
        %v2088 = vpop.f32.mrb[0].mxu0
        %2089 = vdwg.mxu0
        %v2090 = vsel %vm657, %v2084, -inf
        %2091 = vmax.xlane.f32.xlu0 %v2090
        %v2092 = vpop.xlane.xlu0 %2091
        %v2093 = vsel %vm657, %v2087, -inf
        %2094 = vmax.xlane.f32.xlu0 %v2093
        %v2095 = vpop.xlane.xlu0 %2094
        %v2096 = vsub.f32 %v2084, %v2092
        %v2097 = vsub.f32 %v2087, %v2095
        %v2098 = vmul.f32 %v2096, 1.442695
        %v2099 = vpow.pop %v2098
        %v2100 = vmul.f32 %v2097, 1.442695
        %v2101 = vpow.pop %v2100
        %v2102 = vsel %vm657, %v2099, 0.0
        %2103 = vadd.xlane.f32.xlu0 %v2102
        %v2104 = vpop.xlane.xlu0 %2103
        %v2105 = vsel %vm657, %v2101, 0.0
        %2106 = vadd.xlane.f32.xlu0 %v2105
        %v2107 = vpop.xlane.xlu0 %2106
        %v2108 = vrcp.pop %v2104
        %v2109 = vmul.f32 %v2099, %v2108
        %v2110 = vrcp.pop %v2107
        %v2111 = vmul.f32 %v2101, %v2110
        %v2112 = vpack.c.bf16 %v2111, %v2109
        %2113 = vrot.lane.b32.xlu0 %v1677, 80
        %v2114 = vpop.permute.xlu0 %2113
        %v2117 = vsel %vm657, %v2112, 0
        %2119 = vmatprep.subr.bf16.mxu0 0
        %2120 = vmatpush1.bf16.msra.mxu0 %v2114
        %2121 = vmatprep.subr.bf16.mxu0 0
        %2122 = vmatpush1.bf16.msra.mxu0 0
        %2123 = vmatprep.subr.bf16.mxu0 0
        %2124 = vmatpush1.bf16.msra.mxu0 0
        %2125 = vmatprep.subr.bf16.mxu0 0
        %2126 = vmatpush1.bf16.msra.mxu0 0
        %2127 = vmatprep.subr.bf16.mxu0 0
        %2128 = vmatpush1.bf16.msra.mxu0 0
        %2129 = vmatprep.subr.bf16.mxu0 0
        %2130 = vmatpush1.bf16.msra.mxu0 0
        %2131 = vmatprep.subr.bf16.mxu0 0
        %2132 = vmatpush1.bf16.msra.mxu0 0
        %2133 = vmatprep.subr.bf16.mxu0 0
        %2134 = vmatpush1.bf16.msra.mxu0 0
        %2135 = vmatprep.subr.bf16.mxu0 0
        %2136 = vmatpush1.bf16.msra.mxu0 0
        %2137 = vmatprep.subr.bf16.mxu0 0
        %2138 = vmatpush1.bf16.msra.mxu0 0
        %2139 = vmatprep.subr.bf16.mxu0 0
        %2140 = vmatpush1.bf16.msra.mxu0 0
        %2141 = vmatprep.subr.bf16.mxu0 0
        %2142 = vmatpush1.bf16.msra.mxu0 0
        %2143 = vmatprep.subr.bf16.mxu0 0
        %2144 = vmatpush1.bf16.msra.mxu0 0
        %2145 = vmatprep.subr.bf16.mxu0 0
        %2146 = vmatpush1.bf16.msra.mxu0 0
        %2147 = vmatprep.subr.bf16.mxu0 0
        %2148 = vmatpush1.bf16.msra.mxu0 0
        %2149 = vmatprep.subr.bf16.mxu0 0
        %2150 = vmatpush1.bf16.msra.mxu0 0
        %2151 = vmatprep.mubr.bf16.mxu0 0
        %2152 = vmatmul.mubr.bf16.gmra.mrb[0].mxu0 %v2117
        %v2153 = vpop.f32.mrb[0].mxu0
        %v2154 = vadd.f32 0.0, %v2153
        %v2155 = vpop.f32.mrb[0].mxu0
        %v2156 = vpop.f32.mrb[0].mxu0
        %v2157 = vadd.f32 0.0, %v2156
        %v2158 = vpop.f32.mrb[0].mxu0
        %2159 = vdwg.mxu0
        %2162 = vrot.lane.b32.xlu0 %v1912, 16
        %v2163 = vpop.permute.xlu0 %2162
        %2164 = vrot.lane.b32.xlu0 %v1915, 16
        %v2165 = vpop.permute.xlu0 %2164
        %2170 = vrot.lane.b32.xlu0 %v2033, 32
        %v2171 = vpop.permute.xlu0 %2170
        %2172 = vrot.lane.b32.xlu0 %v2036, 32
        %v2173 = vpop.permute.xlu0 %2172
        %2178 = vrot.lane.b32.xlu0 %v2154, 48
        %v2179 = vpop.permute.xlu0 %2178
        %2180 = vrot.lane.b32.xlu0 %v2157, 48
        %v2181 = vpop.permute.xlu0 %2180
        %v2184 = vsel %vm657, %v1789, %v2163
        %v2185 = vsel %vm657, %v1792, %v2165
        %v2186 = vsel %vm1163, %v2184, %v2171
        %v2187 = vsel %vm1163, %v2185, %v2173
        %v2188 = vsel %vm1166, %v2186, %v2179
        %v2189 = vsel %vm1166, %v2187, %v2181
        %v2190 = vpack.c.bf16 %v2189, %v2188
        %s2191 = scalar_lea.vmem %s5, 32
        %v2192 = vld [vmem:[%s2191] sm:$0xf]
        %v2193 = vld [vmem:[%s2191 + $0x4] sm:$0xf]
        %v2194 = vld [vmem:[%s2191 + $0x8] sm:$0xf]
        %v2195 = vld [vmem:[%s2191 + $0xc] sm:$0xf]
        %v2196 = vld [vmem:[%s2191 + $0x10] sm:$0xf]
        %v2197 = vld [vmem:[%s2191 + $0x14] sm:$0xf]
        %v2198 = vld [vmem:[%s2191 + $0x18] sm:$0xf]
        %v2199 = vld [vmem:[%s2191 + $0x1c] sm:$0xf]
        %s2200 = scalar_lea.vmem %s6, 1
        %v2201 = vld [vmem:[%s2200] sm:$0x1]
        %v2203 = vlaneseq
        %v2204 = vshrl.u32 %v2203, 7
        %v2205 = vsub.s32 0, %v2204
        %v2206 = vrot.slane %v2201, %v2205
        %v2216 = vunpack.c.l.b16 %v2192
        %v2217 = vunpack.c.l.b16 %v2193
        %v2218 = vunpack.c.l.b16 %v2194
        %v2219 = vunpack.c.l.b16 %v2195
        %v2220 = vunpack.c.l.b16 %v2196
        %v2221 = vunpack.c.l.b16 %v2197
        %v2222 = vunpack.c.l.b16 %v2198
        %v2223 = vunpack.c.l.b16 %v2199
        %v2224 = vpack.c.b16 %v2217, %v2216
        %v2225 = vpack.c.b16 %v2219, %v2218
        %v2226 = vpack.c.b16 %v2221, %v2220
        %v2227 = vpack.c.b16 %v2223, %v2222
        %v2233 = vsel %vm498, %v2190, 0
        %2235 = vmatprep.subr.bf16.mxu0 0
        %2236 = vmatpush1.bf16.msra.mxu0 %v2224
        %2237 = vmatprep.subr.bf16.mxu0 0
        %2238 = vmatpush1.bf16.msra.mxu0 %v2225
        %2239 = vmatprep.subr.bf16.mxu0 0
        %2240 = vmatpush1.bf16.msra.mxu0 %v2226
        %2241 = vmatprep.subr.bf16.mxu0 0
        %2242 = vmatpush1.bf16.msra.mxu0 %v2227
        %2243 = vmatprep.subr.bf16.mxu0 0
        %2244 = vmatpush1.bf16.msra.mxu0 0
        %2245 = vmatprep.subr.bf16.mxu0 0
        %2246 = vmatpush1.bf16.msra.mxu0 0
        %2247 = vmatprep.subr.bf16.mxu0 0
        %2248 = vmatpush1.bf16.msra.mxu0 0
        %2249 = vmatprep.subr.bf16.mxu0 0
        %2250 = vmatpush1.bf16.msra.mxu0 0
        %2251 = vmatprep.subr.bf16.mxu0 0
        %2252 = vmatpush1.bf16.msra.mxu0 0
        %2253 = vmatprep.subr.bf16.mxu0 0
        %2254 = vmatpush1.bf16.msra.mxu0 0
        %2255 = vmatprep.subr.bf16.mxu0 0
        %2256 = vmatpush1.bf16.msra.mxu0 0
        %2257 = vmatprep.subr.bf16.mxu0 0
        %2258 = vmatpush1.bf16.msra.mxu0 0
        %2259 = vmatprep.subr.bf16.mxu0 0
        %2260 = vmatpush1.bf16.msra.mxu0 0
        %2261 = vmatprep.subr.bf16.mxu0 0
        %2262 = vmatpush1.bf16.msra.mxu0 0
        %2263 = vmatprep.subr.bf16.mxu0 0
        %2264 = vmatpush1.bf16.msra.mxu0 0
        %2265 = vmatprep.subr.bf16.mxu0 0
        %2266 = vmatpush1.bf16.msra.mxu0 0
        %2267 = vmatprep.mubr.bf16.mxu0 0
        %2268 = vmatmul.mubr.bf16.gmra.mrb[0].mxu0 %v2233
        %v2269 = vpop.f32.mrb[0].mxu0
        %v2270 = vadd.f32 %v2206, %v2269
        %v2271 = vpop.f32.mrb[0].mxu0
        %v2272 = vpop.f32.mrb[0].mxu0
        %v2273 = vadd.f32 %v2206, %v2272
        %v2274 = vpop.f32.mrb[0].mxu0
        %2275 = vdwg.mxu0
        %v2276 = vadd.f32 %v1516, %v2270
        %v2277 = vadd.f32 %v1517, %v2273
        %s2278 = scalar_lea.vmem %s7, 1
        %v2279 = vld [vmem:[%s2278] sm:$0x1]
        %s2280 = scalar_lea.vmem %s8, 1
        %v2281 = vld [vmem:[%s2280] sm:$0x1]
        %v2282 = vsel %vm498, %v2276, 0.0
        %2283 = vadd.xlane.f32.xlu0 %v2282
        %v2284 = vpop.xlane.xlu0 %2283
        %v2285 = vsel %vm498, %v2277, 0.0
        %2286 = vadd.xlane.f32.xlu0 %v2285
        %v2287 = vpop.xlane.xlu0 %2286
        %v2288 = vmul.f32 %v2284, %v505
        %v2289 = vmul.f32 %v2287, %v505
        %v2290 = vsub.f32 %v2276, %v2288
        %v2291 = vsub.f32 %v2277, %v2289
        %v2292 = vmul.f32 %v2290, %v2290
        %v2293 = vmul.f32 %v2291, %v2291
        %v2294 = vsel %vm498, %v2292, 0.0
        %2295 = vadd.xlane.f32.xlu0 %v2294
        %v2296 = vpop.xlane.xlu0 %2295
        %v2297 = vsel %vm498, %v2293, 0.0
        %2298 = vadd.xlane.f32.xlu0 %v2297
        %v2299 = vpop.xlane.xlu0 %2298
        %v2300 = vmul.f32 %v2296, %v505
        %v2301 = vmul.f32 %v2299, %v505
        %v2302 = vadd.f32 %v2300, 1e-05
        %v2303 = vadd.f32 %v2301, 1e-05
        %v2304 = vrsqrt.pop %v2302
        %v2305 = vrsqrt.pop %v2303
        %v2306 = vmul.f32 %v2290, %v2304
        %v2307 = vmul.f32 %v2291, %v2305
        %v2309 = vlaneseq
        %v2310 = vshrl.u32 %v2309, 7
        %v2311 = vsub.s32 0, %v2310
        %v2312 = vrot.slane %v2279, %v2311
        %v2314 = vmul.f32 %v2306, %v2312
        %v2315 = vmul.f32 %v2307, %v2312
        %v2317 = vlaneseq
        %v2318 = vshrl.u32 %v2317, 7
        %v2319 = vsub.s32 0, %v2318
        %v2320 = vrot.slane %v2281, %v2319
        %v2322 = vadd.f32 %v2314, %v2320
        %v2323 = vadd.f32 %v2315, %v2320
        %v2324 = vpack.c.bf16 %v2323, %v2322
        %s2325 = scalar_lea.vmem %s9, 32
        %v2326 = vld [vmem:[%s2325] sm:$0xf]
        %v2327 = vld [vmem:[%s2325 + $0x4] sm:$0xf]
        %v2328 = vld [vmem:[%s2325 + $0x8] sm:$0xf]
        %v2329 = vld [vmem:[%s2325 + $0xc] sm:$0xf]
        %v2330 = vld [vmem:[%s2325 + $0x10] sm:$0xf]
        %v2331 = vld [vmem:[%s2325 + $0x14] sm:$0xf]
        %v2332 = vld [vmem:[%s2325 + $0x18] sm:$0xf]
        %v2333 = vld [vmem:[%s2325 + $0x1c] sm:$0xf]
        %s2334 = scalar_lea.vmem %s10, 1
        %v2335 = vld [vmem:[%s2334] sm:$0x1]
        %v2337 = vlaneseq
        %v2338 = vshrl.u32 %v2337, 7
        %v2339 = vsub.s32 0, %v2338
        %v2340 = vrot.slane %v2335, %v2339
        %v2350 = vunpack.c.l.b16 %v2326
        %v2351 = vunpack.c.l.b16 %v2327
        %v2352 = vunpack.c.l.b16 %v2328
        %v2353 = vunpack.c.l.b16 %v2329
        %v2354 = vunpack.c.l.b16 %v2330
        %v2355 = vunpack.c.l.b16 %v2331
        %v2356 = vunpack.c.l.b16 %v2332
        %v2357 = vunpack.c.l.b16 %v2333
        %v2358 = vpack.c.b16 %v2351, %v2350
        %v2359 = vpack.c.b16 %v2353, %v2352
        %v2360 = vpack.c.b16 %v2355, %v2354
        %v2361 = vpack.c.b16 %v2357, %v2356
        %v2367 = vsel %vm498, %v2324, 0
        %2369 = vmatprep.subr.bf16.mxu0 0
        %2370 = vmatpush1.bf16.msra.mxu0 %v2358
        %2371 = vmatprep.subr.bf16.mxu0 0
        %2372 = vmatpush1.bf16.msra.mxu0 %v2359
        %2373 = vmatprep.subr.bf16.mxu0 0
        %2374 = vmatpush1.bf16.msra.mxu0 %v2360
        %2375 = vmatprep.subr.bf16.mxu0 0
        %2376 = vmatpush1.bf16.msra.mxu0 %v2361
        %2377 = vmatprep.subr.bf16.mxu0 0
        %2378 = vmatpush1.bf16.msra.mxu0 0
        %2379 = vmatprep.subr.bf16.mxu0 0
        %2380 = vmatpush1.bf16.msra.mxu0 0
        %2381 = vmatprep.subr.bf16.mxu0 0
        %2382 = vmatpush1.bf16.msra.mxu0 0
        %2383 = vmatprep.subr.bf16.mxu0 0
        %2384 = vmatpush1.bf16.msra.mxu0 0
        %2385 = vmatprep.subr.bf16.mxu0 0
        %2386 = vmatpush1.bf16.msra.mxu0 0
        %2387 = vmatprep.subr.bf16.mxu0 0
        %2388 = vmatpush1.bf16.msra.mxu0 0
        %2389 = vmatprep.subr.bf16.mxu0 0
        %2390 = vmatpush1.bf16.msra.mxu0 0
        %2391 = vmatprep.subr.bf16.mxu0 0
        %2392 = vmatpush1.bf16.msra.mxu0 0
        %2393 = vmatprep.subr.bf16.mxu0 0
        %2394 = vmatpush1.bf16.msra.mxu0 0
        %2395 = vmatprep.subr.bf16.mxu0 0
        %2396 = vmatpush1.bf16.msra.mxu0 0
        %2397 = vmatprep.subr.bf16.mxu0 0
        %2398 = vmatpush1.bf16.msra.mxu0 0
        %2399 = vmatprep.subr.bf16.mxu0 0
        %2400 = vmatpush1.bf16.msra.mxu0 0
        %2401 = vmatprep.mubr.bf16.mxu0 0
        %2402 = vmatmul.mubr.bf16.gmra.mrb[0].mxu0 %v2367
        %v2403 = vpop.f32.mrb[0].mxu0
        %v2404 = vadd.f32 %v2340, %v2403
        %v2405 = vpop.f32.mrb[0].mxu0
        %v2406 = vpop.f32.mrb[0].mxu0
        %v2407 = vadd.f32 %v2340, %v2406
        %v2408 = vpop.f32.mrb[0].mxu0
        %2409 = vdwg.mxu0
        %v2410 = vmul.f32 %v2404, %v2404
        %v2411 = vmul.f32 %v2407, %v2407
        %v2412 = vmul.f32 %v2404, %v2410
        %v2413 = vmul.f32 %v2407, %v2411
        %v2414 = vmul.f32 %v2412, 0.044715
        %v2415 = vmul.f32 %v2413, 0.044715
        %v2416 = vadd.f32 %v2404, %v2414
        %v2417 = vadd.f32 %v2407, %v2415
        %v2418 = vmul.f32 %v2416, 0.7978846
        %v2419 = vmul.f32 %v2417, 0.7978846
        %v2420 = vtanh.pop %v2418
        %v2421 = vtanh.pop %v2419
        %v2422 = vadd.f32 %v2420, 1.0
        %v2423 = vadd.f32 %v2421, 1.0
        %v2424 = vmul.f32 %v2422, 0.5
        %v2425 = vmul.f32 %v2423, 0.5
        %v2426 = vmul.f32 %v2404, %v2424
        %v2427 = vmul.f32 %v2407, %v2425
        %v2428 = vpack.c.bf16 %v2427, %v2426
        %s2429 = scalar_lea.vmem %s11, 64
        %v2430 = vld [vmem:[%s2429] sm:$0xf]
        %v2431 = vld [vmem:[%s2429 + $0x4] sm:$0xf]
        %v2432 = vld [vmem:[%s2429 + $0x8] sm:$0xf]
        %v2433 = vld [vmem:[%s2429 + $0xc] sm:$0xf]
        %v2434 = vld [vmem:[%s2429 + $0x10] sm:$0xf]
        %v2435 = vld [vmem:[%s2429 + $0x14] sm:$0xf]
        %v2436 = vld [vmem:[%s2429 + $0x18] sm:$0xf]
        %v2437 = vld [vmem:[%s2429 + $0x1c] sm:$0xf]
        %v2438 = vld [vmem:[%s2429 + $0x20] sm:$0xf]
        %v2439 = vld [vmem:[%s2429 + $0x24] sm:$0xf]
        %v2440 = vld [vmem:[%s2429 + $0x28] sm:$0xf]
        %v2441 = vld [vmem:[%s2429 + $0x2c] sm:$0xf]
        %v2442 = vld [vmem:[%s2429 + $0x30] sm:$0xf]
        %v2443 = vld [vmem:[%s2429 + $0x34] sm:$0xf]
        %v2444 = vld [vmem:[%s2429 + $0x38] sm:$0xf]
        %v2445 = vld [vmem:[%s2429 + $0x3c] sm:$0xf]
        %v2462 = vunpack.c.l.b16 %v2430
        %v2463 = vunpack.c.l.b16 %v2431
        %v2464 = vunpack.c.l.b16 %v2432
        %v2465 = vunpack.c.l.b16 %v2433
        %v2466 = vunpack.c.l.b16 %v2434
        %v2467 = vunpack.c.l.b16 %v2435
        %v2468 = vunpack.c.l.b16 %v2436
        %v2469 = vunpack.c.l.b16 %v2437
        %v2470 = vunpack.c.l.b16 %v2438
        %v2471 = vunpack.c.l.b16 %v2439
        %v2472 = vunpack.c.l.b16 %v2440
        %v2473 = vunpack.c.l.b16 %v2441
        %v2474 = vunpack.c.l.b16 %v2442
        %v2475 = vunpack.c.l.b16 %v2443
        %v2476 = vunpack.c.l.b16 %v2444
        %v2477 = vunpack.c.l.b16 %v2445
        %v2478 = vpack.c.b16 %v2463, %v2462
        %v2479 = vpack.c.b16 %v2465, %v2464
        %v2480 = vpack.c.b16 %v2467, %v2466
        %v2481 = vpack.c.b16 %v2469, %v2468
        %v2482 = vpack.c.b16 %v2471, %v2470
        %v2483 = vpack.c.b16 %v2473, %v2472
        %v2484 = vpack.c.b16 %v2475, %v2474
        %v2485 = vpack.c.b16 %v2477, %v2476
        %2494 = vmatprep.subr.bf16.mxu0 0
        %2495 = vmatpush1.bf16.msra.mxu0 %v2478
        %2496 = vmatprep.subr.bf16.mxu0 0
        %2497 = vmatpush1.bf16.msra.mxu0 %v2479
        %2498 = vmatprep.subr.bf16.mxu0 0
        %2499 = vmatpush1.bf16.msra.mxu0 %v2480
        %2500 = vmatprep.subr.bf16.mxu0 0
        %2501 = vmatpush1.bf16.msra.mxu0 %v2481
        %2502 = vmatprep.subr.bf16.mxu0 0
        %2503 = vmatpush1.bf16.msra.mxu0 %v2482
        %2504 = vmatprep.subr.bf16.mxu0 0
        %2505 = vmatpush1.bf16.msra.mxu0 %v2483
        %2506 = vmatprep.subr.bf16.mxu0 0
        %2507 = vmatpush1.bf16.msra.mxu0 %v2484
        %2508 = vmatprep.subr.bf16.mxu0 0
        %2509 = vmatpush1.bf16.msra.mxu0 %v2485
        %2510 = vmatprep.subr.bf16.mxu0 0
        %2511 = vmatpush1.bf16.msra.mxu0 0
        %2512 = vmatprep.subr.bf16.mxu0 0
        %2513 = vmatpush1.bf16.msra.mxu0 0
        %2514 = vmatprep.subr.bf16.mxu0 0
        %2515 = vmatpush1.bf16.msra.mxu0 0
        %2516 = vmatprep.subr.bf16.mxu0 0
        %2517 = vmatpush1.bf16.msra.mxu0 0
        %2518 = vmatprep.subr.bf16.mxu0 0
        %2519 = vmatpush1.bf16.msra.mxu0 0
        %2520 = vmatprep.subr.bf16.mxu0 0
        %2521 = vmatpush1.bf16.msra.mxu0 0
        %2522 = vmatprep.subr.bf16.mxu0 0
        %2523 = vmatpush1.bf16.msra.mxu0 0
        %2524 = vmatprep.subr.bf16.mxu0 0
        %2525 = vmatpush1.bf16.msra.mxu0 0
        %2526 = vmatprep.mubr.bf16.mxu0 0
        %2527 = vmatmul.mubr.bf16.gmra.mrb[0].mxu0 %v2428
        %v2528 = vpop.f32.mrb[0].mxu0
        %v2529 = vadd.f32 0.0, %v2528
        %v2530 = vpop.f32.mrb[0].mxu0
        %v2531 = vpop.f32.mrb[0].mxu0
        %v2532 = vadd.f32 0.0, %v2531
        %v2533 = vpop.f32.mrb[0].mxu0
        %2534 = vdwg.mxu0
        %v2535 = vadd.f32 %v2276, %v2529
        %v2536 = vadd.f32 %v2277, %v2532
        %s2537 = scalar_lea.vmem %s12, 1
        %v2538 = vld [vmem:[%s2537] sm:$0x1]
        %v2540 = vlaneseq
        %v2541 = vshrl.u32 %v2540, 7
        %v2542 = vsub.s32 0, %v2541
        %v2543 = vrot.slane %v2538, %v2542
        %v2545 = vadd.f32 %v2535, %v2543
        %v2546 = vadd.f32 %v2536, %v2543
        %v2547 = vld [vmem:[%s13] sm:$0x1]
        %v2548 = vld [vmem:[%s14] sm:$0x1]
        %v2549 = vsel %vm498, %v2545, 0.0
        %2550 = vadd.xlane.f32.xlu0 %v2549
        %v2551 = vpop.xlane.xlu0 %2550
        %v2552 = vsel %vm498, %v2546, 0.0
        %2553 = vadd.xlane.f32.xlu0 %v2552
        %v2554 = vpop.xlane.xlu0 %2553
        %v2555 = vmul.f32 %v2551, %v505
        %v2556 = vmul.f32 %v2554, %v505
        %v2557 = vsub.f32 %v2545, %v2555
        %v2558 = vsub.f32 %v2546, %v2556
        %v2559 = vmul.f32 %v2557, %v2557
        %v2560 = vmul.f32 %v2558, %v2558
        %v2561 = vsel %vm498, %v2559, 0.0
        %2562 = vadd.xlane.f32.xlu0 %v2561
        %v2563 = vpop.xlane.xlu0 %2562
        %v2564 = vsel %vm498, %v2560, 0.0
        %2565 = vadd.xlane.f32.xlu0 %v2564
        %v2566 = vpop.xlane.xlu0 %2565
        %v2567 = vmul.f32 %v2563, %v505
        %v2568 = vmul.f32 %v2566, %v505
        %v2569 = vadd.f32 %v2567, 1e-05
        %v2570 = vadd.f32 %v2568, 1e-05
        %v2571 = vrsqrt.pop %v2569
        %v2572 = vrsqrt.pop %v2570
        %v2573 = vmul.f32 %v2557, %v2571
        %v2574 = vmul.f32 %v2558, %v2572
        %v2576 = vlaneseq
        %v2577 = vshrl.u32 %v2576, 7
        %v2578 = vsub.s32 0, %v2577
        %v2579 = vrot.slane %v2547, %v2578
        %v2581 = vmul.f32 %v2573, %v2579
        %v2582 = vmul.f32 %v2574, %v2579
        %v2584 = vlaneseq
        %v2585 = vshrl.u32 %v2584, 7
        %v2586 = vsub.s32 0, %v2585
        %v2587 = vrot.slane %v2548, %v2586
        %v2589 = vadd.f32 %v2581, %v2587
        %v2590 = vadd.f32 %v2582, %v2587
        %2591 = vst.msk [vmem:[%s487] sm:$0xff] %vm498, %v2589
        %2592 = vst.msk [vmem:[%s487 + $0x8] sm:$0xff] %vm498, %v2590
        %s2593 = sand.u32 %s357, 1
        %s2594 = scalar_lea.sflag [#allocation3], %s2593
        %s2595 = sand.u32 %s357, 1
        %s2596 = smul.addr %s2595, 16
        %s2597 = scalar_lea.vmem [#allocation2], %s2596
        // Predicated region
        $region81: #{whisper_encoder_debug_forward.3} parent=79 // pred_check
          %p2598 = pneg %p367
        $region82: #{whisper_encoder_debug_forward.3} parent=79 // pred_check_branch
          %2600 = sbr.rel (%p2598) target = $region84
        $region83: #{whisper_encoder_debug_forward.3} parent=79 // pred_region
          %s2602 = ssub.s32 256, 256
          %2603 = vsyncadd %s2594, %s2602
          %s2604 = smul.addr %s29, 2
          %s2605 = smul.addr %s2604, 128
          %s2606 = scalar_lea.hbm %s15, %s2605
          %s2607 = sshll.u32 %s2597, 4
          %s2608 = int_to_ptr.vmem [resolvable:$true] %s2607
          %2613 = dma.vmem_to_hbm [thread:$0]  %s2608, 256, %s2606, %s2594, 128, 128, 8
        $region84: #{whisper_encoder_debug_forward.3} parent=79 // pred_fallthru
          _
      $region80: #{whisper_encoder_debug_forward.3} parent=5 // pred_fallthru
        _
      %p2614 = scmp.le.s32.totalorder 2, %s24
      // Predicated region
      $region85: #{whisper_encoder_debug_forward.3} parent=5 // pred_check
        %p2615 = pneg %p2614
      $region86: #{whisper_encoder_debug_forward.3} parent=5 // pred_check_branch
        %2617 = sbr.rel (%p2615) target = $region88
      $region87: #{whisper_encoder_debug_forward.3} parent=5 // pred_region
        %s2618 = ssub.s32 %s24, 2
        // Predicated region
        $region89: #{whisper_encoder_debug_forward.3} parent=87 // pred_check
          %p2619 = pneg %p373
        $region90: #{whisper_encoder_debug_forward.3} parent=87 // pred_check_branch
          %2621 = sbr.rel (%p2619) target = $region92
        $region91: #{whisper_encoder_debug_forward.3} parent=87 // pred_region
          %s2622 = sand.u32 %s358, 1
          %s2623 = scalar_lea.sflag [#allocation3], %s2622
          %s2624 = sand.u32 %s358, 1
          %s2625 = smul.addr %s2624, 16
          %s2626 = scalar_lea.vmem [#allocation2], %s2625
          %2627 = dma.done %s2623, 256
        $region92: #{whisper_encoder_debug_forward.3} parent=87 // pred_fallthru
          _
      $region88: #{whisper_encoder_debug_forward.3} parent=5 // pred_fallthru
        _
    $region6: #{whisper_encoder_debug_forward.3} parent=1 // loop_footer
      %s28 = sadd.s32 1, %s24
    $region7: #{whisper_encoder_debug_forward.3} parent=1 // loop_footer_branch
      %23 = sbr.rel target = $region3
    $region8: #{whisper_encoder_debug_forward.3} parent=1 // loop_exit
      _
    %2628 = vsyncpa [#allocation3], 1
    %s2629 = scalar_lea.sflag [#allocation3], 1
    %2630 = vsyncpa %s2629, 1

</llo_original>
